<compile_context>
chip_gen: v6e
topology: v6e:2x2x1
jax: 0.10.0
libtpu: 0.0.40
codegen_flags: <defaults>
</compile_context>

<pallas_src>
import functools
import math

import jax
import jax.numpy as jnp
from jax.experimental import pallas as pl
from jax.experimental.pallas import tpu as pltpu

F32 = jnp.float32
BF16 = jnp.bfloat16
KERNEL_SIZES = (3, 5, 7, 9)
KMAX = max(KERNEL_SIZES)
LN_EPS = 1e-5


def _device_kind():
    try:
        return jax.devices()[0].device_kind.lower()
    except Exception:
        return ""


_KIND = _device_kind()
# v7x has only 64 MiB VMEM per TensorCore -> leave headroom; 128 MiB parts get more.
VMEM_LIMIT_BYTES = (48 if "v7" in _KIND else 64) * 1024 * 1024
ROW_TILE = 512 if "v7" in _KIND else 1024


def _tile(n, target):
    """Largest tile <= target that divides n and is a multiple of 8 (else n).

    # TODO(synk): pad awkward n up to a tile multiple (masked tail) instead of
    # the full-dimension fallback, to avoid pathological VMEM blocks.
    """
    if n <= target:
        return n
    t = (target // 8) * 8
    while t >= 8:
        if n % t == 0:
            return t
        t -= 8
    return n


def _cparams(semantics):
    return pltpu.CompilerParams(dimension_semantics=semantics,
                                vmem_limit_bytes=VMEM_LIMIT_BYTES)


# ---------------------------------------------------------------------------
# Kernel 1: fused wavelet conv bank (+ folded input projection) + positional
#           encoding.  One im2col matmul per tile.  Grid = (B, seq-tiles).
# ---------------------------------------------------------------------------
def conv_proj_pos_kernel(slab_ref, w_ref, b_ref, pos_ref, o_ref):
    # slab: [1, ts, KMAX*Cin]  w: [KMAX*Cin, D] bf16  b: [1, D]  pos: [ts, D]
    x = slab_ref[0].astype(BF16)
    y = jnp.dot(x, w_ref[...], preferred_element_type=jnp.float32)
    o_ref[0] = y + b_ref[...] + pos_ref[...]


def conv_proj_pos(slab, w_fused, b_fused, pos, seq_tile=256):
    b, s, kc = slab.shape
    d = w_fused.shape[1]
    ts = _tile(s, seq_tile)
    return pl.pallas_call(
        conv_proj_pos_kernel,
        out_shape=jax.ShapeDtypeStruct((b, s, d), F32),
        grid=(b, s // ts),
        in_specs=[pl.BlockSpec((1, ts, kc), lambda bi, si: (bi, si, 0)),
                  pl.BlockSpec((kc, d), lambda bi, si: (0, 0)),
                  pl.BlockSpec((1, d), lambda bi, si: (0, 0)),
                  pl.BlockSpec((ts, d), lambda bi, si: (si, 0))],
        out_specs=pl.BlockSpec((1, ts, d), lambda bi, si: (bi, si, 0)),
        compiler_params=_cparams(("parallel", "parallel")),
    )(slab, w_fused, b_fused, pos)


# ---------------------------------------------------------------------------
# Kernel 2: fused QKV projection — one [D, 3D] bf16 matmul, three bf16 outputs.
# ---------------------------------------------------------------------------
def qkv_proj_kernel(x_ref, w_ref, b_ref, q_ref, k_ref, v_ref):
    xb = x_ref[...].astype(BF16)
    y = jnp.dot(xb, w_ref[...], preferred_element_type=jnp.float32) + b_ref[...]
    d = q_ref.shape[-1]
    q_ref[...] = y[:, 0 * d:1 * d].astype(q_ref.dtype)
    k_ref[...] = y[:, 1 * d:2 * d].astype(k_ref.dtype)
    v_ref[...] = y[:, 2 * d:3 * d].astype(v_ref.dtype)


def qkv_proj(x, w, b, row_tile=ROW_TILE):
    n, din = x.shape
    d = w.shape[1] // 3
    tr = _tile(n, row_tile)
    out_sds = jax.ShapeDtypeStruct((n, d), BF16)
    row_spec = pl.BlockSpec((tr, d), lambda i: (i, 0))
    return pl.pallas_call(
        qkv_proj_kernel,
        out_shape=(out_sds, out_sds, out_sds),
        grid=(n // tr,),
        in_specs=[pl.BlockSpec((tr, din), lambda i: (i, 0)),
                  pl.BlockSpec((din, 3 * d), lambda i: (0, 0)),
                  pl.BlockSpec((1, 3 * d), lambda i: (0, 0))],
        out_specs=(row_spec, row_spec, row_spec),
        compiler_params=_cparams(("parallel",)),
    )(x, w, b)


# ---------------------------------------------------------------------------
# Kernel 3: flash-style multi-head self-attention (online softmax).
#   grid = (B, q-tiles, kv-tiles); kv axis is the "arbitrary" reduction axis.
# ---------------------------------------------------------------------------
def flash_mha_kernel(q_ref, k_ref, v_ref, o_ref, m_sc, l_sc, acc_sc,
                     *, nhead, scale):
    kv = pl.program_id(2)

    @pl.when(kv == 0)
    def _():
        m_sc[...] = jnp.full(m_sc.shape, -jnp.inf, m_sc.dtype)
        l_sc[...] = jnp.zeros(l_sc.shape, l_sc.dtype)
        acc_sc[...] = jnp.zeros(acc_sc.shape, acc_sc.dtype)

    d = q_ref.shape[-1]
    dh = d // nhead
    # TODO(synk): when d_head % 128 == 0, move heads onto a grid axis instead of
    # this static unroll (tile-aligned lane slices, smaller live ranges).
    for h in range(nhead):
        sl = slice(h * dh, (h + 1) * dh)
        qh = q_ref[0, :, sl]                         # [tq, Dh] bf16
        kh = k_ref[0, :, sl]                         # [tk, Dh] bf16
        vh = v_ref[0, :, sl]                         # [tk, Dh] bf16
        s = jnp.einsum('qd,kd->qk', qh, kh,
                       preferred_element_type=jnp.float32) * scale
        m_prev = m_sc[h]
        m_new = jnp.maximum(m_prev, jnp.max(s, axis=-1, keepdims=True))
        alpha = jnp.exp(m_prev - m_new)
        p = jnp.exp(s - m_new)
        l_sc[h] = alpha * l_sc[h] + jnp.sum(p, axis=-1, keepdims=True)
        acc_sc[h] = alpha * acc_sc[h] + jnp.dot(
            p.astype(BF16), vh, preferred_element_type=jnp.float32)
        m_sc[h] = m_new

    @pl.when(kv == pl.num_programs(2) - 1)
    def _():
        for h in range(nhead):
            sl = slice(h * dh, (h + 1) * dh)
            inv_l = pl.reciprocal(l_sc[h], approx=True)
            o_ref[0, :, sl] = (acc_sc[h] * inv_l).astype(o_ref.dtype)


def attention(q3, k3, v3, nhead, *, q_tile=256, kv_tile=512):
    b, s, d = q3.shape
    assert d % nhead == 0
    dh = d // nhead
    scale = 1.0 / math.sqrt(dh)
    tq = _tile(s, q_tile)
    tk = _tile(s, kv_tile)
    return pl.pallas_call(
        functools.partial(flash_mha_kernel, nhead=nhead, scale=scale),
        out_shape=jax.ShapeDtypeStruct((b, s, d), BF16),
        grid=(b, s // tq, s // tk),
        in_specs=[pl.BlockSpec((1, tq, d), lambda bi, qi, ki: (bi, qi, 0)),
                  pl.BlockSpec((1, tk, d), lambda bi, qi, ki: (bi, ki, 0)),
                  pl.BlockSpec((1, tk, d), lambda bi, qi, ki: (bi, ki, 0))],
        out_specs=pl.BlockSpec((1, tq, d), lambda bi, qi, ki: (bi, qi, 0)),
        scratch_shapes=[pltpu.VMEM((nhead, tq, 1), jnp.float32),
                        pltpu.VMEM((nhead, tq, 1), jnp.float32),
                        pltpu.VMEM((nhead, tq, dh), jnp.float32)],
        compiler_params=_cparams(("parallel", "parallel", "arbitrary")),
    )(q3, k3, v3)


# ---------------------------------------------------------------------------
# Kernel 4: row-tiled  y = LayerNorm(x @ W + b + residual)   (attn out + LN1).
# ---------------------------------------------------------------------------
def linear_res_ln_kernel(x_ref, w_ref, b_ref, res_ref, g_ref, beta_ref, o_ref):
    xb = x_ref[...].astype(BF16)
    y = jnp.dot(xb, w_ref[...], preferred_element_type=jnp.float32)
    y = y + b_ref[...] + res_ref[...]
    mu = jnp.mean(y, axis=-1, keepdims=True)
    yc = y - mu
    var = jnp.mean(yc * yc, axis=-1, keepdims=True)
    inv = jax.lax.rsqrt(var + LN_EPS)
    o_ref[...] = yc * inv * g_ref[...] + beta_ref[...]


def linear_res_ln(x, w, b, res, gamma, beta, row_tile=ROW_TILE):
    n, din = x.shape
    dout = w.shape[1]
    tr = _tile(n, row_tile)
    return pl.pallas_call(
        linear_res_ln_kernel,
        out_shape=jax.ShapeDtypeStruct((n, dout), F32),
        grid=(n // tr,),
        in_specs=[pl.BlockSpec((tr, din), lambda i: (i, 0)),
                  pl.BlockSpec((din, dout), lambda i: (0, 0)),
                  pl.BlockSpec((1, dout), lambda i: (0, 0)),
                  pl.BlockSpec((tr, dout), lambda i: (i, 0)),
                  pl.BlockSpec((1, dout), lambda i: (0, 0)),
                  pl.BlockSpec((1, dout), lambda i: (0, 0))],
        out_specs=pl.BlockSpec((tr, dout), lambda i: (i, 0)),
        compiler_params=_cparams(("parallel",)),
    )(x, w, b, res, gamma, beta)


# ---------------------------------------------------------------------------
# Kernel 5: fused FFN block  y = LN(relu(x@W1 + b1)@W2 + b2 + x).
#   Hidden [tr, 4D] never touches HBM.
# ---------------------------------------------------------------------------
def ffn_res_ln_kernel(x_ref, w1_ref, b1_ref, w2_ref, b2_ref, g_ref, beta_ref,
                      o_ref):
    x = x_ref[...]                                   # f32 residual
    h = jnp.dot(x.astype(BF16), w1_ref[...], preferred_element_type=jnp.float32)
    h = jnp.maximum(h + b1_ref[...], 0.0)
    y = jnp.dot(h.astype(BF16), w2_ref[...], preferred_element_type=jnp.float32)
    y = y + b2_ref[...] + x
    mu = jnp.mean(y, axis=-1, keepdims=True)
    yc = y - mu
    var = jnp.mean(yc * yc, axis=-1, keepdims=True)
    inv = jax.lax.rsqrt(var + LN_EPS)
    o_ref[...] = yc * inv * g_ref[...] + beta_ref[...]


def ffn_res_ln(x, w1, b1, w2, b2, gamma, beta, row_tile=ROW_TILE):
    n, d = x.shape
    dff = w1.shape[1]
    tr = _tile(n, row_tile)
    # TODO(synk): at d_model >= 1024 on v7x, tile the dff dimension of W1/W2 to
    # bound the double-buffered weight VMEM footprint.
    return pl.pallas_call(
        ffn_res_ln_kernel,
        out_shape=jax.ShapeDtypeStruct((n, d), F32),
        grid=(n // tr,),
        in_specs=[pl.BlockSpec((tr, d), lambda i: (i, 0)),
                  pl.BlockSpec((d, dff), lambda i: (0, 0)),
                  pl.BlockSpec((1, dff), lambda i: (0, 0)),
                  pl.BlockSpec((dff, d), lambda i: (0, 0)),
                  pl.BlockSpec((1, d), lambda i: (0, 0)),
                  pl.BlockSpec((1, d), lambda i: (0, 0)),
                  pl.BlockSpec((1, d), lambda i: (0, 0))],
        out_specs=pl.BlockSpec((tr, d), lambda i: (i, 0)),
        compiler_params=_cparams(("parallel",)),
    )(x, w1, b1, w2, b2, gamma, beta)


# ---------------------------------------------------------------------------
# Kernel 6a: mean-pool over the sequence, grid over batch -> [B, D].
# ---------------------------------------------------------------------------
def pool_kernel(x_ref, o_ref):
    o_ref[0] = jnp.mean(x_ref[0], axis=0, keepdims=True)


def seq_mean(x3):
    b, s, d = x3.shape
    y = pl.pallas_call(
        pool_kernel,
        out_shape=jax.ShapeDtypeStruct((b, 1, d), F32),
        grid=(b,),
        in_specs=[pl.BlockSpec((1, s, d), lambda i: (i, 0, 0))],
        out_specs=pl.BlockSpec((1, 1, d), lambda i: (i, 0, 0)),
        compiler_params=_cparams(("parallel",)),
    )(x3)
    return y.reshape(b, d)


# ---------------------------------------------------------------------------
# Kernel 6b: batched 2-layer output MLP on the pooled rows (single launch).
# ---------------------------------------------------------------------------
def head_mlp_kernel(x_ref, w1_ref, b1_ref, w2_ref, b2_ref, o_ref):
    xb = x_ref[...].astype(BF16)
    h = jnp.dot(xb, w1_ref[...], preferred_element_type=jnp.float32) + b1_ref[...]
    h = jnp.maximum(h, 0.0)
    o_ref[...] = jnp.dot(h.astype(BF16), w2_ref[...],
                         preferred_element_type=jnp.float32) + b2_ref[...]


def head_mlp(x, w1, b1, w2, b2):
    b, d = x.shape
    dmid = w1.shape[1]
    dout = w2.shape[1]
    return pl.pallas_call(
        head_mlp_kernel,
        out_shape=jax.ShapeDtypeStruct((b, dout), F32),
        grid=(1,),
        in_specs=[pl.BlockSpec((b, d), lambda i: (0, 0)),
                  pl.BlockSpec((d, dmid), lambda i: (0, 0)),
                  pl.BlockSpec((1, dmid), lambda i: (0, 0)),
                  pl.BlockSpec((dmid, dout), lambda i: (0, 0)),
                  pl.BlockSpec((1, dout), lambda i: (0, 0))],
        out_specs=pl.BlockSpec((b, dout), lambda i: (0, 0)),
        compiler_params=_cparams(("arbitrary",)),
    )(x, w1, b1, w2, b2)


# ---------------------------------------------------------------------------
# Parameters & forward pass
# ---------------------------------------------------------------------------
def init_params(key, input_size, d_model, nhead, num_layers, output_size):
    assert d_model % 4 == 0 and d_model % nhead == 0
    std = 0.05
    keys = iter(jax.random.split(key, 16 + 8 * num_layers))

    def nrm(shape, s=std, dtype=F32):
        return (s * jax.random.normal(next(keys), shape)).astype(dtype)

    def zeros2(d):
        return jnp.zeros((1, d), F32)

    d4 = d_model // 4
    # Pack the four conv banks into one KMAX-tap stack (zero outside support).
    wstack = jnp.zeros((KMAX, input_size, d_model), F32)
    for bi, k in enumerate(KERNEL_SIZES):
        off = KMAX // 2 - k // 2
        wstack = wstack.at[off:off + k, :, bi * d4:(bi + 1) * d4].set(
            nrm((k, input_size, d4)))

    params = {
        'conv_w': wstack,                              # [KMAX, Cin, D] f32
        'conv_b': zeros2(d_model),
        'proj_w': nrm((d_model, d_model)),             # f32 (fused at fwd time)
        'proj_b': zeros2(d_model),
        'pos': nrm((1000, d_model), 0.02),
        'layers': [],
        'out_w1': nrm((d_model, d_model // 2), dtype=BF16),
        'out_b1': zeros2(d_model // 2),
        'out_w2': nrm((d_model // 2, output_size), dtype=BF16),
        'out_b2': zeros2(output_size),
    }
    for _ in range(num_layers):
        params['layers'].append({
            'w_qkv': nrm((d_model, 3 * d_model), dtype=BF16),
            'b_qkv': zeros2(3 * d_model),
            'wo': nrm((d_model, d_model), dtype=BF16), 'bo': zeros2(d_model),
            'ln1_g': jnp.ones((1, d_model), F32), 'ln1_b': zeros2(d_model),
            'w1': nrm((d_model, 4 * d_model), dtype=BF16),
            'b1': zeros2(4 * d_model),
            'w2': nrm((4 * d_model, d_model), dtype=BF16),
            'b2': zeros2(d_model),
            'ln2_g': jnp.ones((1, d_model), F32), 'ln2_b': zeros2(d_model),
        })
    return params


def wavelet_transformer_forward(params, x, *, nhead):
    """x: [B, S, input_size] -> [B, output_size]   (dropout = identity)."""
    b, s, cin = x.shape
    d_model = params['proj_w'].shape[0]
    assert s <= params['pos'].shape[0], "pos table supports seq_len <= 1000"

    # Fold the input projection into the conv-bank weights (exact up to
    # float reassociation); tiny einsum done once per call.
    wc_fused = jnp.einsum('kcd,de->kce', params['conv_w'], params['proj_w'])
    wc_fused = wc_fused.reshape(KMAX * cin, d_model).astype(BF16)
    b_fused = params['conv_b'] @ params['proj_w'] + params['proj_b']

    # im2col slab: [B, S, KMAX*Cin]  (Cin is tiny, so this is cheap).
    pad = KMAX // 2
    xpad = jnp.pad(x.astype(F32), ((0, 0), (pad, pad), (0, 0)))
    slab = jnp.concatenate([xpad[:, t:t + s, :] for t in range(KMAX)], axis=-1)

    # fused wavelet conv bank + folded projection + positional encoding
    x3 = conv_proj_pos(slab, wc_fused, b_fused, params['pos'][:s])  # [B,S,D] f32

    xf = x3.reshape(b * s, d_model)                                 # flat rows
    for lyr in params['layers']:
        q, k, v = qkv_proj(xf, lyr['w_qkv'], lyr['b_qkv'])          # bf16 [B*S,D]
        ctx = attention(q.reshape(b, s, d_model),
                        k.reshape(b, s, d_model),
                        v.reshape(b, s, d_model), nhead)            # bf16 [B,S,D]
        x1 = linear_res_ln(ctx.reshape(b * s, d_model), lyr['wo'], lyr['bo'],
                           xf, lyr['ln1_g'], lyr['ln1_b'])          # LN1(x+attn)
        xf = ffn_res_ln(x1, lyr['w1'], lyr['b1'], lyr['w2'], lyr['b2'],
                        lyr['ln2_g'], lyr['ln2_b'])                 # LN2(x+FFN)

    pooled = seq_mean(xf.reshape(b, s, d_model))                    # [B, D]
    return head_mlp(pooled, params['out_w1'], params['out_b1'],
                    params['out_w2'], params['out_b2'])             # [B, OUT]


if __name__ == "__main__":
    # Small, shape-consistent config: input_size=4, d_model=32, nhead=4,
    # num_layers=2, output_size=8, batch=2, seq=8.
    B, S, IN = 2, 8, 4
    D_MODEL, NHEAD, NLAYERS, OUT = 32, 4, 2, 8

    key = jax.random.PRNGKey(0)
    kx, kp = jax.random.split(key)
    x = jax.random.normal(kx, (B, S, IN), dtype=F32)
    params = init_params(kp, IN, D_MODEL, NHEAD, NLAYERS, OUT)

    fwd = jax.jit(functools.partial(wavelet_transformer_forward, nhead=NHEAD))
    y = fwd(params, x)
    jax.block_until_ready(y)
    assert y.shape == (B, OUT) and y.dtype == F32
    print("KERNEL_OK")
</pallas_src>

<mosaic_0001>
module attributes {stable_mosaic.version = 11 : i64} {
  func.func @conv_proj_pos_kernel(%arg0: i32, %arg1: i32, %arg2: memref<1x8x36xf32, #tpu.memory_space<vmem>>, %arg3: memref<36x32xbf16, #tpu.memory_space<vmem>>, %arg4: memref<1x32xf32, #tpu.memory_space<vmem>>, %arg5: memref<8x32xf32, #tpu.memory_space<vmem>>, %arg6: memref<1x8x32xf32, #tpu.memory_space<vmem>>) attributes {dimension_semantics = [#tpu.dimension_semantics<parallel>, #tpu.dimension_semantics<parallel>], iteration_bounds = array<i64: 2, 1>, scalar_prefetch = 0 : i64, scratch_operands = 0 : i64, tpu.core_type = #tpu.core_type<tc>, window_params = [{transform_indices = @transform_0, window_bounds = array<i64: 1, 8, 36>}, {pipeline_mode = #tpu.pipeline_mode<synchronous>, transform_indices = @transform_1, window_bounds = array<i64: 36, 32>}, {pipeline_mode = #tpu.pipeline_mode<synchronous>, transform_indices = @transform_2, window_bounds = array<i64: 1, 32>}, {transform_indices = @transform_3, window_bounds = array<i64: 8, 32>}, {transform_indices = @transform_4, window_bounds = array<i64: 1, 8, 32>}]} {
    %c0 = arith.constant 0 : index
    %c0_0 = arith.constant 0 : index
    %c0_1 = arith.constant 0 : index
    %0 = vector.load %arg2[%c0, %c0_0, %c0_1] : memref<1x8x36xf32, #tpu.memory_space<vmem>>, vector<1x8x36xf32>
    %1 = vector.shape_cast %0 : vector<1x8x36xf32> to vector<8x36xf32>
    %2 = arith.truncf %1 : vector<8x36xf32> to vector<8x36xbf16>
    %c0_2 = arith.constant 0 : index
    %c0_3 = arith.constant 0 : index
    %3 = vector.load %arg3[%c0_2, %c0_3] : memref<36x32xbf16, #tpu.memory_space<vmem>>, vector<36x32xbf16>
    %cst = arith.constant dense<0.000000e+00> : vector<8x32xf32>
    %4 = tpu.matmul %2, %3, %cst {dimension_numbers = #tpu.dot_dimension_numbers<[1], [0], [0], [1], [0, 0, 1, 1], [], []>} : vector<8x36xbf16>, vector<36x32xbf16>, vector<8x32xf32> -> vector<8x32xf32>
    %c0_4 = arith.constant 0 : index
    %c0_5 = arith.constant 0 : index
    %5 = vector.load %arg4[%c0_4, %c0_5] : memref<1x32xf32, #tpu.memory_space<vmem>>, vector<1x32xf32>
    %6 = vector.broadcast %5 : vector<1x32xf32> to vector<8x32xf32>
    %7 = arith.addf %4, %6 : vector<8x32xf32>
    %c0_6 = arith.constant 0 : index
    %c0_7 = arith.constant 0 : index
    %8 = vector.load %arg5[%c0_6, %c0_7] : memref<8x32xf32, #tpu.memory_space<vmem>>, vector<8x32xf32>
    %9 = arith.addf %7, %8 : vector<8x32xf32>
    %c0_8 = arith.constant 0 : index
    %c0_9 = arith.constant 0 : index
    %c0_10 = arith.constant 0 : index
    %10 = vector.load %arg6[%c0_8, %c0_9, %c0_10] : memref<1x8x32xf32, #tpu.memory_space<vmem>>, vector<1x8x32xf32>
    %11 = vector.shape_cast %10 : vector<1x8x32xf32> to vector<8x32xf32>
    %12 = vector.shape_cast %9 : vector<8x32xf32> to vector<1x8x32xf32>
    tpu.vector_store %arg6[%c0_8, %c0_9, %c0_10], %12 {strides = array<i32>} : memref<1x8x32xf32, #tpu.memory_space<vmem>>, vector<1x8x32xf32>,
    return
  }
  func.func @transform_0(%arg0: i32, %arg1: i32) -> (i32, i32, i32) {
    %c0_i32 = arith.constant 0 : i32
    %c0_i32_0 = arith.constant 0 : i32
    return %arg0, %arg1, %c0_i32 : i32, i32, i32
  }
  func.func @transform_1(%arg0: i32, %arg1: i32) -> (i32, i32) {
    %c0_i32 = arith.constant 0 : i32
    %c0_i32_0 = arith.constant 0 : i32
    %c0_i32_1 = arith.constant 0 : i32
    return %c0_i32, %c0_i32_0 : i32, i32
  }
  func.func @transform_2(%arg0: i32, %arg1: i32) -> (i32, i32) {
    %c0_i32 = arith.constant 0 : i32
    %c0_i32_0 = arith.constant 0 : i32
    %c0_i32_1 = arith.constant 0 : i32
    return %c0_i32, %c0_i32_0 : i32, i32
  }
  func.func @transform_3(%arg0: i32, %arg1: i32) -> (i32, i32) {
    %c0_i32 = arith.constant 0 : i32
    %c0_i32_0 = arith.constant 0 : i32
    return %arg1, %c0_i32 : i32, i32
  }
  func.func @transform_4(%arg0: i32, %arg1: i32) -> (i32, i32, i32) {
    %c0_i32 = arith.constant 0 : i32
    %c0_i32_0 = arith.constant 0 : i32
    return %arg0, %arg1, %c0_i32 : i32, i32, i32
  }
}

module attributes {stable_mosaic.version = 11 : i64} {
  func.func @linear_res_ln_kernel(%arg0: i32, %arg1: memref<16x32xbf16, #tpu.memory_space<vmem>>, %arg2: memref<32x32xbf16, #tpu.memory_space<vmem>>, %arg3: memref<1x32xf32, #tpu.memory_space<vmem>>, %arg4: memref<16x32xf32, #tpu.memory_space<vmem>>, %arg5: memref<1x32xf32, #tpu.memory_space<vmem>>, %arg6: memref<1x32xf32, #tpu.memory_space<vmem>>, %arg7: memref<16x32xf32, #tpu.memory_space<vmem>>) attributes {dimension_semantics = [#tpu.dimension_semantics<parallel>], iteration_bounds = array<i64: 1>, scalar_prefetch = 0 : i64, scratch_operands = 0 : i64, tpu.core_type = #tpu.core_type<tc>, window_params = [{transform_indices = @transform_0, window_bounds = array<i64: 16, 32>}, {pipeline_mode = #tpu.pipeline_mode<synchronous>, transform_indices = @transform_1, window_bounds = array<i64: 32, 32>}, {pipeline_mode = #tpu.pipeline_mode<synchronous>, transform_indices = @transform_2, window_bounds = array<i64: 1, 32>}, {transform_indices = @transform_3, window_bounds = array<i64: 16, 32>}, {pipeline_mode = #tpu.pipeline_mode<synchronous>, transform_indices = @transform_4, window_bounds = array<i64: 1, 32>}, {pipeline_mode = #tpu.pipeline_mode<synchronous>, transform_indices = @transform_5, window_bounds = array<i64: 1, 32>}, {transform_indices = @transform_6, window_bounds = array<i64: 16, 32>}]} {
    %c0 = arith.constant 0 : index
    %c0_0 = arith.constant 0 : index
    %0 = vector.load %arg1[%c0, %c0_0] : memref<16x32xbf16, #tpu.memory_space<vmem>>, vector<16x32xbf16>
    %c0_1 = arith.constant 0 : index
    %c0_2 = arith.constant 0 : index
    %1 = vector.load %arg2[%c0_1, %c0_2] : memref<32x32xbf16, #tpu.memory_space<vmem>>, vector<32x32xbf16>
    %cst = arith.constant dense<0.000000e+00> : vector<16x32xf32>
    %2 = tpu.matmul %0, %1, %cst {dimension_numbers = #tpu.dot_dimension_numbers<[1], [0], [0], [1], [0, 0, 1, 1], [], []>} : vector<16x32xbf16>, vector<32x32xbf16>, vector<16x32xf32> -> vector<16x32xf32>
    %c0_3 = arith.constant 0 : index
    %c0_4 = arith.constant 0 : index
    %3 = vector.load %arg3[%c0_3, %c0_4] : memref<1x32xf32, #tpu.memory_space<vmem>>, vector<1x32xf32>
    %4 = vector.broadcast %3 : vector<1x32xf32> to vector<16x32xf32>
    %5 = arith.addf %2, %4 : vector<16x32xf32>
    %c0_5 = arith.constant 0 : index
    %c0_6 = arith.constant 0 : index
    %6 = vector.load %arg4[%c0_5, %c0_6] : memref<16x32xf32, #tpu.memory_space<vmem>>, vector<16x32xf32>
    %7 = arith.addf %5, %6 : vector<16x32xf32>
    %cst_7 = arith.constant dense<0.000000e+00> : vector<16xf32>
    %8 = vector.multi_reduction <add>, %7, %cst_7 [1] : vector<16x32xf32> to vector<16xf32>
    %9 = vector.shape_cast %8 : vector<16xf32> to vector<16x1xf32>
    %cst_8 = arith.constant 3.200000e+01 : f32
    %10 = vector.broadcast %cst_8 : f32 to vector<16x1xf32>
    %11 = arith.divf %9, %10 : vector<16x1xf32>
    %12 = vector.broadcast %11 : vector<16x1xf32> to vector<16x32xf32>
    %13 = arith.subf %7, %12 : vector<16x32xf32>
    %14 = arith.mulf %13, %13 : vector<16x32xf32>
    %cst_9 = arith.constant dense<0.000000e+00> : vector<16xf32>
    %15 = vector.multi_reduction <add>, %14, %cst_9 [1] : vector<16x32xf32> to vector<16xf32>
    %16 = vector.shape_cast %15 : vector<16xf32> to vector<16x1xf32>
    %cst_10 = arith.constant 3.200000e+01 : f32
    %17 = vector.broadcast %cst_10 : f32 to vector<16x1xf32>
    %18 = arith.divf %16, %17 : vector<16x1xf32>
    %cst_11 = arith.constant 9.99999974E-6 : f32
    %19 = vector.broadcast %cst_11 : f32 to vector<16x1xf32>
    %20 = arith.addf %18, %19 : vector<16x1xf32>
    %21 = math.rsqrt %20 : vector<16x1xf32>
    %22 = vector.broadcast %21 : vector<16x1xf32> to vector<16x32xf32>
    %23 = arith.mulf %13, %22 : vector<16x32xf32>
    %c0_12 = arith.constant 0 : index
    %c0_13 = arith.constant 0 : index
    %24 = vector.load %arg5[%c0_12, %c0_13] : memref<1x32xf32, #tpu.memory_space<vmem>>, vector<1x32xf32>
    %25 = vector.broadcast %24 : vector<1x32xf32> to vector<16x32xf32>
    %26 = arith.mulf %23, %25 : vector<16x32xf32>
    %c0_14 = arith.constant 0 : index
    %c0_15 = arith.constant 0 : index
    %27 = vector.load %arg6[%c0_14, %c0_15] : memref<1x32xf32, #tpu.memory_space<vmem>>, vector<1x32xf32>
    %28 = vector.broadcast %27 : vector<1x32xf32> to vector<16x32xf32>
    %29 = arith.addf %26, %28 : vector<16x32xf32>
    %c0_16 = arith.constant 0 : index
    %c0_17 = arith.constant 0 : index
    %30 = vector.load %arg7[%c0_16, %c0_17] : memref<16x32xf32, #tpu.memory_space<vmem>>, vector<16x32xf32>
    tpu.vector_store %arg7[%c0_16, %c0_17], %29 {strides = array<i32>} : memref<16x32xf32, #tpu.memory_space<vmem>>, vector<16x32xf32>,
    return
  }
  func.func @transform_0(%arg0: i32) -> (i32, i32) {
    %c0_i32 = arith.constant 0 : i32
    %c0_i32_0 = arith.constant 0 : i32
    return %arg0, %c0_i32 : i32, i32
  }
  func.func @transform_1(%arg0: i32) -> (i32, i32) {
    %c0_i32 = arith.constant 0 : i32
    %c0_i32_0 = arith.constant 0 : i32
    %c0_i32_1 = arith.constant 0 : i32
    return %c0_i32, %c0_i32_0 : i32, i32
  }
  func.func @transform_2(%arg0: i32) -> (i32, i32) {
    %c0_i32 = arith.constant 0 : i32
    %c0_i32_0 = arith.constant 0 : i32
    %c0_i32_1 = arith.constant 0 : i32
    return %c0_i32, %c0_i32_0 : i32, i32
  }
  func.func @transform_3(%arg0: i32) -> (i32, i32) {
    %c0_i32 = arith.constant 0 : i32
    %c0_i32_0 = arith.constant 0 : i32
    return %arg0, %c0_i32 : i32, i32
  }
  func.func @transform_4(%arg0: i32) -> (i32, i32) {
    %c0_i32 = arith.constant 0 : i32
    %c0_i32_0 = arith.constant 0 : i32
    %c0_i32_1 = arith.constant 0 : i32
    return %c0_i32, %c0_i32_0 : i32, i32
  }
  func.func @transform_5(%arg0: i32) -> (i32, i32) {
    %c0_i32 = arith.constant 0 : i32
    %c0_i32_0 = arith.constant 0 : i32
    %c0_i32_1 = arith.constant 0 : i32
    return %c0_i32, %c0_i32_0 : i32, i32
  }
  func.func @transform_6(%arg0: i32) -> (i32, i32) {
    %c0_i32 = arith.constant 0 : i32
    %c0_i32_0 = arith.constant 0 : i32
    return %arg0, %c0_i32 : i32, i32
  }
}

module attributes {stable_mosaic.version = 11 : i64} {
  func.func @flash_mha_kernel(%arg0: i32, %arg1: i32, %arg2: i32, %arg3: memref<1x8x32xbf16, #tpu.memory_space<vmem>>, %arg4: memref<1x8x32xbf16, #tpu.memory_space<vmem>>, %arg5: memref<1x8x32xbf16, #tpu.memory_space<vmem>>, %arg6: memref<1x8x32xbf16, #tpu.memory_space<vmem>>, %arg7: memref<4x8x1xf32, #tpu.memory_space<vmem>>, %arg8: memref<4x8x1xf32, #tpu.memory_space<vmem>>, %arg9: memref<4x8x8xf32, #tpu.memory_space<vmem>>) attributes {dimension_semantics = [#tpu.dimension_semantics<parallel>, #tpu.dimension_semantics<parallel>, #tpu.dimension_semantics<arbitrary>], iteration_bounds = array<i64: 2, 1, 1>, scalar_prefetch = 0 : i64, scratch_operands = 3 : i64, tpu.core_type = #tpu.core_type<tc>, window_params = [{transform_indices = @transform_0, window_bounds = array<i64: 1, 8, 32>}, {transform_indices = @transform_1, window_bounds = array<i64: 1, 8, 32>}, {transform_indices = @transform_2, window_bounds = array<i64: 1, 8, 32>}, {transform_indices = @transform_3, window_bounds = array<i64: 1, 8, 32>}]} {
    %c0_i32 = arith.constant 0 : i32
    %0 = arith.cmpi eq, %arg2, %c0_i32 : i32
    %1 = arith.extui %0 : i1 to i32
    %c0_i32_0 = arith.constant 0 : i32
    %2 = arith.cmpi ne, %1, %c0_i32_0 : i32
    scf.if %2 {
      %cst_123 = arith.constant 0xFF800000 : f32
      %170 = vector.broadcast %cst_123 : f32 to vector<4x8x1xf32>
      %c0_124 = arith.constant 0 : index
      %c0_125 = arith.constant 0 : index
      %c0_126 = arith.constant 0 : index
      %171 = vector.load %arg7[%c0_124, %c0_125, %c0_126] : memref<4x8x1xf32, #tpu.memory_space<vmem>>, vector<4x8x1xf32>
      tpu.vector_store %arg7[%c0_124, %c0_125, %c0_126], %170 {strides = array<i32>} : memref<4x8x1xf32, #tpu.memory_space<vmem>>, vector<4x8x1xf32>,
      %cst_127 = arith.constant 0.000000e+00 : f32
      %172 = vector.broadcast %cst_127 : f32 to vector<4x8x1xf32>
      %c0_128 = arith.constant 0 : index
      %c0_129 = arith.constant 0 : index
      %c0_130 = arith.constant 0 : index
      %173 = vector.load %arg8[%c0_128, %c0_129, %c0_130] : memref<4x8x1xf32, #tpu.memory_space<vmem>>, vector<4x8x1xf32>
      tpu.vector_store %arg8[%c0_128, %c0_129, %c0_130], %172 {strides = array<i32>} : memref<4x8x1xf32, #tpu.memory_space<vmem>>, vector<4x8x1xf32>,
      %cst_131 = arith.constant 0.000000e+00 : f32
      %174 = vector.broadcast %cst_131 : f32 to vector<4x8x8xf32>
      %c0_132 = arith.constant 0 : index
      %c0_133 = arith.constant 0 : index
      %c0_134 = arith.constant 0 : index
      %175 = vector.load %arg9[%c0_132, %c0_133, %c0_134] : memref<4x8x8xf32, #tpu.memory_space<vmem>>, vector<4x8x8xf32>
      tpu.vector_store %arg9[%c0_132, %c0_133, %c0_134], %174 {strides = array<i32>} : memref<4x8x8xf32, #tpu.memory_space<vmem>>, vector<4x8x8xf32>,
    } else {
    }
    %c0 = arith.constant 0 : index
    %c0_1 = arith.constant 0 : index
    %c0_2 = arith.constant 0 : index
    %3 = vector.load %arg3[%c0, %c0_1, %c0_2] : memref<1x8x32xbf16, #tpu.memory_space<vmem>>, vector<1x8x8xbf16>
    %4 = vector.shape_cast %3 : vector<1x8x8xbf16> to vector<8x8xbf16>
    %c0_3 = arith.constant 0 : index
    %c0_4 = arith.constant 0 : index
    %c0_5 = arith.constant 0 : index
    %5 = vector.load %arg4[%c0_3, %c0_4, %c0_5] : memref<1x8x32xbf16, #tpu.memory_space<vmem>>, vector<1x8x8xbf16>
    %6 = vector.shape_cast %5 : vector<1x8x8xbf16> to vector<8x8xbf16>
    %c0_6 = arith.constant 0 : index
    %c0_7 = arith.constant 0 : index
    %c0_8 = arith.constant 0 : index
    %7 = vector.load %arg5[%c0_6, %c0_7, %c0_8] : memref<1x8x32xbf16, #tpu.memory_space<vmem>>, vector<1x8x8xbf16>
    %8 = vector.shape_cast %7 : vector<1x8x8xbf16> to vector<8x8xbf16>
    "tpu.trace_start"() <{level = 10 : i32, message = "qd,kd->qk"}> : () -> ()
    %cst = arith.constant dense<0.000000e+00> : vector<8x8xf32>
    %9 = tpu.matmul %4, %6, %cst {dimension_numbers = #tpu.dot_dimension_numbers<[1], [1], [0], [0], [0, 0, 1, 0], [], []>} : vector<8x8xbf16>, vector<8x8xbf16>, vector<8x8xf32> -> vector<8x8xf32>
    "tpu.trace_stop"() : () -> ()
    %cst_9 = arith.constant 0.353553385 : f32
    %10 = vector.broadcast %cst_9 : f32 to vector<8x8xf32>
    %11 = arith.mulf %9, %10 : vector<8x8xf32>
    %c0_10 = arith.constant 0 : index
    %c0_11 = arith.constant 0 : index
    %c0_12 = arith.constant 0 : index
    %12 = vector.load %arg7[%c0_10, %c0_11, %c0_12] : memref<4x8x1xf32, #tpu.memory_space<vmem>>, vector<1x8x1xf32>
    %13 = vector.shape_cast %12 : vector<1x8x1xf32> to vector<8x1xf32>
    %cst_13 = arith.constant dense<0xFF800000> : vector<8xf32>
    %14 = vector.multi_reduction <maximumf>, %11, %cst_13 [1] : vector<8x8xf32> to vector<8xf32>
    %15 = vector.shape_cast %14 : vector<8xf32> to vector<8x1xf32>
    %16 = arith.maximumf %13, %15 : vector<8x1xf32>
    %17 = arith.subf %13, %16 : vector<8x1xf32>
    %18 = math.exp %17 : vector<8x1xf32>
    %19 = vector.broadcast %16 : vector<8x1xf32> to vector<8x8xf32>
    %20 = arith.subf %11, %19 : vector<8x8xf32>
    %21 = math.exp %20 : vector<8x8xf32>
    %c0_14 = arith.constant 0 : index
    %c0_15 = arith.constant 0 : index
    %c0_16 = arith.constant 0 : index
    %22 = vector.load %arg8[%c0_14, %c0_15, %c0_16] : memref<4x8x1xf32, #tpu.memory_space<vmem>>, vector<1x8x1xf32>
    %23 = vector.shape_cast %22 : vector<1x8x1xf32> to vector<8x1xf32>
    %24 = arith.mulf %18, %23 : vector<8x1xf32>
    %cst_17 = arith.constant dense<0.000000e+00> : vector<8xf32>
    %25 = vector.multi_reduction <add>, %21, %cst_17 [1] : vector<8x8xf32> to vector<8xf32>
    %26 = vector.shape_cast %25 : vector<8xf32> to vector<8x1xf32>
    %27 = arith.addf %24, %26 : vector<8x1xf32>
    %c0_18 = arith.constant 0 : index
    %c0_19 = arith.constant 0 : index
    %c0_20 = arith.constant 0 : index
    %28 = vector.load %arg8[%c0_18, %c0_19, %c0_20] : memref<4x8x1xf32, #tpu.memory_space<vmem>>, vector<1x8x1xf32>
    %29 = vector.shape_cast %28 : vector<1x8x1xf32> to vector<8x1xf32>
    %30 = vector.shape_cast %27 : vector<8x1xf32> to vector<1x8x1xf32>
    tpu.vector_store %arg8[%c0_18, %c0_19, %c0_20], %30 {strides = array<i32>} : memref<4x8x1xf32, #tpu.memory_space<vmem>>, vector<1x8x1xf32>,
    %c0_21 = arith.constant 0 : index
    %c0_22 = arith.constant 0 : index
    %c0_23 = arith.constant 0 : index
    %31 = vector.load %arg9[%c0_21, %c0_22, %c0_23] : memref<4x8x8xf32, #tpu.memory_space<vmem>>, vector<1x8x8xf32>
    %32 = vector.shape_cast %31 : vector<1x8x8xf32> to vector<8x8xf32>
    %33 = vector.broadcast %18 : vector<8x1xf32> to vector<8x8xf32>
    %34 = arith.mulf %33, %32 : vector<8x8xf32>
    %35 = arith.truncf %21 : vector<8x8xf32> to vector<8x8xbf16>
    %cst_24 = arith.constant dense<0.000000e+00> : vector<8x8xf32>
    %36 = tpu.matmul %35, %8, %cst_24 {dimension_numbers = #tpu.dot_dimension_numbers<[1], [0], [0], [1], [0, 0, 1, 1], [], []>} : vector<8x8xbf16>, vector<8x8xbf16>, vector<8x8xf32> -> vector<8x8xf32>
    %37 = arith.addf %34, %36 : vector<8x8xf32>
    %c0_25 = arith.constant 0 : index
    %c0_26 = arith.constant 0 : index
    %c0_27 = arith.constant 0 : index
    %38 = vector.load %arg9[%c0_25, %c0_26, %c0_27] : memref<4x8x8xf32, #tpu.memory_space<vmem>>, vector<1x8x8xf32>
    %39 = vector.shape_cast %38 : vector<1x8x8xf32> to vector<8x8xf32>
    %40 = vector.shape_cast %37 : vector<8x8xf32> to vector<1x8x8xf32>
    tpu.vector_store %arg9[%c0_25, %c0_26, %c0_27], %40 {strides = array<i32>} : memref<4x8x8xf32, #tpu.memory_space<vmem>>, vector<1x8x8xf32>,
    %c0_28 = arith.constant 0 : index
    %c0_29 = arith.constant 0 : index
    %c0_30 = arith.constant 0 : index
    %41 = vector.load %arg7[%c0_28, %c0_29, %c0_30] : memref<4x8x1xf32, #tpu.memory_space<vmem>>, vector<1x8x1xf32>
    %42 = vector.shape_cast %41 : vector<1x8x1xf32> to vector<8x1xf32>
    %43 = vector.shape_cast %16 : vector<8x1xf32> to vector<1x8x1xf32>
    tpu.vector_store %arg7[%c0_28, %c0_29, %c0_30], %43 {strides = array<i32>} : memref<4x8x1xf32, #tpu.memory_space<vmem>>, vector<1x8x1xf32>,
    %c0_31 = arith.constant 0 : index
    %c0_32 = arith.constant 0 : index
    %c8 = arith.constant 8 : index
    %44 = vector.load %arg3[%c0_31, %c0_32, %c8] : memref<1x8x32xbf16, #tpu.memory_space<vmem>>, vector<1x8x8xbf16>
    %45 = vector.shape_cast %44 : vector<1x8x8xbf16> to vector<8x8xbf16>
    %c0_33 = arith.constant 0 : index
    %c0_34 = arith.constant 0 : index
    %c8_35 = arith.constant 8 : index
    %46 = vector.load %arg4[%c0_33, %c0_34, %c8_35] : memref<1x8x32xbf16, #tpu.memory_space<vmem>>, vector<1x8x8xbf16>
    %47 = vector.shape_cast %46 : vector<1x8x8xbf16> to vector<8x8xbf16>
    %c0_36 = arith.constant 0 : index
    %c0_37 = arith.constant 0 : index
    %c8_38 = arith.constant 8 : index
    %48 = vector.load %arg5[%c0_36, %c0_37, %c8_38] : memref<1x8x32xbf16, #tpu.memory_space<vmem>>, vector<1x8x8xbf16>
    %49 = vector.shape_cast %48 : vector<1x8x8xbf16> to vector<8x8xbf16>
    "tpu.trace_start"() <{level = 10 : i32, message = "qd,kd->qk"}> : () -> ()
    %cst_39 = arith.constant dense<0.000000e+00> : vector<8x8xf32>
    %50 = tpu.matmul %45, %47, %cst_39 {dimension_numbers = #tpu.dot_dimension_numbers<[1], [1], [0], [0], [0, 0, 1, 0], [], []>} : vector<8x8xbf16>, vector<8x8xbf16>, vector<8x8xf32> -> vector<8x8xf32>
    "tpu.trace_stop"() : () -> ()
    %cst_40 = arith.constant 0.353553385 : f32
    %51 = vector.broadcast %cst_40 : f32 to vector<8x8xf32>
    %52 = arith.mulf %50, %51 : vector<8x8xf32>
    %c1 = arith.constant 1 : index
    %c0_41 = arith.constant 0 : index
    %c0_42 = arith.constant 0 : index
    %53 = vector.load %arg7[%c1, %c0_41, %c0_42] : memref<4x8x1xf32, #tpu.memory_space<vmem>>, vector<1x8x1xf32>
    %54 = vector.shape_cast %53 : vector<1x8x1xf32> to vector<8x1xf32>
    %cst_43 = arith.constant dense<0xFF800000> : vector<8xf32>
    %55 = vector.multi_reduction <maximumf>, %52, %cst_43 [1] : vector<8x8xf32> to vector<8xf32>
    %56 = vector.shape_cast %55 : vector<8xf32> to vector<8x1xf32>
    %57 = arith.maximumf %54, %56 : vector<8x1xf32>
    %58 = arith.subf %54, %57 : vector<8x1xf32>
    %59 = math.exp %58 : vector<8x1xf32>
    %60 = vector.broadcast %57 : vector<8x1xf32> to vector<8x8xf32>
    %61 = arith.subf %52, %60 : vector<8x8xf32>
    %62 = math.exp %61 : vector<8x8xf32>
    %c1_44 = arith.constant 1 : index
    %c0_45 = arith.constant 0 : index
    %c0_46 = arith.constant 0 : index
    %63 = vector.load %arg8[%c1_44, %c0_45, %c0_46] : memref<4x8x1xf32, #tpu.memory_space<vmem>>, vector<1x8x1xf32>
    %64 = vector.shape_cast %63 : vector<1x8x1xf32> to vector<8x1xf32>
    %65 = arith.mulf %59, %64 : vector<8x1xf32>
    %cst_47 = arith.constant dense<0.000000e+00> : vector<8xf32>
    %66 = vector.multi_reduction <add>, %62, %cst_47 [1] : vector<8x8xf32> to vector<8xf32>
    %67 = vector.shape_cast %66 : vector<8xf32> to vector<8x1xf32>
    %68 = arith.addf %65, %67 : vector<8x1xf32>
    %c1_48 = arith.constant 1 : index
    %c0_49 = arith.constant 0 : index
    %c0_50 = arith.constant 0 : index
    %69 = vector.load %arg8[%c1_48, %c0_49, %c0_50] : memref<4x8x1xf32, #tpu.memory_space<vmem>>, vector<1x8x1xf32>
    %70 = vector.shape_cast %69 : vector<1x8x1xf32> to vector<8x1xf32>
    %71 = vector.shape_cast %68 : vector<8x1xf32> to vector<1x8x1xf32>
    tpu.vector_store %arg8[%c1_48, %c0_49, %c0_50], %71 {strides = array<i32>} : memref<4x8x1xf32, #tpu.memory_space<vmem>>, vector<1x8x1xf32>,
    %c1_51 = arith.constant 1 : index
    %c0_52 = arith.constant 0 : index
    %c0_53 = arith.constant 0 : index
    %72 = vector.load %arg9[%c1_51, %c0_52, %c0_53] : memref<4x8x8xf32, #tpu.memory_space<vmem>>, vector<1x8x8xf32>
    %73 = vector.shape_cast %72 : vector<1x8x8xf32> to vector<8x8xf32>
    %74 = vector.broadcast %59 : vector<8x1xf32> to vector<8x8xf32>
    %75 = arith.mulf %74, %73 : vector<8x8xf32>
    %76 = arith.truncf %62 : vector<8x8xf32> to vector<8x8xbf16>
    %cst_54 = arith.constant dense<0.000000e+00> : vector<8x8xf32>
    %77 = tpu.matmul %76, %49, %cst_54 {dimension_numbers = #tpu.dot_dimension_numbers<[1], [0], [0], [1], [0, 0, 1, 1], [], []>} : vector<8x8xbf16>, vector<8x8xbf16>, vector<8x8xf32> -> vector<8x8xf32>
    %78 = arith.addf %75, %77 : vector<8x8xf32>
    %c1_55 = arith.constant 1 : index
    %c0_56 = arith.constant 0 : index
    %c0_57 = arith.constant 0 : index
    %79 = vector.load %arg9[%c1_55, %c0_56, %c0_57] : memref<4x8x8xf32, #tpu.memory_space<vmem>>, vector<1x8x8xf32>
    %80 = vector.shape_cast %79 : vector<1x8x8xf32> to vector<8x8xf32>
    %81 = vector.shape_cast %78 : vector<8x8xf32> to vector<1x8x8xf32>
    tpu.vector_store %arg9[%c1_55, %c0_56, %c0_57], %81 {strides = array<i32>} : memref<4x8x8xf32, #tpu.memory_space<vmem>>, vector<1x8x8xf32>,
    %c1_58 = arith.constant 1 : index
    %c0_59 = arith.constant 0 : index
    %c0_60 = arith.constant 0 : index
    %82 = vector.load %arg7[%c1_58, %c0_59, %c0_60] : memref<4x8x1xf32, #tpu.memory_space<vmem>>, vector<1x8x1xf32>
    %83 = vector.shape_cast %82 : vector<1x8x1xf32> to vector<8x1xf32>
    %84 = vector.shape_cast %57 : vector<8x1xf32> to vector<1x8x1xf32>
    tpu.vector_store %arg7[%c1_58, %c0_59, %c0_60], %84 {strides = array<i32>} : memref<4x8x1xf32, #tpu.memory_space<vmem>>, vector<1x8x1xf32>,
    %c0_61 = arith.constant 0 : index
    %c0_62 = arith.constant 0 : index
    %c16 = arith.constant 16 : index
    %85 = vector.load %arg3[%c0_61, %c0_62, %c16] : memref<1x8x32xbf16, #tpu.memory_space<vmem>>, vector<1x8x8xbf16>
    %86 = vector.shape_cast %85 : vector<1x8x8xbf16> to vector<8x8xbf16>
    %c0_63 = arith.constant 0 : index
    %c0_64 = arith.constant 0 : index
    %c16_65 = arith.constant 16 : index
    %87 = vector.load %arg4[%c0_63, %c0_64, %c16_65] : memref<1x8x32xbf16, #tpu.memory_space<vmem>>, vector<1x8x8xbf16>
    %88 = vector.shape_cast %87 : vector<1x8x8xbf16> to vector<8x8xbf16>
    %c0_66 = arith.constant 0 : index
    %c0_67 = arith.constant 0 : index
    %c16_68 = arith.constant 16 : index
    %89 = vector.load %arg5[%c0_66, %c0_67, %c16_68] : memref<1x8x32xbf16, #tpu.memory_space<vmem>>, vector<1x8x8xbf16>
    %90 = vector.shape_cast %89 : vector<1x8x8xbf16> to vector<8x8xbf16>
    "tpu.trace_start"() <{level = 10 : i32, message = "qd,kd->qk"}> : () -> ()
    %cst_69 = arith.constant dense<0.000000e+00> : vector<8x8xf32>
    %91 = tpu.matmul %86, %88, %cst_69 {dimension_numbers = #tpu.dot_dimension_numbers<[1], [1], [0], [0], [0, 0, 1, 0], [], []>} : vector<8x8xbf16>, vector<8x8xbf16>, vector<8x8xf32> -> vector<8x8xf32>
    "tpu.trace_stop"() : () -> ()
    %cst_70 = arith.constant 0.353553385 : f32
    %92 = vector.broadcast %cst_70 : f32 to vector<8x8xf32>
    %93 = arith.mulf %91, %92 : vector<8x8xf32>
    %c2 = arith.constant 2 : index
    %c0_71 = arith.constant 0 : index
    %c0_72 = arith.constant 0 : index
    %94 = vector.load %arg7[%c2, %c0_71, %c0_72] : memref<4x8x1xf32, #tpu.memory_space<vmem>>, vector<1x8x1xf32>
    %95 = vector.shape_cast %94 : vector<1x8x1xf32> to vector<8x1xf32>
    %cst_73 = arith.constant dense<0xFF800000> : vector<8xf32>
    %96 = vector.multi_reduction <maximumf>, %93, %cst_73 [1] : vector<8x8xf32> to vector<8xf32>
    %97 = vector.shape_cast %96 : vector<8xf32> to vector<8x1xf32>
    %98 = arith.maximumf %95, %97 : vector<8x1xf32>
    %99 = arith.subf %95, %98 : vector<8x1xf32>
    %100 = math.exp %99 : vector<8x1xf32>
    %101 = vector.broadcast %98 : vector<8x1xf32> to vector<8x8xf32>
    %102 = arith.subf %93, %101 : vector<8x8xf32>
    %103 = math.exp %102 : vector<8x8xf32>
    %c2_74 = arith.constant 2 : index
    %c0_75 = arith.constant 0 : index
    %c0_76 = arith.constant 0 : index
    %104 = vector.load %arg8[%c2_74, %c0_75, %c0_76] : memref<4x8x1xf32, #tpu.memory_space<vmem>>, vector<1x8x1xf32>
    %105 = vector.shape_cast %104 : vector<1x8x1xf32> to vector<8x1xf32>
    %106 = arith.mulf %100, %105 : vector<8x1xf32>
    %cst_77 = arith.constant dense<0.000000e+00> : vector<8xf32>
    %107 = vector.multi_reduction <add>, %103, %cst_77 [1] : vector<8x8xf32> to vector<8xf32>
    %108 = vector.shape_cast %107 : vector<8xf32> to vector<8x1xf32>
    %109 = arith.addf %106, %108 : vector<8x1xf32>
    %c2_78 = arith.constant 2 : index
    %c0_79 = arith.constant 0 : index
    %c0_80 = arith.constant 0 : index
    %110 = vector.load %arg8[%c2_78, %c0_79, %c0_80] : memref<4x8x1xf32, #tpu.memory_space<vmem>>, vector<1x8x1xf32>
    %111 = vector.shape_cast %110 : vector<1x8x1xf32> to vector<8x1xf32>
    %112 = vector.shape_cast %109 : vector<8x1xf32> to vector<1x8x1xf32>
    tpu.vector_store %arg8[%c2_78, %c0_79, %c0_80], %112 {strides = array<i32>} : memref<4x8x1xf32, #tpu.memory_space<vmem>>, vector<1x8x1xf32>,
    %c2_81 = arith.constant 2 : index
    %c0_82 = arith.constant 0 : index
    %c0_83 = arith.constant 0 : index
    %113 = vector.load %arg9[%c2_81, %c0_82, %c0_83] : memref<4x8x8xf32, #tpu.memory_space<vmem>>, vector<1x8x8xf32>
    %114 = vector.shape_cast %113 : vector<1x8x8xf32> to vector<8x8xf32>
    %115 = vector.broadcast %100 : vector<8x1xf32> to vector<8x8xf32>
    %116 = arith.mulf %115, %114 : vector<8x8xf32>
    %117 = arith.truncf %103 : vector<8x8xf32> to vector<8x8xbf16>
    %cst_84 = arith.constant dense<0.000000e+00> : vector<8x8xf32>
    %118 = tpu.matmul %117, %90, %cst_84 {dimension_numbers = #tpu.dot_dimension_numbers<[1], [0], [0], [1], [0, 0, 1, 1], [], []>} : vector<8x8xbf16>, vector<8x8xbf16>, vector<8x8xf32> -> vector<8x8xf32>
    %119 = arith.addf %116, %118 : vector<8x8xf32>
    %c2_85 = arith.constant 2 : index
    %c0_86 = arith.constant 0 : index
    %c0_87 = arith.constant 0 : index
    %120 = vector.load %arg9[%c2_85, %c0_86, %c0_87] : memref<4x8x8xf32, #tpu.memory_space<vmem>>, vector<1x8x8xf32>
    %121 = vector.shape_cast %120 : vector<1x8x8xf32> to vector<8x8xf32>
    %122 = vector.shape_cast %119 : vector<8x8xf32> to vector<1x8x8xf32>
    tpu.vector_store %arg9[%c2_85, %c0_86, %c0_87], %122 {strides = array<i32>} : memref<4x8x8xf32, #tpu.memory_space<vmem>>, vector<1x8x8xf32>,
    %c2_88 = arith.constant 2 : index
    %c0_89 = arith.constant 0 : index
    %c0_90 = arith.constant 0 : index
    %123 = vector.load %arg7[%c2_88, %c0_89, %c0_90] : memref<4x8x1xf32, #tpu.memory_space<vmem>>, vector<1x8x1xf32>
    %124 = vector.shape_cast %123 : vector<1x8x1xf32> to vector<8x1xf32>
    %125 = vector.shape_cast %98 : vector<8x1xf32> to vector<1x8x1xf32>
    tpu.vector_store %arg7[%c2_88, %c0_89, %c0_90], %125 {strides = array<i32>} : memref<4x8x1xf32, #tpu.memory_space<vmem>>, vector<1x8x1xf32>,
    %c0_91 = arith.constant 0 : index
    %c0_92 = arith.constant 0 : index
    %c24 = arith.constant 24 : index
    %126 = vector.load %arg3[%c0_91, %c0_92, %c24] : memref<1x8x32xbf16, #tpu.memory_space<vmem>>, vector<1x8x8xbf16>
    %127 = vector.shape_cast %126 : vector<1x8x8xbf16> to vector<8x8xbf16>
    %c0_93 = arith.constant 0 : index
    %c0_94 = arith.constant 0 : index
    %c24_95 = arith.constant 24 : index
    %128 = vector.load %arg4[%c0_93, %c0_94, %c24_95] : memref<1x8x32xbf16, #tpu.memory_space<vmem>>, vector<1x8x8xbf16>
    %129 = vector.shape_cast %128 : vector<1x8x8xbf16> to vector<8x8xbf16>
    %c0_96 = arith.constant 0 : index
    %c0_97 = arith.constant 0 : index
    %c24_98 = arith.constant 24 : index
    %130 = vector.load %arg5[%c0_96, %c0_97, %c24_98] : memref<1x8x32xbf16, #tpu.memory_space<vmem>>, vector<1x8x8xbf16>
    %131 = vector.shape_cast %130 : vector<1x8x8xbf16> to vector<8x8xbf16>
    "tpu.trace_start"() <{level = 10 : i32, message = "qd,kd->qk"}> : () -> ()
    %cst_99 = arith.constant dense<0.000000e+00> : vector<8x8xf32>
    %132 = tpu.matmul %127, %129, %cst_99 {dimension_numbers = #tpu.dot_dimension_numbers<[1], [1], [0], [0], [0, 0, 1, 0], [], []>} : vector<8x8xbf16>, vector<8x8xbf16>, vector<8x8xf32> -> vector<8x8xf32>
    "tpu.trace_stop"() : () -> ()
    %cst_100 = arith.constant 0.353553385 : f32
    %133 = vector.broadcast %cst_100 : f32 to vector<8x8xf32>
    %134 = arith.mulf %132, %133 : vector<8x8xf32>
    %c3 = arith.constant 3 : index
    %c0_101 = arith.constant 0 : index
    %c0_102 = arith.constant 0 : index
    %135 = vector.load %arg7[%c3, %c0_101, %c0_102] : memref<4x8x1xf32, #tpu.memory_space<vmem>>, vector<1x8x1xf32>
    %136 = vector.shape_cast %135 : vector<1x8x1xf32> to vector<8x1xf32>
    %cst_103 = arith.constant dense<0xFF800000> : vector<8xf32>
    %137 = vector.multi_reduction <maximumf>, %134, %cst_103 [1] : vector<8x8xf32> to vector<8xf32>
    %138 = vector.shape_cast %137 : vector<8xf32> to vector<8x1xf32>
    %139 = arith.maximumf %136, %138 : vector<8x1xf32>
    %140 = arith.subf %136, %139 : vector<8x1xf32>
    %141 = math.exp %140 : vector<8x1xf32>
    %142 = vector.broadcast %139 : vector<8x1xf32> to vector<8x8xf32>
    %143 = arith.subf %134, %142 : vector<8x8xf32>
    %144 = math.exp %143 : vector<8x8xf32>
    %c3_104 = arith.constant 3 : index
    %c0_105 = arith.constant 0 : index
    %c0_106 = arith.constant 0 : index
    %145 = vector.load %arg8[%c3_104, %c0_105, %c0_106] : memref<4x8x1xf32, #tpu.memory_space<vmem>>, vector<1x8x1xf32>
    %146 = vector.shape_cast %145 : vector<1x8x1xf32> to vector<8x1xf32>
    %147 = arith.mulf %141, %146 : vector<8x1xf32>
    %cst_107 = arith.constant dense<0.000000e+00> : vector<8xf32>
    %148 = vector.multi_reduction <add>, %144, %cst_107 [1] : vector<8x8xf32> to vector<8xf32>
    %149 = vector.shape_cast %148 : vector<8xf32> to vector<8x1xf32>
    %150 = arith.addf %147, %149 : vector<8x1xf32>
    %c3_108 = arith.constant 3 : index
    %c0_109 = arith.constant 0 : index
    %c0_110 = arith.constant 0 : index
    %151 = vector.load %arg8[%c3_108, %c0_109, %c0_110] : memref<4x8x1xf32, #tpu.memory_space<vmem>>, vector<1x8x1xf32>
    %152 = vector.shape_cast %151 : vector<1x8x1xf32> to vector<8x1xf32>
    %153 = vector.shape_cast %150 : vector<8x1xf32> to vector<1x8x1xf32>
    tpu.vector_store %arg8[%c3_108, %c0_109, %c0_110], %153 {strides = array<i32>} : memref<4x8x1xf32, #tpu.memory_space<vmem>>, vector<1x8x1xf32>,
    %c3_111 = arith.constant 3 : index
    %c0_112 = arith.constant 0 : index
    %c0_113 = arith.constant 0 : index
    %154 = vector.load %arg9[%c3_111, %c0_112, %c0_113] : memref<4x8x8xf32, #tpu.memory_space<vmem>>, vector<1x8x8xf32>
    %155 = vector.shape_cast %154 : vector<1x8x8xf32> to vector<8x8xf32>
    %156 = vector.broadcast %141 : vector<8x1xf32> to vector<8x8xf32>
    %157 = arith.mulf %156, %155 : vector<8x8xf32>
    %158 = arith.truncf %144 : vector<8x8xf32> to vector<8x8xbf16>
    %cst_114 = arith.constant dense<0.000000e+00> : vector<8x8xf32>
    %159 = tpu.matmul %158, %131, %cst_114 {dimension_numbers = #tpu.dot_dimension_numbers<[1], [0], [0], [1], [0, 0, 1, 1], [], []>} : vector<8x8xbf16>, vector<8x8xbf16>, vector<8x8xf32> -> vector<8x8xf32>
    %160 = arith.addf %157, %159 : vector<8x8xf32>
    %c3_115 = arith.constant 3 : index
    %c0_116 = arith.constant 0 : index
    %c0_117 = arith.constant 0 : index
    %161 = vector.load %arg9[%c3_115, %c0_116, %c0_117] : memref<4x8x8xf32, #tpu.memory_space<vmem>>, vector<1x8x8xf32>
    %162 = vector.shape_cast %161 : vector<1x8x8xf32> to vector<8x8xf32>
    %163 = vector.shape_cast %160 : vector<8x8xf32> to vector<1x8x8xf32>
    tpu.vector_store %arg9[%c3_115, %c0_116, %c0_117], %163 {strides = array<i32>} : memref<4x8x8xf32, #tpu.memory_space<vmem>>, vector<1x8x8xf32>,
    %c3_118 = arith.constant 3 : index
    %c0_119 = arith.constant 0 : index
    %c0_120 = arith.constant 0 : index
    %164 = vector.load %arg7[%c3_118, %c0_119, %c0_120] : memref<4x8x1xf32, #tpu.memory_space<vmem>>, vector<1x8x1xf32>
    %165 = vector.shape_cast %164 : vector<1x8x1xf32> to vector<8x1xf32>
    %166 = vector.shape_cast %139 : vector<8x1xf32> to vector<1x8x1xf32>
    tpu.vector_store %arg7[%c3_118, %c0_119, %c0_120], %166 {strides = array<i32>} : memref<4x8x1xf32, #tpu.memory_space<vmem>>, vector<1x8x1xf32>,
    %c0_i32_121 = arith.constant 0 : i32
    %167 = arith.cmpi eq, %arg2, %c0_i32_121 : i32
    %168 = arith.extui %167 : i1 to i32
    %c0_i32_122 = arith.constant 0 : i32
    %169 = arith.cmpi ne, %168, %c0_i32_122 : i32
    scf.if %169 {
      %c0_123 = arith.constant 0 : index
      %c0_124 = arith.constant 0 : index
      %c0_125 = arith.constant 0 : index
      %170 = vector.load %arg8[%c0_123, %c0_124, %c0_125] : memref<4x8x1xf32, #tpu.memory_space<vmem>>, vector<1x8x1xf32>
      %171 = vector.shape_cast %170 : vector<1x8x1xf32> to vector<8x1xf32>
      %172 = tpu.reciprocal %171 {approx = true} : vector<8x1xf32> -> vector<8x1xf32>
      %c0_126 = arith.constant 0 : index
      %c0_127 = arith.constant 0 : index
      %c0_128 = arith.constant 0 : index
      %173 = vector.load %arg9[%c0_126, %c0_127, %c0_128] : memref<4x8x8xf32, #tpu.memory_space<vmem>>, vector<1x8x8xf32>
      %174 = vector.shape_cast %173 : vector<1x8x8xf32> to vector<8x8xf32>
      %175 = vector.broadcast %172 : vector<8x1xf32> to vector<8x8xf32>
      %176 = arith.mulf %174, %175 : vector<8x8xf32>
      %177 = arith.truncf %176 : vector<8x8xf32> to vector<8x8xbf16>
      %c0_129 = arith.constant 0 : index
      %c0_130 = arith.constant 0 : index
      %c0_131 = arith.constant 0 : index
      %178 = vector.load %arg6[%c0_129, %c0_130, %c0_131] : memref<1x8x32xbf16, #tpu.memory_space<vmem>>, vector<1x8x8xbf16>
      %179 = vector.shape_cast %178 : vector<1x8x8xbf16> to vector<8x8xbf16>
      %180 = vector.shape_cast %177 : vector<8x8xbf16> to vector<1x8x8xbf16>
      tpu.vector_store %arg6[%c0_129, %c0_130, %c0_131], %180 {strides = array<i32>} : memref<1x8x32xbf16, #tpu.memory_space<vmem>>, vector<1x8x8xbf16>,
      %c1_132 = arith.constant 1 : index
      %c0_133 = arith.constant 0 : index
      %c0_134 = arith.constant 0 : index
      %181 = vector.load %arg8[%c1_132, %c0_133, %c0_134] : memref<4x8x1xf32, #tpu.memory_space<vmem>>, vector<1x8x1xf32>
      %182 = vector.shape_cast %181 : vector<1x8x1xf32> to vector<8x1xf32>
      %183 = tpu.reciprocal %182 {approx = true} : vector<8x1xf32> -> vector<8x1xf32>
      %c1_135 = arith.constant 1 : index
      %c0_136 = arith.constant 0 : index
      %c0_137 = arith.constant 0 : index
      %184 = vector.load %arg9[%c1_135, %c0_136, %c0_137] : memref<4x8x8xf32, #tpu.memory_space<vmem>>, vector<1x8x8xf32>
      %185 = vector.shape_cast %184 : vector<1x8x8xf32> to vector<8x8xf32>
      %186 = vector.broadcast %183 : vector<8x1xf32> to vector<8x8xf32>
      %187 = arith.mulf %185, %186 : vector<8x8xf32>
      %188 = arith.truncf %187 : vector<8x8xf32> to vector<8x8xbf16>
      %c0_138 = arith.constant 0 : index
      %c0_139 = arith.constant 0 : index
      %c8_140 = arith.constant 8 : index
      %189 = vector.load %arg6[%c0_138, %c0_139, %c8_140] : memref<1x8x32xbf16, #tpu.memory_space<vmem>>, vector<1x8x8xbf16>
      %190 = vector.shape_cast %189 : vector<1x8x8xbf16> to vector<8x8xbf16>
      %191 = vector.shape_cast %188 : vector<8x8xbf16> to vector<1x8x8xbf16>
      tpu.vector_store %arg6[%c0_138, %c0_139, %c8_140], %191 {strides = array<i32>} : memref<1x8x32xbf16, #tpu.memory_space<vmem>>, vector<1x8x8xbf16>,
      %c2_141 = arith.constant 2 : index
      %c0_142 = arith.constant 0 : index
      %c0_143 = arith.constant 0 : index
      %192 = vector.load %arg8[%c2_141, %c0_142, %c0_143] : memref<4x8x1xf32, #tpu.memory_space<vmem>>, vector<1x8x1xf32>
      %193 = vector.shape_cast %192 : vector<1x8x1xf32> to vector<8x1xf32>
      %194 = tpu.reciprocal %193 {approx = true} : vector<8x1xf32> -> vector<8x1xf32>
      %c2_144 = arith.constant 2 : index
      %c0_145 = arith.constant 0 : index
      %c0_146 = arith.constant 0 : index
      %195 = vector.load %arg9[%c2_144, %c0_145, %c0_146] : memref<4x8x8xf32, #tpu.memory_space<vmem>>, vector<1x8x8xf32>
      %196 = vector.shape_cast %195 : vector<1x8x8xf32> to vector<8x8xf32>
      %197 = vector.broadcast %194 : vector<8x1xf32> to vector<8x8xf32>
      %198 = arith.mulf %196, %197 : vector<8x8xf32>
      %199 = arith.truncf %198 : vector<8x8xf32> to vector<8x8xbf16>
      %c0_147 = arith.constant 0 : index
      %c0_148 = arith.constant 0 : index
      %c16_149 = arith.constant 16 : index
      %200 = vector.load %arg6[%c0_147, %c0_148, %c16_149] : memref<1x8x32xbf16, #tpu.memory_space<vmem>>, vector<1x8x8xbf16>
      %201 = vector.shape_cast %200 : vector<1x8x8xbf16> to vector<8x8xbf16>
      %202 = vector.shape_cast %199 : vector<8x8xbf16> to vector<1x8x8xbf16>
      tpu.vector_store %arg6[%c0_147, %c0_148, %c16_149], %202 {strides = array<i32>} : memref<1x8x32xbf16, #tpu.memory_space<vmem>>, vector<1x8x8xbf16>,
      %c3_150 = arith.constant 3 : index
      %c0_151 = arith.constant 0 : index
      %c0_152 = arith.constant 0 : index
      %203 = vector.load %arg8[%c3_150, %c0_151, %c0_152] : memref<4x8x1xf32, #tpu.memory_space<vmem>>, vector<1x8x1xf32>
      %204 = vector.shape_cast %203 : vector<1x8x1xf32> to vector<8x1xf32>
      %205 = tpu.reciprocal %204 {approx = true} : vector<8x1xf32> -> vector<8x1xf32>
      %c3_153 = arith.constant 3 : index
      %c0_154 = arith.constant 0 : index
      %c0_155 = arith.constant 0 : index
      %206 = vector.load %arg9[%c3_153, %c0_154, %c0_155] : memref<4x8x8xf32, #tpu.memory_space<vmem>>, vector<1x8x8xf32>
      %207 = vector.shape_cast %206 : vector<1x8x8xf32> to vector<8x8xf32>
      %208 = vector.broadcast %205 : vector<8x1xf32> to vector<8x8xf32>
      %209 = arith.mulf %207, %208 : vector<8x8xf32>
      %210 = arith.truncf %209 : vector<8x8xf32> to vector<8x8xbf16>
      %c0_156 = arith.constant 0 : index
      %c0_157 = arith.constant 0 : index
      %c24_158 = arith.constant 24 : index
      %211 = vector.load %arg6[%c0_156, %c0_157, %c24_158] : memref<1x8x32xbf16, #tpu.memory_space<vmem>>, vector<1x8x8xbf16>
      %212 = vector.shape_cast %211 : vector<1x8x8xbf16> to vector<8x8xbf16>
      %213 = vector.shape_cast %210 : vector<8x8xbf16> to vector<1x8x8xbf16>
      tpu.vector_store %arg6[%c0_156, %c0_157, %c24_158], %213 {strides = array<i32>} : memref<1x8x32xbf16, #tpu.memory_space<vmem>>, vector<1x8x8xbf16>,
    } else {
    }
    return
  }
  func.func @transform_0(%arg0: i32, %arg1: i32, %arg2: i32) -> (i32, i32, i32) {
    %c0_i32 = arith.constant 0 : i32
    %c0_i32_0 = arith.constant 0 : i32
    return %arg0, %arg1, %c0_i32 : i32, i32, i32
  }
  func.func @transform_1(%arg0: i32, %arg1: i32, %arg2: i32) -> (i32, i32, i32) {
    %c0_i32 = arith.constant 0 : i32
    %c0_i32_0 = arith.constant 0 : i32
    return %arg0, %arg2, %c0_i32 : i32, i32, i32
  }
  func.func @transform_2(%arg0: i32, %arg1: i32, %arg2: i32) -> (i32, i32, i32) {
    %c0_i32 = arith.constant 0 : i32
    %c0_i32_0 = arith.constant 0 : i32
    return %arg0, %arg2, %c0_i32 : i32, i32, i32
  }
  func.func @transform_3(%arg0: i32, %arg1: i32, %arg2: i32) -> (i32, i32, i32) {
    %c0_i32 = arith.constant 0 : i32
    %c0_i32_0 = arith.constant 0 : i32
    return %arg0, %arg1, %c0_i32 : i32, i32, i32
  }
}

module attributes {stable_mosaic.version = 11 : i64} {
  func.func @qkv_proj_kernel(%arg0: i32, %arg1: memref<16x32xf32, #tpu.memory_space<vmem>>, %arg2: memref<32x96xbf16, #tpu.memory_space<vmem>>, %arg3: memref<1x96xf32, #tpu.memory_space<vmem>>, %arg4: memref<16x32xbf16, #tpu.memory_space<vmem>>, %arg5: memref<16x32xbf16, #tpu.memory_space<vmem>>, %arg6: memref<16x32xbf16, #tpu.memory_space<vmem>>) attributes {dimension_semantics = [#tpu.dimension_semantics<parallel>], iteration_bounds = array<i64: 1>, scalar_prefetch = 0 : i64, scratch_operands = 0 : i64, tpu.core_type = #tpu.core_type<tc>, window_params = [{transform_indices = @transform_0, window_bounds = array<i64: 16, 32>}, {pipeline_mode = #tpu.pipeline_mode<synchronous>, transform_indices = @transform_1, window_bounds = array<i64: 32, 96>}, {pipeline_mode = #tpu.pipeline_mode<synchronous>, transform_indices = @transform_2, window_bounds = array<i64: 1, 96>}, {transform_indices = @transform_3, window_bounds = array<i64: 16, 32>}, {transform_indices = @transform_4, window_bounds = array<i64: 16, 32>}, {transform_indices = @transform_5, window_bounds = array<i64: 16, 32>}]} {
    %c0 = arith.constant 0 : index
    %c0_0 = arith.constant 0 : index
    %0 = vector.load %arg1[%c0, %c0_0] : memref<16x32xf32, #tpu.memory_space<vmem>>, vector<16x32xf32>
    %1 = arith.truncf %0 : vector<16x32xf32> to vector<16x32xbf16>
    %c0_1 = arith.constant 0 : index
    %c0_2 = arith.constant 0 : index
    %2 = vector.load %arg2[%c0_1, %c0_2] : memref<32x96xbf16, #tpu.memory_space<vmem>>, vector<32x96xbf16>
    %cst = arith.constant dense<0.000000e+00> : vector<16x96xf32>
    %3 = tpu.matmul %1, %2, %cst {dimension_numbers = #tpu.dot_dimension_numbers<[1], [0], [0], [1], [0, 0, 1, 1], [], []>} : vector<16x32xbf16>, vector<32x96xbf16>, vector<16x96xf32> -> vector<16x96xf32>
    %c0_3 = arith.constant 0 : index
    %c0_4 = arith.constant 0 : index
    %4 = vector.load %arg3[%c0_3, %c0_4] : memref<1x96xf32, #tpu.memory_space<vmem>>, vector<1x96xf32>
    %5 = vector.broadcast %4 : vector<1x96xf32> to vector<16x96xf32>
    %6 = arith.addf %3, %5 : vector<16x96xf32>
    %7 = vector.extract_strided_slice %6 {offsets = [0, 0], sizes = [16, 32], strides = [1, 1]} : vector<16x96xf32> to vector<16x32xf32>
    %8 = arith.truncf %7 : vector<16x32xf32> to vector<16x32xbf16>
    %c0_5 = arith.constant 0 : index
    %c0_6 = arith.constant 0 : index
    %9 = vector.load %arg4[%c0_5, %c0_6] : memref<16x32xbf16, #tpu.memory_space<vmem>>, vector<16x32xbf16>
    tpu.vector_store %arg4[%c0_5, %c0_6], %8 {strides = array<i32>} : memref<16x32xbf16, #tpu.memory_space<vmem>>, vector<16x32xbf16>,
    %10 = vector.extract_strided_slice %6 {offsets = [0, 32], sizes = [16, 32], strides = [1, 1]} : vector<16x96xf32> to vector<16x32xf32>
    %11 = arith.truncf %10 : vector<16x32xf32> to vector<16x32xbf16>
    %c0_7 = arith.constant 0 : index
    %c0_8 = arith.constant 0 : index
    %12 = vector.load %arg5[%c0_7, %c0_8] : memref<16x32xbf16, #tpu.memory_space<vmem>>, vector<16x32xbf16>
    tpu.vector_store %arg5[%c0_7, %c0_8], %11 {strides = array<i32>} : memref<16x32xbf16, #tpu.memory_space<vmem>>, vector<16x32xbf16>,
    %13 = vector.extract_strided_slice %6 {offsets = [0, 64], sizes = [16, 32], strides = [1, 1]} : vector<16x96xf32> to vector<16x32xf32>
    %14 = arith.truncf %13 : vector<16x32xf32> to vector<16x32xbf16>
    %c0_9 = arith.constant 0 : index
    %c0_10 = arith.constant 0 : index
    %15 = vector.load %arg6[%c0_9, %c0_10] : memref<16x32xbf16, #tpu.memory_space<vmem>>, vector<16x32xbf16>
    tpu.vector_store %arg6[%c0_9, %c0_10], %14 {strides = array<i32>} : memref<16x32xbf16, #tpu.memory_space<vmem>>, vector<16x32xbf16>,
    return
  }
  func.func @transform_0(%arg0: i32) -> (i32, i32) {
    %c0_i32 = arith.constant 0 : i32
    %c0_i32_0 = arith.constant 0 : i32
    return %arg0, %c0_i32 : i32, i32
  }
  func.func @transform_1(%arg0: i32) -> (i32, i32) {
    %c0_i32 = arith.constant 0 : i32
    %c0_i32_0 = arith.constant 0 : i32
    %c0_i32_1 = arith.constant 0 : i32
    return %c0_i32, %c0_i32_0 : i32, i32
  }
  func.func @transform_2(%arg0: i32) -> (i32, i32) {
    %c0_i32 = arith.constant 0 : i32
    %c0_i32_0 = arith.constant 0 : i32
    %c0_i32_1 = arith.constant 0 : i32
    return %c0_i32, %c0_i32_0 : i32, i32
  }
  func.func @transform_3(%arg0: i32) -> (i32, i32) {
    %c0_i32 = arith.constant 0 : i32
    %c0_i32_0 = arith.constant 0 : i32
    return %arg0, %c0_i32 : i32, i32
  }
  func.func @transform_4(%arg0: i32) -> (i32, i32) {
    %c0_i32 = arith.constant 0 : i32
    %c0_i32_0 = arith.constant 0 : i32
    return %arg0, %c0_i32 : i32, i32
  }
  func.func @transform_5(%arg0: i32) -> (i32, i32) {
    %c0_i32 = arith.constant 0 : i32
    %c0_i32_0 = arith.constant 0 : i32
    return %arg0, %c0_i32 : i32, i32
  }
}

module attributes {stable_mosaic.version = 11 : i64} {
  func.func @ffn_res_ln_kernel(%arg0: i32, %arg1: memref<16x32xf32, #tpu.memory_space<vmem>>, %arg2: memref<32x128xbf16, #tpu.memory_space<vmem>>, %arg3: memref<1x128xf32, #tpu.memory_space<vmem>>, %arg4: memref<128x32xbf16, #tpu.memory_space<vmem>>, %arg5: memref<1x32xf32, #tpu.memory_space<vmem>>, %arg6: memref<1x32xf32, #tpu.memory_space<vmem>>, %arg7: memref<1x32xf32, #tpu.memory_space<vmem>>, %arg8: memref<16x32xf32, #tpu.memory_space<vmem>>) attributes {dimension_semantics = [#tpu.dimension_semantics<parallel>], iteration_bounds = array<i64: 1>, scalar_prefetch = 0 : i64, scratch_operands = 0 : i64, tpu.core_type = #tpu.core_type<tc>, window_params = [{transform_indices = @transform_0, window_bounds = array<i64: 16, 32>}, {pipeline_mode = #tpu.pipeline_mode<synchronous>, transform_indices = @transform_1, window_bounds = array<i64: 32, 128>}, {pipeline_mode = #tpu.pipeline_mode<synchronous>, transform_indices = @transform_2, window_bounds = array<i64: 1, 128>}, {pipeline_mode = #tpu.pipeline_mode<synchronous>, transform_indices = @transform_3, window_bounds = array<i64: 128, 32>}, {pipeline_mode = #tpu.pipeline_mode<synchronous>, transform_indices = @transform_4, window_bounds = array<i64: 1, 32>}, {pipeline_mode = #tpu.pipeline_mode<synchronous>, transform_indices = @transform_5, window_bounds = array<i64: 1, 32>}, {pipeline_mode = #tpu.pipeline_mode<synchronous>, transform_indices = @transform_6, window_bounds = array<i64: 1, 32>}, {transform_indices = @transform_7, window_bounds = array<i64: 16, 32>}]} {
    %c0 = arith.constant 0 : index
    %c0_0 = arith.constant 0 : index
    %0 = vector.load %arg1[%c0, %c0_0] : memref<16x32xf32, #tpu.memory_space<vmem>>, vector<16x32xf32>
    %1 = arith.truncf %0 : vector<16x32xf32> to vector<16x32xbf16>
    %c0_1 = arith.constant 0 : index
    %c0_2 = arith.constant 0 : index
    %2 = vector.load %arg2[%c0_1, %c0_2] : memref<32x128xbf16, #tpu.memory_space<vmem>>, vector<32x128xbf16>
    %cst = arith.constant dense<0.000000e+00> : vector<16x128xf32>
    %3 = tpu.matmul %1, %2, %cst {dimension_numbers = #tpu.dot_dimension_numbers<[1], [0], [0], [1], [0, 0, 1, 1], [], []>} : vector<16x32xbf16>, vector<32x128xbf16>, vector<16x128xf32> -> vector<16x128xf32>
    %c0_3 = arith.constant 0 : index
    %c0_4 = arith.constant 0 : index
    %4 = vector.load %arg3[%c0_3, %c0_4] : memref<1x128xf32, #tpu.memory_space<vmem>>, vector<1x128xf32>
    %5 = vector.broadcast %4 : vector<1x128xf32> to vector<16x128xf32>
    %6 = arith.addf %3, %5 : vector<16x128xf32>
    %cst_5 = arith.constant 0.000000e+00 : f32
    %7 = vector.broadcast %cst_5 : f32 to vector<16x128xf32>
    %8 = arith.maximumf %6, %7 : vector<16x128xf32>
    %9 = arith.truncf %8 : vector<16x128xf32> to vector<16x128xbf16>
    %c0_6 = arith.constant 0 : index
    %c0_7 = arith.constant 0 : index
    %10 = vector.load %arg4[%c0_6, %c0_7] : memref<128x32xbf16, #tpu.memory_space<vmem>>, vector<128x32xbf16>
    %cst_8 = arith.constant dense<0.000000e+00> : vector<16x32xf32>
    %11 = tpu.matmul %9, %10, %cst_8 {dimension_numbers = #tpu.dot_dimension_numbers<[1], [0], [0], [1], [0, 0, 1, 1], [], []>} : vector<16x128xbf16>, vector<128x32xbf16>, vector<16x32xf32> -> vector<16x32xf32>
    %c0_9 = arith.constant 0 : index
    %c0_10 = arith.constant 0 : index
    %12 = vector.load %arg5[%c0_9, %c0_10] : memref<1x32xf32, #tpu.memory_space<vmem>>, vector<1x32xf32>
    %13 = vector.broadcast %12 : vector<1x32xf32> to vector<16x32xf32>
    %14 = arith.addf %11, %13 : vector<16x32xf32>
    %15 = arith.addf %14, %0 : vector<16x32xf32>
    %cst_11 = arith.constant dense<0.000000e+00> : vector<16xf32>
    %16 = vector.multi_reduction <add>, %15, %cst_11 [1] : vector<16x32xf32> to vector<16xf32>
    %17 = vector.shape_cast %16 : vector<16xf32> to vector<16x1xf32>
    %cst_12 = arith.constant 3.200000e+01 : f32
    %18 = vector.broadcast %cst_12 : f32 to vector<16x1xf32>
    %19 = arith.divf %17, %18 : vector<16x1xf32>
    %20 = vector.broadcast %19 : vector<16x1xf32> to vector<16x32xf32>
    %21 = arith.subf %15, %20 : vector<16x32xf32>
    %22 = arith.mulf %21, %21 : vector<16x32xf32>
    %cst_13 = arith.constant dense<0.000000e+00> : vector<16xf32>
    %23 = vector.multi_reduction <add>, %22, %cst_13 [1] : vector<16x32xf32> to vector<16xf32>
    %24 = vector.shape_cast %23 : vector<16xf32> to vector<16x1xf32>
    %cst_14 = arith.constant 3.200000e+01 : f32
    %25 = vector.broadcast %cst_14 : f32 to vector<16x1xf32>
    %26 = arith.divf %24, %25 : vector<16x1xf32>
    %cst_15 = arith.constant 9.99999974E-6 : f32
    %27 = vector.broadcast %cst_15 : f32 to vector<16x1xf32>
    %28 = arith.addf %26, %27 : vector<16x1xf32>
    %29 = math.rsqrt %28 : vector<16x1xf32>
    %30 = vector.broadcast %29 : vector<16x1xf32> to vector<16x32xf32>
    %31 = arith.mulf %21, %30 : vector<16x32xf32>
    %c0_16 = arith.constant 0 : index
    %c0_17 = arith.constant 0 : index
    %32 = vector.load %arg6[%c0_16, %c0_17] : memref<1x32xf32, #tpu.memory_space<vmem>>, vector<1x32xf32>
    %33 = vector.broadcast %32 : vector<1x32xf32> to vector<16x32xf32>
    %34 = arith.mulf %31, %33 : vector<16x32xf32>
    %c0_18 = arith.constant 0 : index
    %c0_19 = arith.constant 0 : index
    %35 = vector.load %arg7[%c0_18, %c0_19] : memref<1x32xf32, #tpu.memory_space<vmem>>, vector<1x32xf32>
    %36 = vector.broadcast %35 : vector<1x32xf32> to vector<16x32xf32>
    %37 = arith.addf %34, %36 : vector<16x32xf32>
    %c0_20 = arith.constant 0 : index
    %c0_21 = arith.constant 0 : index
    %38 = vector.load %arg8[%c0_20, %c0_21] : memref<16x32xf32, #tpu.memory_space<vmem>>, vector<16x32xf32>
    tpu.vector_store %arg8[%c0_20, %c0_21], %37 {strides = array<i32>} : memref<16x32xf32, #tpu.memory_space<vmem>>, vector<16x32xf32>,
    return
  }
  func.func @transform_0(%arg0: i32) -> (i32, i32) {
    %c0_i32 = arith.constant 0 : i32
    %c0_i32_0 = arith.constant 0 : i32
    return %arg0, %c0_i32 : i32, i32
  }
  func.func @transform_1(%arg0: i32) -> (i32, i32) {
    %c0_i32 = arith.constant 0 : i32
    %c0_i32_0 = arith.constant 0 : i32
    %c0_i32_1 = arith.constant 0 : i32
    return %c0_i32, %c0_i32_0 : i32, i32
  }
  func.func @transform_2(%arg0: i32) -> (i32, i32) {
    %c0_i32 = arith.constant 0 : i32
    %c0_i32_0 = arith.constant 0 : i32
    %c0_i32_1 = arith.constant 0 : i32
    return %c0_i32, %c0_i32_0 : i32, i32
  }
  func.func @transform_3(%arg0: i32) -> (i32, i32) {
    %c0_i32 = arith.constant 0 : i32
    %c0_i32_0 = arith.constant 0 : i32
    %c0_i32_1 = arith.constant 0 : i32
    return %c0_i32, %c0_i32_0 : i32, i32
  }
  func.func @transform_4(%arg0: i32) -> (i32, i32) {
    %c0_i32 = arith.constant 0 : i32
    %c0_i32_0 = arith.constant 0 : i32
    %c0_i32_1 = arith.constant 0 : i32
    return %c0_i32, %c0_i32_0 : i32, i32
  }
  func.func @transform_5(%arg0: i32) -> (i32, i32) {
    %c0_i32 = arith.constant 0 : i32
    %c0_i32_0 = arith.constant 0 : i32
    %c0_i32_1 = arith.constant 0 : i32
    return %c0_i32, %c0_i32_0 : i32, i32
  }
  func.func @transform_6(%arg0: i32) -> (i32, i32) {
    %c0_i32 = arith.constant 0 : i32
    %c0_i32_0 = arith.constant 0 : i32
    %c0_i32_1 = arith.constant 0 : i32
    return %c0_i32, %c0_i32_0 : i32, i32
  }
  func.func @transform_7(%arg0: i32) -> (i32, i32) {
    %c0_i32 = arith.constant 0 : i32
    %c0_i32_0 = arith.constant 0 : i32
    return %arg0, %c0_i32 : i32, i32
  }
}

module attributes {stable_mosaic.version = 11 : i64} {
  func.func @pool_kernel(%arg0: i32, %arg1: memref<1x8x32xf32, #tpu.memory_space<vmem>>, %arg2: memref<1x1x32xf32, #tpu.memory_space<vmem>>) attributes {dimension_semantics = [#tpu.dimension_semantics<parallel>], iteration_bounds = array<i64: 2>, scalar_prefetch = 0 : i64, scratch_operands = 0 : i64, tpu.core_type = #tpu.core_type<tc>, window_params = [{transform_indices = @transform_0, window_bounds = array<i64: 1, 8, 32>}, {transform_indices = @transform_1, window_bounds = array<i64: 1, 1, 32>}]} {
    %c0 = arith.constant 0 : index
    %c0_0 = arith.constant 0 : index
    %c0_1 = arith.constant 0 : index
    %0 = vector.load %arg1[%c0, %c0_0, %c0_1] : memref<1x8x32xf32, #tpu.memory_space<vmem>>, vector<1x8x32xf32>
    %1 = vector.shape_cast %0 : vector<1x8x32xf32> to vector<8x32xf32>
    %cst = arith.constant dense<0.000000e+00> : vector<32xf32>
    %2 = vector.multi_reduction <add>, %1, %cst [0] : vector<8x32xf32> to vector<32xf32>
    %3 = vector.shape_cast %2 : vector<32xf32> to vector<1x32xf32>
    %cst_2 = arith.constant 8.000000e+00 : f32
    %4 = vector.broadcast %cst_2 : f32 to vector<1x32xf32>
    %5 = arith.divf %3, %4 : vector<1x32xf32>
    %c0_3 = arith.constant 0 : index
    %c0_4 = arith.constant 0 : index
    %c0_5 = arith.constant 0 : index
    %6 = vector.load %arg2[%c0_3, %c0_4, %c0_5] : memref<1x1x32xf32, #tpu.memory_space<vmem>>, vector<1x1x32xf32>
    %7 = vector.shape_cast %6 : vector<1x1x32xf32> to vector<1x32xf32>
    %8 = vector.shape_cast %5 : vector<1x32xf32> to vector<1x1x32xf32>
    tpu.vector_store %arg2[%c0_3, %c0_4, %c0_5], %8 {strides = array<i32>} : memref<1x1x32xf32, #tpu.memory_space<vmem>>, vector<1x1x32xf32>,
    return
  }
  func.func @transform_0(%arg0: i32) -> (i32, i32, i32) {
    %c0_i32 = arith.constant 0 : i32
    %c0_i32_0 = arith.constant 0 : i32
    %c0_i32_1 = arith.constant 0 : i32
    return %arg0, %c0_i32, %c0_i32_0 : i32, i32, i32
  }
  func.func @transform_1(%arg0: i32) -> (i32, i32, i32) {
    %c0_i32 = arith.constant 0 : i32
    %c0_i32_0 = arith.constant 0 : i32
    %c0_i32_1 = arith.constant 0 : i32
    return %arg0, %c0_i32, %c0_i32_0 : i32, i32, i32
  }
}

module attributes {stable_mosaic.version = 11 : i64} {
  func.func @head_mlp_kernel(%arg0: i32, %arg1: memref<2x32xf32, #tpu.memory_space<vmem>>, %arg2: memref<32x16xbf16, #tpu.memory_space<vmem>>, %arg3: memref<1x16xf32, #tpu.memory_space<vmem>>, %arg4: memref<16x8xbf16, #tpu.memory_space<vmem>>, %arg5: memref<1x8xf32, #tpu.memory_space<vmem>>, %arg6: memref<2x8xf32, #tpu.memory_space<vmem>>) attributes {dimension_semantics = [#tpu.dimension_semantics<arbitrary>], iteration_bounds = array<i64: 1>, scalar_prefetch = 0 : i64, scratch_operands = 0 : i64, tpu.core_type = #tpu.core_type<tc>, window_params = [{pipeline_mode = #tpu.pipeline_mode<synchronous>, transform_indices = @transform_0, window_bounds = array<i64: 2, 32>}, {pipeline_mode = #tpu.pipeline_mode<synchronous>, transform_indices = @transform_1, window_bounds = array<i64: 32, 16>}, {pipeline_mode = #tpu.pipeline_mode<synchronous>, transform_indices = @transform_2, window_bounds = array<i64: 1, 16>}, {pipeline_mode = #tpu.pipeline_mode<synchronous>, transform_indices = @transform_3, window_bounds = array<i64: 16, 8>}, {pipeline_mode = #tpu.pipeline_mode<synchronous>, transform_indices = @transform_4, window_bounds = array<i64: 1, 8>}, {pipeline_mode = #tpu.pipeline_mode<synchronous>, transform_indices = @transform_5, window_bounds = array<i64: 2, 8>}]} {
    %c0 = arith.constant 0 : index
    %c0_0 = arith.constant 0 : index
    %0 = vector.load %arg1[%c0, %c0_0] : memref<2x32xf32, #tpu.memory_space<vmem>>, vector<2x32xf32>
    %1 = arith.truncf %0 : vector<2x32xf32> to vector<2x32xbf16>
    %c0_1 = arith.constant 0 : index
    %c0_2 = arith.constant 0 : index
    %2 = vector.load %arg2[%c0_1, %c0_2] : memref<32x16xbf16, #tpu.memory_space<vmem>>, vector<32x16xbf16>
    %cst = arith.constant dense<0.000000e+00> : vector<2x16xf32>
    %3 = tpu.matmul %1, %2, %cst {dimension_numbers = #tpu.dot_dimension_numbers<[1], [0], [0], [1], [0, 0, 1, 1], [], []>} : vector<2x32xbf16>, vector<32x16xbf16>, vector<2x16xf32> -> vector<2x16xf32>
    %c0_3 = arith.constant 0 : index
    %c0_4 = arith.constant 0 : index
    %4 = vector.load %arg3[%c0_3, %c0_4] : memref<1x16xf32, #tpu.memory_space<vmem>>, vector<1x16xf32>
    %5 = vector.broadcast %4 : vector<1x16xf32> to vector<2x16xf32>
    %6 = arith.addf %3, %5 : vector<2x16xf32>
    %cst_5 = arith.constant 0.000000e+00 : f32
    %7 = vector.broadcast %cst_5 : f32 to vector<2x16xf32>
    %8 = arith.maximumf %6, %7 : vector<2x16xf32>
    %9 = arith.truncf %8 : vector<2x16xf32> to vector<2x16xbf16>
    %c0_6 = arith.constant 0 : index
    %c0_7 = arith.constant 0 : index
    %10 = vector.load %arg4[%c0_6, %c0_7] : memref<16x8xbf16, #tpu.memory_space<vmem>>, vector<16x8xbf16>
    %cst_8 = arith.constant dense<0.000000e+00> : vector<2x8xf32>
    %11 = tpu.matmul %9, %10, %cst_8 {dimension_numbers = #tpu.dot_dimension_numbers<[1], [0], [0], [1], [0, 0, 1, 1], [], []>} : vector<2x16xbf16>, vector<16x8xbf16>, vector<2x8xf32> -> vector<2x8xf32>
    %c0_9 = arith.constant 0 : index
    %c0_10 = arith.constant 0 : index
    %12 = vector.load %arg5[%c0_9, %c0_10] : memref<1x8xf32, #tpu.memory_space<vmem>>, vector<1x8xf32>
    %13 = vector.broadcast %12 : vector<1x8xf32> to vector<2x8xf32>
    %14 = arith.addf %11, %13 : vector<2x8xf32>
    %c0_11 = arith.constant 0 : index
    %c0_12 = arith.constant 0 : index
    %15 = vector.load %arg6[%c0_11, %c0_12] : memref<2x8xf32, #tpu.memory_space<vmem>>, vector<2x8xf32>
    tpu.vector_store %arg6[%c0_11, %c0_12], %14 {strides = array<i32>} : memref<2x8xf32, #tpu.memory_space<vmem>>, vector<2x8xf32>,
    return
  }
  func.func @transform_0(%arg0: i32) -> (i32, i32) {
    %c0_i32 = arith.constant 0 : i32
    %c0_i32_0 = arith.constant 0 : i32
    %c0_i32_1 = arith.constant 0 : i32
    return %c0_i32, %c0_i32_0 : i32, i32
  }
  func.func @transform_1(%arg0: i32) -> (i32, i32) {
    %c0_i32 = arith.constant 0 : i32
    %c0_i32_0 = arith.constant 0 : i32
    %c0_i32_1 = arith.constant 0 : i32
    return %c0_i32, %c0_i32_0 : i32, i32
  }
  func.func @transform_2(%arg0: i32) -> (i32, i32) {
    %c0_i32 = arith.constant 0 : i32
    %c0_i32_0 = arith.constant 0 : i32
    %c0_i32_1 = arith.constant 0 : i32
    return %c0_i32, %c0_i32_0 : i32, i32
  }
  func.func @transform_3(%arg0: i32) -> (i32, i32) {
    %c0_i32 = arith.constant 0 : i32
    %c0_i32_0 = arith.constant 0 : i32
    %c0_i32_1 = arith.constant 0 : i32
    return %c0_i32, %c0_i32_0 : i32, i32
  }
  func.func @transform_4(%arg0: i32) -> (i32, i32) {
    %c0_i32 = arith.constant 0 : i32
    %c0_i32_0 = arith.constant 0 : i32
    %c0_i32_1 = arith.constant 0 : i32
    return %c0_i32, %c0_i32_0 : i32, i32
  }
  func.func @transform_5(%arg0: i32) -> (i32, i32) {
    %c0_i32 = arith.constant 0 : i32
    %c0_i32_0 = arith.constant 0 : i32
    %c0_i32_1 = arith.constant 0 : i32
    return %c0_i32, %c0_i32_0 : i32, i32
  }
}

</mosaic_0001>

<llo_original>
// kernel: wavelet_transformer_forward.11
$region0: #{wavelet_transformer_forward.11}
  #allocation0 [shape = 'u32[]', space=smem, size = 0x4, offset = 0x4, fixed_abs, tag = 'smem constant byte address 0x4 - core index']
  #allocation1 [shape = 'u32[144,128]{1,0:T(1,128)}', space=vmem, size = 0x12000, scoped, tag = 'internal scratch']
  %s0 = inlined_call_operand.vmem [shape: f32[2,8,36], index: 0, kind: input, shape index: {}]
  %s1 = inlined_call_operand.vmem [shape: bf16[36,32], index: 1, kind: input, shape index: {}]
  %s2 = inlined_call_operand.vmem [shape: f32[1,32], index: 2, kind: input, shape index: {}]
  %s3 = inlined_call_operand.vmem [shape: f32[8,32], index: 3, kind: input, shape index: {}]
  %s4 = inlined_call_operand.vmem [shape: f32[2,8,32], index: 4, kind: output, shape index: {}]
  %s5 = sld [smem:[#allocation0]]
  $region49: #{wavelet_transformer_forward.11} parent=0
    _
  %s7 = ssub.s32 1, %s5
  %s8 = scalar_select 0, %s7, %s5
  loop: start=0, step=1, limit=4
  $region2: #{wavelet_transformer_forward.11} parent=0 // loop_pre_header
    _
  $region3: #{wavelet_transformer_forward.11} parent=0 // loop_header
    %s10 = sphi 0, %s14
    %p11 = scmp.ge.s32.totalorder %s10, 4
    %s17 = sphi 0, %s29
    %s18 = sphi 0, %s25
    %s19 = sphi 0, %s17
    %s20 = sphi 0, %s18
    %s21 = sphi 0, %s19
    %s22 = sphi 0, %s20
    %s34 = sphi 0, %s36
    %s37 = sphi 0, %s34
    %s38 = sphi 0, %s37
    %s54 = sphi 0, %s38
    %s58 = sphi 0, %s58
    %s60 = sphi 0, %s58
    %s61 = sphi 0, %s60
    %s75 = sphi 0, %s61
    %s79 = sphi 0, %s79
    %s81 = sphi 0, %s79
    %s82 = sphi 0, %s81
    %s96 = sphi 0, %s82
    %s102 = sphi 0, %s104
    %s105 = sphi 0, %s102
    %s106 = sphi 0, %s105
    %s122 = sphi 0, %s106
    %s130 = sphi 0, %s132
    %s133 = sphi 0, %s130
    %s134 = sphi 0, %s133
    %s150 = sphi 0, %s134
  $region4: #{wavelet_transformer_forward.11} parent=0 // loop_header_branch
    %13 = sbr.rel (%p11) target = $region8
  $region5: #{wavelet_transformer_forward.11} parent=0 // loop_body
    %s15 = ssub.s32 %s10, 1
    %s16 = ssub.s32 %s10, 2
    %s23 = sadd.s32 1, %s18
    %p24 = scmp.ge.s32.totalorder %s23, 1
    %s25 = scalar_select %p24, 0, %s23
    %s26 = sadd.s32 1, %s17
    %s27 = scalar_select %p24, %s26, %s17
    %p28 = scmp.ge.s32.totalorder %s27, 2
    %s29 = scalar_select %p28, 0, %s27
    %s30 = ssub.s32 %s17, %s29
    %s31 = ssub.s32 %s18, %s25
    %s32 = sor.u32 %s30, %s31
    %p33 = scmp.eq.s32.totalorder %s32, 0
    %s35 = sadd.s32 %s34, 1
    %s36 = scalar_select %p33, %s34, %s35
    %p39 = pneg %p33
    %p40 = scmp.eq.s32.totalorder %s10, 1
    %p41 = por %p39, %p40
    %p42 = scmp.ne.s32.totalorder %s34, %s37
    %p43 = scmp.eq.s32.totalorder %s10, 0
    %p44 = por %p42, %p43
    %p45 = scmp.ne.s32.totalorder %s34, %s37
    %p46 = scmp.eq.s32.totalorder %s15, 1
    %p47 = por %p45, %p46
    %p48 = scmp.ne.s32.totalorder %s37, %s38
    %p49 = scmp.eq.s32.totalorder %s15, 0
    %p50 = por %p48, %p49
    %p51 = scmp.ne.s32.totalorder %s37, %s38
    %p52 = scmp.eq.s32.totalorder %s16, 1
    %p53 = por %p51, %p52
    %p55 = scmp.ne.s32.totalorder %s38, %s54
    %p56 = scmp.eq.s32.totalorder %s16, 0
    %p57 = por %p55, %p56
    %s59 = sadd.s32 %s58, 1
    %p62 = scmp.eq.s32.totalorder %s10, 1
    %p63 = scmp.ne.s32.totalorder %s58, %s60
    %p64 = scmp.eq.s32.totalorder %s10, 0
    %p65 = por %p63, %p64
    %p66 = scmp.ne.s32.totalorder %s58, %s60
    %p67 = scmp.eq.s32.totalorder %s15, 1
    %p68 = por %p66, %p67
    %p69 = scmp.ne.s32.totalorder %s60, %s61
    %p70 = scmp.eq.s32.totalorder %s15, 0
    %p71 = por %p69, %p70
    %p72 = scmp.ne.s32.totalorder %s60, %s61
    %p73 = scmp.eq.s32.totalorder %s16, 1
    %p74 = por %p72, %p73
    %p76 = scmp.ne.s32.totalorder %s61, %s75
    %p77 = scmp.eq.s32.totalorder %s16, 0
    %p78 = por %p76, %p77
    %s80 = sadd.s32 %s79, 1
    %p83 = scmp.eq.s32.totalorder %s10, 1
    %p84 = scmp.ne.s32.totalorder %s79, %s81
    %p85 = scmp.eq.s32.totalorder %s10, 0
    %p86 = por %p84, %p85
    %p87 = scmp.ne.s32.totalorder %s79, %s81
    %p88 = scmp.eq.s32.totalorder %s15, 1
    %p89 = por %p87, %p88
    %p90 = scmp.ne.s32.totalorder %s81, %s82
    %p91 = scmp.eq.s32.totalorder %s15, 0
    %p92 = por %p90, %p91
    %p93 = scmp.ne.s32.totalorder %s81, %s82
    %p94 = scmp.eq.s32.totalorder %s16, 1
    %p95 = por %p93, %p94
    %p97 = scmp.ne.s32.totalorder %s82, %s96
    %p98 = scmp.eq.s32.totalorder %s16, 0
    %p99 = por %p97, %p98
    %s100 = ssub.s32 %s18, %s25
    %p101 = scmp.eq.s32.totalorder %s100, 0
    %s103 = sadd.s32 %s102, 1
    %s104 = scalar_select %p101, %s102, %s103
    %p107 = pneg %p101
    %p108 = scmp.eq.s32.totalorder %s10, 1
    %p109 = por %p107, %p108
    %p110 = scmp.ne.s32.totalorder %s102, %s105
    %p111 = scmp.eq.s32.totalorder %s10, 0
    %p112 = por %p110, %p111
    %p113 = scmp.ne.s32.totalorder %s102, %s105
    %p114 = scmp.eq.s32.totalorder %s15, 1
    %p115 = por %p113, %p114
    %p116 = scmp.ne.s32.totalorder %s105, %s106
    %p117 = scmp.eq.s32.totalorder %s15, 0
    %p118 = por %p116, %p117
    %p119 = scmp.ne.s32.totalorder %s105, %s106
    %p120 = scmp.eq.s32.totalorder %s16, 1
    %p121 = por %p119, %p120
    %p123 = scmp.ne.s32.totalorder %s106, %s122
    %p124 = scmp.eq.s32.totalorder %s16, 0
    %p125 = por %p123, %p124
    %s126 = ssub.s32 %s17, %s29
    %s127 = ssub.s32 %s18, %s25
    %s128 = sor.u32 %s126, %s127
    %p129 = scmp.eq.s32.totalorder %s128, 0
    %s131 = sadd.s32 %s130, 1
    %s132 = scalar_select %p129, %s130, %s131
    %p135 = pneg %p129
    %p136 = scmp.eq.s32.totalorder %s10, 1
    %p137 = por %p135, %p136
    %p138 = scmp.ne.s32.totalorder %s130, %s133
    %p139 = scmp.eq.s32.totalorder %s10, 0
    %p140 = por %p138, %p139
    %p141 = scmp.ne.s32.totalorder %s130, %s133
    %p142 = scmp.eq.s32.totalorder %s15, 1
    %p143 = por %p141, %p142
    %p144 = scmp.ne.s32.totalorder %s133, %s134
    %p145 = scmp.eq.s32.totalorder %s15, 0
    %p146 = por %p144, %p145
    %p147 = scmp.ne.s32.totalorder %s133, %s134
    %p148 = scmp.eq.s32.totalorder %s16, 1
    %p149 = por %p147, %p148
    %p151 = scmp.ne.s32.totalorder %s134, %s150
    %p152 = scmp.eq.s32.totalorder %s16, 0
    %p153 = por %p151, %p152
    %p154 = scmp.le.s32.totalorder 1, %s10
    %p155 = scmp.lt.s32.totalorder %s10, 3
    %p156 = pnand %p154, %p155
    %p157 = pneg %p156
    // Predicated region
    $region9: #{wavelet_transformer_forward.11} parent=5 // pred_check
      _
    $region10: #{wavelet_transformer_forward.11} parent=5 // pred_check_branch
      %159 = sbr.rel (%p156) target = $region12
    $region11: #{wavelet_transformer_forward.11} parent=5 // pred_region
      %s160 = ssub.s32 %s10, 1
      // Predicated region
      $region13: #{wavelet_transformer_forward.11} parent=11 // pred_check
        %p161 = pneg %p71
      $region14: #{wavelet_transformer_forward.11} parent=11 // pred_check_branch
        %163 = sbr.rel (%p161) target = $region16
      $region15: #{wavelet_transformer_forward.11} parent=11 // pred_region
        _
      $region16: #{wavelet_transformer_forward.11} parent=11 // pred_fallthru
        _
      // Predicated region
      $region17: #{wavelet_transformer_forward.11} parent=11 // pred_check
        %p164 = pneg %p92
      $region18: #{wavelet_transformer_forward.11} parent=11 // pred_check_branch
        %166 = sbr.rel (%p164) target = $region20
      $region19: #{wavelet_transformer_forward.11} parent=11 // pred_region
        _
      $region20: #{wavelet_transformer_forward.11} parent=11 // pred_fallthru
        _
      // Predicated region
      $region21: #{wavelet_transformer_forward.11} parent=11 // pred_check
        %p167 = pneg %p118
      $region22: #{wavelet_transformer_forward.11} parent=11 // pred_check_branch
        %169 = sbr.rel (%p167) target = $region24
      $region23: #{wavelet_transformer_forward.11} parent=11 // pred_region
        %p170 = scmp.lt.s32.totalorder %s20, 0
        %s171 = scalar_select %p170, %s20, 0
        %s172 = smul.addr %s171, 8
        %s173 = scalar_lea.vmem %s3, %s172
      $region24: #{wavelet_transformer_forward.11} parent=11 // pred_fallthru
        _
    $region12: #{wavelet_transformer_forward.11} parent=5 // pred_fallthru
      _
    %p174 = scmp.lt.s32.totalorder %s10, 2
    // Predicated region
    $region25: #{wavelet_transformer_forward.11} parent=5 // pred_check
      %p175 = pneg %p174
    $region26: #{wavelet_transformer_forward.11} parent=5 // pred_check_branch
      %177 = sbr.rel (%p175) target = $region28
    $region27: #{wavelet_transformer_forward.11} parent=5 // pred_region
      // Predicated region
      $region29: #{wavelet_transformer_forward.11} parent=27 // pred_check
        %p178 = pneg %p44
      $region30: #{wavelet_transformer_forward.11} parent=27 // pred_check_branch
        %180 = sbr.rel (%p178) target = $region32
      $region31: #{wavelet_transformer_forward.11} parent=27 // pred_region
        %p181 = scmp.lt.s32.totalorder %s17, 1
        %s182 = scalar_select %p181, %s17, 1
        %p183 = scmp.lt.s32.totalorder %s18, 0
        %s184 = scalar_select %p183, %s18, 0
        %s185 = sadd.s32 %s184, %s182
        %s186 = smul.addr %s185, 8
        %s187 = scalar_lea.vmem %s0, %s186
      $region32: #{wavelet_transformer_forward.11} parent=27 // pred_fallthru
        _
    $region28: #{wavelet_transformer_forward.11} parent=5 // pred_fallthru
      _
    %p188 = scmp.le.s32.totalorder 1, %s10
    %p189 = scmp.lt.s32.totalorder %s10, 3
    %p190 = pnand %p188, %p189
    %p191 = pneg %p190
    // Predicated region
    $region33: #{wavelet_transformer_forward.11} parent=5 // pred_check
      _
    $region34: #{wavelet_transformer_forward.11} parent=5 // pred_check_branch
      %193 = sbr.rel (%p190) target = $region36
    $region35: #{wavelet_transformer_forward.11} parent=5 // pred_region
      %s194 = ssub.s32 %s10, 1
      %p195 = scmp.lt.s32.totalorder %s19, 1
      %s196 = scalar_select %p195, %s19, 1
      %p197 = scmp.lt.s32.totalorder %s20, 0
      %s198 = scalar_select %p197, %s20, 0
      %s199 = sadd.s32 %s198, %s196
      %s200 = smul.addr %s199, 8
      %s201 = scalar_lea.vmem %s0, %s200
      %p202 = pneg %p50
      %p203 = pneg %p47
      %p204 = pneg %p71
      %p205 = pneg %p68
      %p206 = pneg %p92
      %p207 = pneg %p89
      %p208 = scmp.lt.s32.totalorder %s20, 0
      %s209 = scalar_select %p208, %s20, 0
      %s210 = smul.addr %s209, 8
      %s211 = scalar_lea.vmem %s3, %s210
      %p212 = pneg %p118
      %p213 = pneg %p115
      %p214 = pneg %p146
      %p215 = pneg %p143
      %p216 = scmp.lt.s32.totalorder %s19, 1
      %s217 = scalar_select %p216, %s19, 1
      %p218 = scmp.lt.s32.totalorder %s20, 0
      %s219 = scalar_select %p218, %s20, 0
      %s220 = sadd.s32 %s219, %s217
      %s221 = smul.addr %s220, 8
      %s222 = scalar_lea.vmem %s4, %s221
      %p223 = scmp.lt.s32.totalorder %s19, 1
      %s224 = scalar_select %p223, %s19, 1
      %p225 = scmp.lt.s32.totalorder %s20, 0
      %s226 = scalar_select %p225, %s20, 0
      %s227 = sadd.s32 %s226, %s224
      %s228 = smul.addr %s227, 8
      %s229 = scalar_lea.vmem %s0, %s228
      %p230 = scmp.lt.s32.totalorder %s20, 0
      %s231 = scalar_select %p230, %s20, 0
      %s232 = smul.addr %s231, 8
      %s233 = scalar_lea.vmem %s3, %s232
      %p234 = scmp.lt.s32.totalorder %s19, 1
      %s235 = scalar_select %p234, %s19, 1
      %p236 = scmp.lt.s32.totalorder %s20, 0
      %s237 = scalar_select %p236, %s20, 0
      %s238 = sadd.s32 %s237, %s235
      %s239 = smul.addr %s238, 8
      %s240 = scalar_lea.vmem %s4, %s239
      %v242 = vld [vmem:[%s229] sm:$0xff]
      %v243 = vpack.c.bf16 %v242, %v242
      %v244 = vld [vmem:[%s1] sm:$0xf]
      %v245 = vld [vmem:[%s1 + $0x4] sm:$0xf]
      %v246 = vld [vmem:[%s1 + $0x8] sm:$0xf]
      %v247 = vld [vmem:[%s1 + $0xc] sm:$0xf]
      %v248 = vld [vmem:[%s1 + $0x10] sm:$0x3]
      %v249 = vld [vmem:[%s2] sm:$0x1]
      %v251 = vlaneseq
      %v252 = vshrl.u32 %v251, 7
      %v253 = vsub.s32 0, %v252
      %v254 = vrot.slane %v249, %v253
      %v261 = vunpack.c.l.b16 %v244
      %v262 = vunpack.c.l.b16 %v245
      %v263 = vunpack.c.l.b16 %v246
      %v264 = vunpack.c.l.b16 %v247
      %v265 = vunpack.c.l.b16 %v248
      %v266 = vpack.c.b16 %v262, %v261
      %v267 = vpack.c.b16 %v264, %v263
      %v268 = vpack.c.b16 %v265, %v265
      %vm271 = vcmask 293888
      %v273 = vsel %vm271, %v243, 0
      %vm275 = vcmask 1041408
      %v277 = vsel %vm275, %v268, 0
      %279 = vmatprep.subr.bf16.mxu0 0
      %280 = vmatpush1.bf16.msra.mxu0 0
      %281 = vmatprep.subr.bf16.mxu0 0
      %282 = vmatpush1.bf16.msra.mxu0 0
      %283 = vmatprep.subr.bf16.mxu0 0
      %284 = vmatpush1.bf16.msra.mxu0 0
      %285 = vmatprep.subr.bf16.mxu0 0
      %286 = vmatpush1.bf16.msra.mxu0 0
      %287 = vmatprep.subr.bf16.mxu0 0
      %288 = vmatpush1.bf16.msra.mxu0 0
      %289 = vmatprep.subr.bf16.mxu0 0
      %290 = vmatpush1.bf16.msra.mxu0 %v277
      %291 = vmatprep.subr.bf16.mxu0 0
      %292 = vmatpush1.bf16.msra.mxu0 %v267
      %293 = vmatprep.subr.bf16.mxu0 0
      %294 = vmatpush1.bf16.msra.mxu0 %v266
      %295 = vmatprep.subr.bf16.mxu0 0
      %296 = vmatpush2.bf16.msra.mxu0 0
      %297 = vmatprep.subr.bf16.mxu0 0
      %298 = vmatpush2.bf16.msra.mxu0 0
      %299 = vmatprep.subr.bf16.mxu0 0
      %300 = vmatpush2.bf16.msra.mxu0 0
      %301 = vmatprep.subr.bf16.mxu0 0
      %302 = vmatpush2.bf16.msra.mxu0 0
      %303 = vmatprep.subr.bf16.mxu0 0
      %304 = vmatpush2.bf16.msra.mxu0 0
      %305 = vmatprep.subr.bf16.mxu0 0
      %306 = vmatpush2.bf16.msra.mxu0 0
      %307 = vmatprep.subr.bf16.mxu0 0
      %308 = vmatpush2.bf16.msra.mxu0 0
      %309 = vmatprep.subr.bf16.mxu0 0
      %310 = vmatpush2.bf16.msra.mxu0 0
      %311 = vmatprep.mubr.bf16.mxu0 0
      %312 = vmatmul.mubr.bf16.gmra.mxu0 %v273
      %v313 = vpop.f32.mrf.mxu0
      %v314 = vadd.f32 %v254, %v313
      %v315 = vpop.f32.mrf.mxu0
      %v316 = vpop.f32.mrf.mxu0
      %v317 = vpop.f32.mrf.mxu0
      %318 = vdwg.mxu0
      %v319 = vld [vmem:[%s233] sm:$0xff]
      %v320 = vadd.f32 %v314, %v319
      %vm321 = vcmask 261120
      %322 = vst.msk [vmem:[%s240] sm:$0xff] %vm321, %v320
      %p323 = scmp.lt.s32.totalorder %s19, 1
      %s324 = scalar_select %p323, %s19, 1
      %p325 = scmp.lt.s32.totalorder %s20, 0
      %s326 = scalar_select %p325, %s20, 0
      %s327 = sadd.s32 %s326, %s324
      %s328 = smul.addr %s327, 8
      %s329 = scalar_lea.vmem %s4, %s328
      // Predicated region
      $region37: #{wavelet_transformer_forward.11} parent=35 // pred_check
        %p330 = pneg %p143
      $region38: #{wavelet_transformer_forward.11} parent=35 // pred_check_branch
        %332 = sbr.rel (%p330) target = $region40
      $region39: #{wavelet_transformer_forward.11} parent=35 // pred_region
        _
      $region40: #{wavelet_transformer_forward.11} parent=35 // pred_fallthru
        _
    $region36: #{wavelet_transformer_forward.11} parent=5 // pred_fallthru
      _
    %p333 = scmp.le.s32.totalorder 2, %s10
    // Predicated region
    $region41: #{wavelet_transformer_forward.11} parent=5 // pred_check
      %p334 = pneg %p333
    $region42: #{wavelet_transformer_forward.11} parent=5 // pred_check_branch
      %336 = sbr.rel (%p334) target = $region44
    $region43: #{wavelet_transformer_forward.11} parent=5 // pred_region
      %s337 = ssub.s32 %s10, 2
      // Predicated region
      $region45: #{wavelet_transformer_forward.11} parent=43 // pred_check
        %p338 = pneg %p149
      $region46: #{wavelet_transformer_forward.11} parent=43 // pred_check_branch
        %340 = sbr.rel (%p338) target = $region48
      $region47: #{wavelet_transformer_forward.11} parent=43 // pred_region
        %p341 = scmp.lt.s32.totalorder %s21, 1
        %s342 = scalar_select %p341, %s21, 1
        %p343 = scmp.lt.s32.totalorder %s22, 0
        %s344 = scalar_select %p343, %s22, 0
        %s345 = sadd.s32 %s344, %s342
        %s346 = smul.addr %s345, 8
        %s347 = scalar_lea.vmem %s4, %s346
      $region48: #{wavelet_transformer_forward.11} parent=43 // pred_fallthru
        _
    $region44: #{wavelet_transformer_forward.11} parent=5 // pred_fallthru
      _
  $region6: #{wavelet_transformer_forward.11} parent=0 // loop_footer
    %s14 = sadd.s32 1, %s10
  $region7: #{wavelet_transformer_forward.11} parent=0 // loop_footer_branch
    %9 = sbr.rel target = $region3
  $region8: #{wavelet_transformer_forward.11} parent=0 // loop_exit
    _

// kernel: wavelet_transformer_forward.14
$region0: #{wavelet_transformer_forward.14}
  #allocation0 [shape = 'u32[]', space=smem, size = 0x4, offset = 0x4, fixed_abs, tag = 'smem constant byte address 0x4 - core index']
  #allocation1 [shape = 'u32[144,128]{1,0:T(1,128)}', space=vmem, size = 0x12000, scoped, tag = 'internal scratch']
  %s0 = inlined_call_operand.vmem [shape: bf16[16,32], index: 0, kind: input, shape index: {}]
  %s1 = inlined_call_operand.vmem [shape: bf16[32,32], index: 1, kind: input, shape index: {}]
  %s2 = inlined_call_operand.vmem [shape: f32[1,32], index: 2, kind: input, shape index: {}]
  %s3 = inlined_call_operand.vmem [shape: f32[16,32], index: 3, kind: input, shape index: {}]
  %s4 = inlined_call_operand.vmem [shape: f32[1,32], index: 4, kind: input, shape index: {}]
  %s5 = inlined_call_operand.vmem [shape: f32[1,32], index: 5, kind: input, shape index: {}]
  %s6 = inlined_call_operand.vmem [shape: f32[16,32], index: 6, kind: output, shape index: {}]
  %s7 = sld [smem:[#allocation0]]
  $region34: #{wavelet_transformer_forward.14} parent=0
    _
  %s9 = ssub.s32 1, %s7
  %s10 = scalar_select 0, %s9, %s7
  // Predicated region
  $region2: #{wavelet_transformer_forward.14} parent=0 // pred_check
    _
  $region3: #{wavelet_transformer_forward.14} parent=0 // pred_check_branch
    %12 = sbr.rel (0) target = $region5
  $region4: #{wavelet_transformer_forward.14} parent=0 // pred_region
    _
  $region5: #{wavelet_transformer_forward.14} parent=0 // pred_fallthru
    _
  // Predicated region
  $region6: #{wavelet_transformer_forward.14} parent=0 // pred_check
    _
  $region7: #{wavelet_transformer_forward.14} parent=0 // pred_check_branch
    %14 = sbr.rel (0) target = $region9
  $region8: #{wavelet_transformer_forward.14} parent=0 // pred_region
    _
  $region9: #{wavelet_transformer_forward.14} parent=0 // pred_fallthru
    _
  // Predicated region
  $region10: #{wavelet_transformer_forward.14} parent=0 // pred_check
    _
  $region11: #{wavelet_transformer_forward.14} parent=0 // pred_check_branch
    %16 = sbr.rel (0) target = $region13
  $region12: #{wavelet_transformer_forward.14} parent=0 // pred_region
    _
  $region13: #{wavelet_transformer_forward.14} parent=0 // pred_fallthru
    _
  // Predicated region
  $region14: #{wavelet_transformer_forward.14} parent=0 // pred_check
    _
  $region15: #{wavelet_transformer_forward.14} parent=0 // pred_check_branch
    %18 = sbr.rel (0) target = $region17
  $region16: #{wavelet_transformer_forward.14} parent=0 // pred_region
    _
  $region17: #{wavelet_transformer_forward.14} parent=0 // pred_fallthru
    _
  // Predicated region
  $region18: #{wavelet_transformer_forward.14} parent=0 // pred_check
    _
  $region19: #{wavelet_transformer_forward.14} parent=0 // pred_check_branch
    %20 = sbr.rel (0) target = $region21
  $region20: #{wavelet_transformer_forward.14} parent=0 // pred_region
    _
  $region21: #{wavelet_transformer_forward.14} parent=0 // pred_fallthru
    _
  // Predicated region
  $region22: #{wavelet_transformer_forward.14} parent=0 // pred_check
    _
  $region23: #{wavelet_transformer_forward.14} parent=0 // pred_check_branch
    %22 = sbr.rel (0) target = $region25
  $region24: #{wavelet_transformer_forward.14} parent=0 // pred_region
    _
  $region25: #{wavelet_transformer_forward.14} parent=0 // pred_fallthru
    _
  %v24 = vld [vmem:[%s0] sm:$0xf]
  %v25 = vld [vmem:[%s0 + $0x4] sm:$0xf]
  %v26 = vld [vmem:[%s1] sm:$0xf]
  %v27 = vld [vmem:[%s1 + $0x4] sm:$0xf]
  %v28 = vld [vmem:[%s1 + $0x8] sm:$0xf]
  %v29 = vld [vmem:[%s1 + $0xc] sm:$0xf]
  %v30 = vld [vmem:[%s2] sm:$0x1]
  %v32 = vlaneseq
  %v33 = vshrl.u32 %v32, 7
  %v34 = vsub.s32 0, %v33
  %v35 = vrot.slane %v30, %v34
  %v39 = vunpack.c.l.b16 %v24
  %v40 = vunpack.c.l.b16 %v25
  %v41 = vpack.c.b16 %v40, %v39
  %v46 = vunpack.c.l.b16 %v26
  %v47 = vunpack.c.l.b16 %v27
  %v48 = vunpack.c.l.b16 %v28
  %v49 = vunpack.c.l.b16 %v29
  %v50 = vpack.c.b16 %v47, %v46
  %v51 = vpack.c.b16 %v49, %v48
  %vm54 = vcmask 261120
  %v56 = vsel %vm54, %v41, 0
  %58 = vmatprep.subr.bf16.mxu0 0
  %59 = vmatpush1.bf16.msra.mxu0 0
  %60 = vmatprep.subr.bf16.mxu0 0
  %61 = vmatpush1.bf16.msra.mxu0 0
  %62 = vmatprep.subr.bf16.mxu0 0
  %63 = vmatpush1.bf16.msra.mxu0 0
  %64 = vmatprep.subr.bf16.mxu0 0
  %65 = vmatpush1.bf16.msra.mxu0 0
  %66 = vmatprep.subr.bf16.mxu0 0
  %67 = vmatpush1.bf16.msra.mxu0 0
  %68 = vmatprep.subr.bf16.mxu0 0
  %69 = vmatpush1.bf16.msra.mxu0 0
  %70 = vmatprep.subr.bf16.mxu0 0
  %71 = vmatpush1.bf16.msra.mxu0 %v51
  %72 = vmatprep.subr.bf16.mxu0 0
  %73 = vmatpush1.bf16.msra.mxu0 %v50
  %74 = vmatprep.subr.bf16.mxu0 0
  %75 = vmatpush2.bf16.msra.mxu0 0
  %76 = vmatprep.subr.bf16.mxu0 0
  %77 = vmatpush2.bf16.msra.mxu0 0
  %78 = vmatprep.subr.bf16.mxu0 0
  %79 = vmatpush2.bf16.msra.mxu0 0
  %80 = vmatprep.subr.bf16.mxu0 0
  %81 = vmatpush2.bf16.msra.mxu0 0
  %82 = vmatprep.subr.bf16.mxu0 0
  %83 = vmatpush2.bf16.msra.mxu0 0
  %84 = vmatprep.subr.bf16.mxu0 0
  %85 = vmatpush2.bf16.msra.mxu0 0
  %86 = vmatprep.subr.bf16.mxu0 0
  %87 = vmatpush2.bf16.msra.mxu0 0
  %88 = vmatprep.subr.bf16.mxu0 0
  %89 = vmatpush2.bf16.msra.mxu0 0
  %90 = vmatprep.mubr.bf16.mxu0 0
  %91 = vmatmul.mubr.bf16.gmra.mxu0 %v56
  %v92 = vpop.f32.mrf.mxu0
  %v93 = vadd.f32 %v35, %v92
  %v94 = vpop.f32.mrf.mxu0
  %v95 = vpop.f32.mrf.mxu0
  %v96 = vadd.f32 %v35, %v95
  %v97 = vpop.f32.mrf.mxu0
  %98 = vdwg.mxu0
  %v99 = vld [vmem:[%s3] sm:$0xff]
  %v100 = vld [vmem:[%s3 + $0x8] sm:$0xff]
  %v101 = vadd.f32 %v93, %v99
  %v102 = vadd.f32 %v96, %v100
  %v103 = vsel %vm54, %v101, 0.0
  %104 = vadd.xlane.f32.xlu0 %v103
  %v105 = vpop.xlane.xlu0 %104
  %v106 = vsel %vm54, %v102, 0.0
  %107 = vadd.xlane.f32.xlu0 %v106
  %v108 = vpop.xlane.xlu0 %107
  %v109 = vrcp.pop 32.0
  %v110 = vmul.f32 %v105, %v109
  %v111 = vmul.f32 %v108, %v109
  %v112 = vsub.f32 %v101, %v110
  %v113 = vsub.f32 %v102, %v111
  %v114 = vmul.f32 %v112, %v112
  %v115 = vmul.f32 %v113, %v113
  %v116 = vsel %vm54, %v114, 0.0
  %117 = vadd.xlane.f32.xlu0 %v116
  %v118 = vpop.xlane.xlu0 %117
  %v119 = vsel %vm54, %v115, 0.0
  %120 = vadd.xlane.f32.xlu0 %v119
  %v121 = vpop.xlane.xlu0 %120
  %v122 = vmul.f32 %v118, %v109
  %v123 = vmul.f32 %v121, %v109
  %v124 = vadd.f32 %v122, 1e-05
  %v125 = vadd.f32 %v123, 1e-05
  %v126 = vrsqrt.pop %v124
  %v127 = vrsqrt.pop %v125
  %v128 = vmul.f32 %v112, %v126
  %v129 = vmul.f32 %v113, %v127
  %v130 = vld [vmem:[%s4] sm:$0x1]
  %v132 = vlaneseq
  %v133 = vshrl.u32 %v132, 7
  %v134 = vsub.s32 0, %v133
  %v135 = vrot.slane %v130, %v134
  %v137 = vmul.f32 %v128, %v135
  %v138 = vmul.f32 %v129, %v135
  %v139 = vld [vmem:[%s5] sm:$0x1]
  %v141 = vlaneseq
  %v142 = vshrl.u32 %v141, 7
  %v143 = vsub.s32 0, %v142
  %v144 = vrot.slane %v139, %v143
  %v146 = vadd.f32 %v137, %v144
  %v147 = vadd.f32 %v138, %v144
  %148 = vst.msk [vmem:[%s6] sm:$0xff] %vm54, %v146
  %149 = vst.msk [vmem:[%s6 + $0x8] sm:$0xff] %vm54, %v147
  // Predicated region
  $region26: #{wavelet_transformer_forward.14} parent=0 // pred_check
    _
  $region27: #{wavelet_transformer_forward.14} parent=0 // pred_check_branch
    %151 = sbr.rel (0) target = $region29
  $region28: #{wavelet_transformer_forward.14} parent=0 // pred_region
    _
  $region29: #{wavelet_transformer_forward.14} parent=0 // pred_fallthru
    _
  // Predicated region
  $region30: #{wavelet_transformer_forward.14} parent=0 // pred_check
    _
  $region31: #{wavelet_transformer_forward.14} parent=0 // pred_check_branch
    %153 = sbr.rel (0) target = $region33
  $region32: #{wavelet_transformer_forward.14} parent=0 // pred_region
    _
  $region33: #{wavelet_transformer_forward.14} parent=0 // pred_fallthru
    _

// kernel: wavelet_transformer_forward.12
$region0: #{wavelet_transformer_forward.12}
  #allocation0 [shape = 'u32[]', space=smem, size = 0x4, offset = 0x4, fixed_abs, tag = 'smem constant byte address 0x4 - core index']
  #allocation1 [shape = 'u32[144,128]{1,0:T(1,128)}', space=vmem, size = 0x12000, scoped, tag = 'internal scratch']
  %s0 = inlined_call_operand.vmem [shape: f32[16,32], index: 0, kind: input, shape index: {}]
  %s1 = inlined_call_operand.vmem [shape: bf16[32,96], index: 1, kind: input, shape index: {}]
  %s2 = inlined_call_operand.vmem [shape: f32[1,96], index: 2, kind: input, shape index: {}]
  %s3 = inlined_call_operand.vmem [shape: bf16[16,32], index: 3, kind: output, shape index: {0}]
  %s4 = inlined_call_operand.vmem [shape: bf16[16,32], index: 4, kind: output, shape index: {1}]
  %s5 = inlined_call_operand.vmem [shape: bf16[16,32], index: 5, kind: output, shape index: {2}]
  %6 = xla_tuple %s3, %s4, %s5
  %s7 = sld [smem:[#allocation0]]
  $region38: #{wavelet_transformer_forward.12} parent=0
    _
  %s9 = ssub.s32 1, %s7
  %s10 = scalar_select 0, %s9, %s7
  // Predicated region
  $region2: #{wavelet_transformer_forward.12} parent=0 // pred_check
    _
  $region3: #{wavelet_transformer_forward.12} parent=0 // pred_check_branch
    %12 = sbr.rel (0) target = $region5
  $region4: #{wavelet_transformer_forward.12} parent=0 // pred_region
    _
  $region5: #{wavelet_transformer_forward.12} parent=0 // pred_fallthru
    _
  // Predicated region
  $region6: #{wavelet_transformer_forward.12} parent=0 // pred_check
    _
  $region7: #{wavelet_transformer_forward.12} parent=0 // pred_check_branch
    %14 = sbr.rel (0) target = $region9
  $region8: #{wavelet_transformer_forward.12} parent=0 // pred_region
    _
  $region9: #{wavelet_transformer_forward.12} parent=0 // pred_fallthru
    _
  // Predicated region
  $region10: #{wavelet_transformer_forward.12} parent=0 // pred_check
    _
  $region11: #{wavelet_transformer_forward.12} parent=0 // pred_check_branch
    %16 = sbr.rel (0) target = $region13
  $region12: #{wavelet_transformer_forward.12} parent=0 // pred_region
    _
  $region13: #{wavelet_transformer_forward.12} parent=0 // pred_fallthru
    _
  %v18 = vld [vmem:[%s0] sm:$0xff]
  %v19 = vld [vmem:[%s0 + $0x8] sm:$0xff]
  %v20 = vpack.c.bf16 %v19, %v18
  %v21 = vld [vmem:[%s1] sm:$0xf]
  %v22 = vld [vmem:[%s1 + $0x4] sm:$0xf]
  %v23 = vld [vmem:[%s1 + $0x8] sm:$0xf]
  %v24 = vld [vmem:[%s1 + $0xc] sm:$0xf]
  %v25 = vld [vmem:[%s2] sm:$0x1]
  %v27 = vlaneseq
  %v28 = vshrl.u32 %v27, 7
  %v29 = vsub.s32 0, %v28
  %v30 = vrot.slane %v25, %v29
  %v36 = vunpack.c.l.b16 %v21
  %v37 = vunpack.c.l.b16 %v22
  %v38 = vunpack.c.l.b16 %v23
  %v39 = vunpack.c.l.b16 %v24
  %v40 = vpack.c.b16 %v37, %v36
  %v41 = vpack.c.b16 %v39, %v38
  %vm44 = vcmask 261120
  %v46 = vsel %vm44, %v20, 0
  %48 = vmatprep.subr.bf16.mxu0 0
  %49 = vmatpush1.bf16.msra.mxu0 0
  %50 = vmatprep.subr.bf16.mxu0 0
  %51 = vmatpush1.bf16.msra.mxu0 0
  %52 = vmatprep.subr.bf16.mxu0 0
  %53 = vmatpush1.bf16.msra.mxu0 0
  %54 = vmatprep.subr.bf16.mxu0 0
  %55 = vmatpush1.bf16.msra.mxu0 0
  %56 = vmatprep.subr.bf16.mxu0 0
  %57 = vmatpush1.bf16.msra.mxu0 0
  %58 = vmatprep.subr.bf16.mxu0 0
  %59 = vmatpush1.bf16.msra.mxu0 0
  %60 = vmatprep.subr.bf16.mxu0 0
  %61 = vmatpush1.bf16.msra.mxu0 %v41
  %62 = vmatprep.subr.bf16.mxu0 0
  %63 = vmatpush1.bf16.msra.mxu0 %v40
  %64 = vmatprep.subr.bf16.mxu0 0
  %65 = vmatpush2.bf16.msra.mxu0 0
  %66 = vmatprep.subr.bf16.mxu0 0
  %67 = vmatpush2.bf16.msra.mxu0 0
  %68 = vmatprep.subr.bf16.mxu0 0
  %69 = vmatpush2.bf16.msra.mxu0 0
  %70 = vmatprep.subr.bf16.mxu0 0
  %71 = vmatpush2.bf16.msra.mxu0 0
  %72 = vmatprep.subr.bf16.mxu0 0
  %73 = vmatpush2.bf16.msra.mxu0 0
  %74 = vmatprep.subr.bf16.mxu0 0
  %75 = vmatpush2.bf16.msra.mxu0 0
  %76 = vmatprep.subr.bf16.mxu0 0
  %77 = vmatpush2.bf16.msra.mxu0 0
  %78 = vmatprep.subr.bf16.mxu0 0
  %79 = vmatpush2.bf16.msra.mxu0 0
  %80 = vmatprep.mubr.bf16.mxu0 0
  %81 = vmatmul.mubr.bf16.gmra.mxu0 %v46
  %v82 = vpop.f32.mrf.mxu0
  %v83 = vadd.f32 %v30, %v82
  %v84 = vpop.f32.mrf.mxu0
  %v85 = vpop.f32.mrf.mxu0
  %v86 = vadd.f32 %v30, %v85
  %v87 = vpop.f32.mrf.mxu0
  %88 = vdwg.mxu0
  %v89 = vpack.c.bf16 %v86, %v83
  %v91 = vunpack.c.l.b16 %v89
  %v92 = vunpack.c.h.b16 %v89
  %v93 = vpack.c.b16 %v91, %v91
  %v94 = vpack.c.b16 %v92, %v92
  %vm97 = vcmask 257024
  %98 = vst.msk [vmem:[%s3] sm:$0xf] %vm97, %v93
  %99 = vst.msk [vmem:[%s3 + $0x4] sm:$0xf] %vm97, %v94
  %100 = vrot.lane.b32.xlu0 %v93, 96
  %v101 = vpop.permute.xlu0 %100
  %102 = vrot.lane.b32.xlu0 %v94, 96
  %v103 = vpop.permute.xlu0 %102
  %106 = vst.msk [vmem:[%s4] sm:$0xf] %vm97, %v101
  %107 = vst.msk [vmem:[%s4 + $0x4] sm:$0xf] %vm97, %v103
  %108 = vrot.lane.b32.xlu0 %v93, 64
  %v109 = vpop.permute.xlu0 %108
  %110 = vrot.lane.b32.xlu0 %v94, 64
  %v111 = vpop.permute.xlu0 %110
  %114 = vst.msk [vmem:[%s5] sm:$0xf] %vm97, %v109
  %115 = vst.msk [vmem:[%s5 + $0x4] sm:$0xf] %vm97, %v111
  // Predicated region
  $region14: #{wavelet_transformer_forward.12} parent=0 // pred_check
    _
  $region15: #{wavelet_transformer_forward.12} parent=0 // pred_check_branch
    %117 = sbr.rel (0) target = $region17
  $region16: #{wavelet_transformer_forward.12} parent=0 // pred_region
    _
  $region17: #{wavelet_transformer_forward.12} parent=0 // pred_fallthru
    _
  // Predicated region
  $region18: #{wavelet_transformer_forward.12} parent=0 // pred_check
    _
  $region19: #{wavelet_transformer_forward.12} parent=0 // pred_check_branch
    %119 = sbr.rel (0) target = $region21
  $region20: #{wavelet_transformer_forward.12} parent=0 // pred_region
    _
  $region21: #{wavelet_transformer_forward.12} parent=0 // pred_fallthru
    _
  // Predicated region
  $region22: #{wavelet_transformer_forward.12} parent=0 // pred_check
    _
  $region23: #{wavelet_transformer_forward.12} parent=0 // pred_check_branch
    %121 = sbr.rel (0) target = $region25
  $region24: #{wavelet_transformer_forward.12} parent=0 // pred_region
    _
  $region25: #{wavelet_transformer_forward.12} parent=0 // pred_fallthru
    _
  // Predicated region
  $region26: #{wavelet_transformer_forward.12} parent=0 // pred_check
    _
  $region27: #{wavelet_transformer_forward.12} parent=0 // pred_check_branch
    %123 = sbr.rel (0) target = $region29
  $region28: #{wavelet_transformer_forward.12} parent=0 // pred_region
    _
  $region29: #{wavelet_transformer_forward.12} parent=0 // pred_fallthru
    _
  // Predicated region
  $region30: #{wavelet_transformer_forward.12} parent=0 // pred_check
    _
  $region31: #{wavelet_transformer_forward.12} parent=0 // pred_check_branch
    %125 = sbr.rel (0) target = $region33
  $region32: #{wavelet_transformer_forward.12} parent=0 // pred_region
    _
  $region33: #{wavelet_transformer_forward.12} parent=0 // pred_fallthru
    _
  // Predicated region
  $region34: #{wavelet_transformer_forward.12} parent=0 // pred_check
    _
  $region35: #{wavelet_transformer_forward.12} parent=0 // pred_check_branch
    %127 = sbr.rel (0) target = $region37
  $region36: #{wavelet_transformer_forward.12} parent=0 // pred_region
    _
  $region37: #{wavelet_transformer_forward.12} parent=0 // pred_fallthru
    _

// kernel: wavelet_transformer_forward.13
$region0: #{wavelet_transformer_forward.13}
  #allocation0 [shape = 'u32[]', space=smem, size = 0x4, offset = 0x4, fixed_abs, tag = 'smem constant byte address 0x4 - core index']
  #allocation1 [shape = 'u32[144,128]{1,0:T(1,128)}', space=vmem, size = 0x12000, scoped, tag = 'internal scratch']
  #allocation2 [shape = 'f32[4,8,1]{2,1,0:T(8,128)}', space=vmem, size = 0x4000, scoped, tag = 'scratch operand']
  #allocation3 [shape = 'f32[4,8,1]{2,1,0:T(8,128)}', space=vmem, size = 0x4000, scoped, tag = 'scratch operand']
  #allocation4 [shape = 'f32[4,8,8]{2,1,0:T(8,128)}', space=vmem, size = 0x4000, scoped, tag = 'scratch operand']
  %s0 = inlined_call_operand.vmem [shape: bf16[2,8,32], index: 0, kind: input, shape index: {}]
  %s1 = inlined_call_operand.vmem [shape: bf16[2,8,32], index: 1, kind: input, shape index: {}]
  %s2 = inlined_call_operand.vmem [shape: bf16[2,8,32], index: 2, kind: input, shape index: {}]
  %s3 = inlined_call_operand.vmem [shape: bf16[2,8,32], index: 3, kind: output, shape index: {}]
  %s4 = sld [smem:[#allocation0]]
  $region53: #{wavelet_transformer_forward.13} parent=0
    _
  %s6 = ssub.s32 1, %s4
  %s7 = scalar_select 0, %s6, %s4
  loop: start=0, step=1, limit=4
  $region2: #{wavelet_transformer_forward.13} parent=0 // loop_pre_header
    _
  $region3: #{wavelet_transformer_forward.13} parent=0 // loop_header
    %s9 = sphi 0, %s13
    %p10 = scmp.ge.s32.totalorder %s9, 4
    %s16 = sphi 0, %s35
    %s17 = sphi 0, %s31
    %s18 = sphi 0, %s27
    %s19 = sphi 0, %s16
    %s20 = sphi 0, %s17
    %s21 = sphi 0, %s18
    %s22 = sphi 0, %s19
    %s23 = sphi 0, %s20
    %s24 = sphi 0, %s21
    %s40 = sphi 0, %s42
    %s43 = sphi 0, %s40
    %s44 = sphi 0, %s43
    %s60 = sphi 0, %s44
    %s68 = sphi 0, %s70
    %s71 = sphi 0, %s68
    %s72 = sphi 0, %s71
    %s88 = sphi 0, %s72
    %s96 = sphi 0, %s98
    %s99 = sphi 0, %s96
    %s100 = sphi 0, %s99
    %s116 = sphi 0, %s100
    %s124 = sphi 0, %s126
    %s127 = sphi 0, %s124
    %s128 = sphi 0, %s127
    %s144 = sphi 0, %s128
  $region4: #{wavelet_transformer_forward.13} parent=0 // loop_header_branch
    %12 = sbr.rel (%p10) target = $region8
  $region5: #{wavelet_transformer_forward.13} parent=0 // loop_body
    %s14 = ssub.s32 %s9, 1
    %s15 = ssub.s32 %s9, 2
    %s25 = sadd.s32 1, %s18
    %p26 = scmp.ge.s32.totalorder %s25, 1
    %s27 = scalar_select %p26, 0, %s25
    %s28 = sadd.s32 1, %s17
    %s29 = scalar_select %p26, %s28, %s17
    %p30 = scmp.ge.s32.totalorder %s29, 1
    %s31 = scalar_select %p30, 0, %s29
    %s32 = sadd.s32 1, %s16
    %s33 = scalar_select %p30, %s32, %s16
    %p34 = scmp.ge.s32.totalorder %s33, 2
    %s35 = scalar_select %p34, 0, %s33
    %s36 = ssub.s32 %s16, %s35
    %s37 = ssub.s32 %s17, %s31
    %s38 = sor.u32 %s36, %s37
    %p39 = scmp.eq.s32.totalorder %s38, 0
    %s41 = sadd.s32 %s40, 1
    %s42 = scalar_select %p39, %s40, %s41
    %p45 = pneg %p39
    %p46 = scmp.eq.s32.totalorder %s9, 1
    %p47 = por %p45, %p46
    %p48 = scmp.ne.s32.totalorder %s40, %s43
    %p49 = scmp.eq.s32.totalorder %s9, 0
    %p50 = por %p48, %p49
    %p51 = scmp.ne.s32.totalorder %s40, %s43
    %p52 = scmp.eq.s32.totalorder %s14, 1
    %p53 = por %p51, %p52
    %p54 = scmp.ne.s32.totalorder %s43, %s44
    %p55 = scmp.eq.s32.totalorder %s14, 0
    %p56 = por %p54, %p55
    %p57 = scmp.ne.s32.totalorder %s43, %s44
    %p58 = scmp.eq.s32.totalorder %s15, 1
    %p59 = por %p57, %p58
    %p61 = scmp.ne.s32.totalorder %s44, %s60
    %p62 = scmp.eq.s32.totalorder %s15, 0
    %p63 = por %p61, %p62
    %s64 = ssub.s32 %s16, %s35
    %s65 = ssub.s32 %s18, %s27
    %s66 = sor.u32 %s64, %s65
    %p67 = scmp.eq.s32.totalorder %s66, 0
    %s69 = sadd.s32 %s68, 1
    %s70 = scalar_select %p67, %s68, %s69
    %p73 = pneg %p67
    %p74 = scmp.eq.s32.totalorder %s9, 1
    %p75 = por %p73, %p74
    %p76 = scmp.ne.s32.totalorder %s68, %s71
    %p77 = scmp.eq.s32.totalorder %s9, 0
    %p78 = por %p76, %p77
    %p79 = scmp.ne.s32.totalorder %s68, %s71
    %p80 = scmp.eq.s32.totalorder %s14, 1
    %p81 = por %p79, %p80
    %p82 = scmp.ne.s32.totalorder %s71, %s72
    %p83 = scmp.eq.s32.totalorder %s14, 0
    %p84 = por %p82, %p83
    %p85 = scmp.ne.s32.totalorder %s71, %s72
    %p86 = scmp.eq.s32.totalorder %s15, 1
    %p87 = por %p85, %p86
    %p89 = scmp.ne.s32.totalorder %s72, %s88
    %p90 = scmp.eq.s32.totalorder %s15, 0
    %p91 = por %p89, %p90
    %s92 = ssub.s32 %s16, %s35
    %s93 = ssub.s32 %s18, %s27
    %s94 = sor.u32 %s92, %s93
    %p95 = scmp.eq.s32.totalorder %s94, 0
    %s97 = sadd.s32 %s96, 1
    %s98 = scalar_select %p95, %s96, %s97
    %p101 = pneg %p95
    %p102 = scmp.eq.s32.totalorder %s9, 1
    %p103 = por %p101, %p102
    %p104 = scmp.ne.s32.totalorder %s96, %s99
    %p105 = scmp.eq.s32.totalorder %s9, 0
    %p106 = por %p104, %p105
    %p107 = scmp.ne.s32.totalorder %s96, %s99
    %p108 = scmp.eq.s32.totalorder %s14, 1
    %p109 = por %p107, %p108
    %p110 = scmp.ne.s32.totalorder %s99, %s100
    %p111 = scmp.eq.s32.totalorder %s14, 0
    %p112 = por %p110, %p111
    %p113 = scmp.ne.s32.totalorder %s99, %s100
    %p114 = scmp.eq.s32.totalorder %s15, 1
    %p115 = por %p113, %p114
    %p117 = scmp.ne.s32.totalorder %s100, %s116
    %p118 = scmp.eq.s32.totalorder %s15, 0
    %p119 = por %p117, %p118
    %s120 = ssub.s32 %s16, %s35
    %s121 = ssub.s32 %s17, %s31
    %s122 = sor.u32 %s120, %s121
    %p123 = scmp.eq.s32.totalorder %s122, 0
    %s125 = sadd.s32 %s124, 1
    %s126 = scalar_select %p123, %s124, %s125
    %p129 = pneg %p123
    %p130 = scmp.eq.s32.totalorder %s9, 1
    %p131 = por %p129, %p130
    %p132 = scmp.ne.s32.totalorder %s124, %s127
    %p133 = scmp.eq.s32.totalorder %s9, 0
    %p134 = por %p132, %p133
    %p135 = scmp.ne.s32.totalorder %s124, %s127
    %p136 = scmp.eq.s32.totalorder %s14, 1
    %p137 = por %p135, %p136
    %p138 = scmp.ne.s32.totalorder %s127, %s128
    %p139 = scmp.eq.s32.totalorder %s14, 0
    %p140 = por %p138, %p139
    %p141 = scmp.ne.s32.totalorder %s127, %s128
    %p142 = scmp.eq.s32.totalorder %s15, 1
    %p143 = por %p141, %p142
    %p145 = scmp.ne.s32.totalorder %s128, %s144
    %p146 = scmp.eq.s32.totalorder %s15, 0
    %p147 = por %p145, %p146
    %p148 = scmp.le.s32.totalorder 1, %s9
    %p149 = scmp.lt.s32.totalorder %s9, 3
    %p150 = pnand %p148, %p149
    %p151 = pneg %p150
    // Predicated region
    $region9: #{wavelet_transformer_forward.13} parent=5 // pred_check
      _
    $region10: #{wavelet_transformer_forward.13} parent=5 // pred_check_branch
      %153 = sbr.rel (%p150) target = $region12
    $region11: #{wavelet_transformer_forward.13} parent=5 // pred_region
      %s154 = ssub.s32 %s9, 1
    $region12: #{wavelet_transformer_forward.13} parent=5 // pred_fallthru
      _
    %p155 = scmp.lt.s32.totalorder %s9, 2
    // Predicated region
    $region13: #{wavelet_transformer_forward.13} parent=5 // pred_check
      %p156 = pneg %p155
    $region14: #{wavelet_transformer_forward.13} parent=5 // pred_check_branch
      %158 = sbr.rel (%p156) target = $region16
    $region15: #{wavelet_transformer_forward.13} parent=5 // pred_region
      // Predicated region
      $region17: #{wavelet_transformer_forward.13} parent=15 // pred_check
        %p159 = pneg %p50
      $region18: #{wavelet_transformer_forward.13} parent=15 // pred_check_branch
        %161 = sbr.rel (%p159) target = $region20
      $region19: #{wavelet_transformer_forward.13} parent=15 // pred_region
        %p162 = scmp.lt.s32.totalorder %s16, 1
        %s163 = scalar_select %p162, %s16, 1
        %p164 = scmp.lt.s32.totalorder %s17, 0
        %s165 = scalar_select %p164, %s17, 0
        %s166 = sadd.s32 %s165, %s163
        %s167 = smul.addr %s166, 4
        %s168 = scalar_lea.vmem %s0, %s167
      $region20: #{wavelet_transformer_forward.13} parent=15 // pred_fallthru
        _
      // Predicated region
      $region21: #{wavelet_transformer_forward.13} parent=15 // pred_check
        %p169 = pneg %p78
      $region22: #{wavelet_transformer_forward.13} parent=15 // pred_check_branch
        %171 = sbr.rel (%p169) target = $region24
      $region23: #{wavelet_transformer_forward.13} parent=15 // pred_region
        %p172 = scmp.lt.s32.totalorder %s16, 1
        %s173 = scalar_select %p172, %s16, 1
        %p174 = scmp.lt.s32.totalorder %s18, 0
        %s175 = scalar_select %p174, %s18, 0
        %s176 = sadd.s32 %s175, %s173
        %s177 = smul.addr %s176, 4
        %s178 = scalar_lea.vmem %s1, %s177
      $region24: #{wavelet_transformer_forward.13} parent=15 // pred_fallthru
        _
      // Predicated region
      $region25: #{wavelet_transformer_forward.13} parent=15 // pred_check
        %p179 = pneg %p106
      $region26: #{wavelet_transformer_forward.13} parent=15 // pred_check_branch
        %181 = sbr.rel (%p179) target = $region28
      $region27: #{wavelet_transformer_forward.13} parent=15 // pred_region
        %p182 = scmp.lt.s32.totalorder %s16, 1
        %s183 = scalar_select %p182, %s16, 1
        %p184 = scmp.lt.s32.totalorder %s18, 0
        %s185 = scalar_select %p184, %s18, 0
        %s186 = sadd.s32 %s185, %s183
        %s187 = smul.addr %s186, 4
        %s188 = scalar_lea.vmem %s2, %s187
      $region28: #{wavelet_transformer_forward.13} parent=15 // pred_fallthru
        _
    $region16: #{wavelet_transformer_forward.13} parent=5 // pred_fallthru
      _
    %p189 = scmp.le.s32.totalorder 1, %s9
    %p190 = scmp.lt.s32.totalorder %s9, 3
    %p191 = pnand %p189, %p190
    %p192 = pneg %p191
    // Predicated region
    $region29: #{wavelet_transformer_forward.13} parent=5 // pred_check
      _
    $region30: #{wavelet_transformer_forward.13} parent=5 // pred_check_branch
      %194 = sbr.rel (%p191) target = $region32
    $region31: #{wavelet_transformer_forward.13} parent=5 // pred_region
      %s195 = ssub.s32 %s9, 1
      %p196 = scmp.lt.s32.totalorder %s19, 1
      %s197 = scalar_select %p196, %s19, 1
      %p198 = scmp.lt.s32.totalorder %s20, 0
      %s199 = scalar_select %p198, %s20, 0
      %s200 = sadd.s32 %s199, %s197
      %s201 = smul.addr %s200, 4
      %s202 = scalar_lea.vmem %s0, %s201
      %p203 = pneg %p56
      %p204 = pneg %p53
      %p205 = scmp.lt.s32.totalorder %s19, 1
      %s206 = scalar_select %p205, %s19, 1
      %p207 = scmp.lt.s32.totalorder %s21, 0
      %s208 = scalar_select %p207, %s21, 0
      %s209 = sadd.s32 %s208, %s206
      %s210 = smul.addr %s209, 4
      %s211 = scalar_lea.vmem %s1, %s210
      %p212 = pneg %p84
      %p213 = pneg %p81
      %p214 = scmp.lt.s32.totalorder %s19, 1
      %s215 = scalar_select %p214, %s19, 1
      %p216 = scmp.lt.s32.totalorder %s21, 0
      %s217 = scalar_select %p216, %s21, 0
      %s218 = sadd.s32 %s217, %s215
      %s219 = smul.addr %s218, 4
      %s220 = scalar_lea.vmem %s2, %s219
      %p221 = pneg %p112
      %p222 = pneg %p109
      %p223 = pneg %p140
      %p224 = pneg %p137
      %p225 = scmp.lt.s32.totalorder %s19, 1
      %s226 = scalar_select %p225, %s19, 1
      %p227 = scmp.lt.s32.totalorder %s20, 0
      %s228 = scalar_select %p227, %s20, 0
      %s229 = sadd.s32 %s228, %s226
      %s230 = smul.addr %s229, 4
      %s231 = scalar_lea.vmem %s3, %s230
      %p232 = scmp.lt.s32.totalorder %s19, 1
      %s233 = scalar_select %p232, %s19, 1
      %p234 = scmp.lt.s32.totalorder %s20, 0
      %s235 = scalar_select %p234, %s20, 0
      %s236 = sadd.s32 %s235, %s233
      %s237 = smul.addr %s236, 4
      %s238 = scalar_lea.vmem %s0, %s237
      %p239 = scmp.lt.s32.totalorder %s19, 1
      %s240 = scalar_select %p239, %s19, 1
      %p241 = scmp.lt.s32.totalorder %s21, 0
      %s242 = scalar_select %p241, %s21, 0
      %s243 = sadd.s32 %s242, %s240
      %s244 = smul.addr %s243, 4
      %s245 = scalar_lea.vmem %s1, %s244
      %p246 = scmp.lt.s32.totalorder %s19, 1
      %s247 = scalar_select %p246, %s19, 1
      %p248 = scmp.lt.s32.totalorder %s21, 0
      %s249 = scalar_select %p248, %s21, 0
      %s250 = sadd.s32 %s249, %s247
      %s251 = smul.addr %s250, 4
      %s252 = scalar_lea.vmem %s2, %s251
      %p253 = scmp.lt.s32.totalorder %s19, 1
      %s254 = scalar_select %p253, %s19, 1
      %p255 = scmp.lt.s32.totalorder %s20, 0
      %s256 = scalar_select %p255, %s20, 0
      %s257 = sadd.s32 %s256, %s254
      %s258 = smul.addr %s257, 4
      %s259 = scalar_lea.vmem %s3, %s258
      %p261 = scmp.eq.s32.totalorder %s21, 0
      // Predicated region
      $region33: #{wavelet_transformer_forward.13} parent=31 // pred_check
        %p262 = pneg %p261
      $region34: #{wavelet_transformer_forward.13} parent=31 // pred_check_branch
        %264 = sbr.rel (%p262) target = $region36
      $region35: #{wavelet_transformer_forward.13} parent=31 // pred_region
        %vm265 = vcmask 7168
        %266 = vst.msk [vmem:[#allocation2] sm:$0xff] %vm265, -inf
        %267 = vst.msk [vmem:[#allocation2 + $0x8] sm:$0xff] %vm265, -inf
        %268 = vst.msk [vmem:[#allocation2 + $0x10] sm:$0xff] %vm265, -inf
        %269 = vst.msk [vmem:[#allocation2 + $0x18] sm:$0xff] %vm265, -inf
        %270 = vst.msk [vmem:[#allocation3] sm:$0xff] %vm265, 0.0
        %271 = vst.msk [vmem:[#allocation3 + $0x8] sm:$0xff] %vm265, 0.0
        %272 = vst.msk [vmem:[#allocation3 + $0x10] sm:$0xff] %vm265, 0.0
        %273 = vst.msk [vmem:[#allocation3 + $0x18] sm:$0xff] %vm265, 0.0
        %vm274 = vcmask 64512
        %275 = vst.msk [vmem:[#allocation4] sm:$0xff] %vm274, 0.0
        %276 = vst.msk [vmem:[#allocation4 + $0x8] sm:$0xff] %vm274, 0.0
        %277 = vst.msk [vmem:[#allocation4 + $0x10] sm:$0xff] %vm274, 0.0
        %278 = vst.msk [vmem:[#allocation4 + $0x18] sm:$0xff] %vm274, 0.0
      $region36: #{wavelet_transformer_forward.13} parent=31 // pred_fallthru
        _
      %v279 = vld [vmem:[%s238] sm:$0xf]
      %v280 = vld [vmem:[%s245] sm:$0xf]
      %v281 = vld [vmem:[%s252] sm:$0xf]
      %vm282 = vcmask 64512
      %v284 = vsel %vm282, %v279, 0
      %v287 = vsel %vm282, %v280, 0
      %289 = vmatprep.subr.bf16.mxu0 0
      %290 = vmatpush1.bf16.xpose.msra.mxu0 0
      %291 = vmatprep.subr.bf16.mxu0 0
      %292 = vmatpush1.bf16.xpose.msra.mxu0 0
      %293 = vmatprep.subr.bf16.mxu0 0
      %294 = vmatpush1.bf16.xpose.msra.mxu0 0
      %295 = vmatprep.subr.bf16.mxu0 0
      %296 = vmatpush1.bf16.xpose.msra.mxu0 0
      %297 = vmatprep.subr.bf16.mxu0 0
      %298 = vmatpush1.bf16.xpose.msra.mxu0 0
      %299 = vmatprep.subr.bf16.mxu0 0
      %300 = vmatpush1.bf16.xpose.msra.mxu0 0
      %301 = vmatprep.subr.bf16.mxu0 0
      %302 = vmatpush1.bf16.xpose.msra.mxu0 0
      %303 = vmatprep.subr.bf16.mxu0 0
      %304 = vmatpush1.bf16.xpose.msra.mxu0 %v287
      %305 = vmatprep.subr.bf16.mxu0 0
      %306 = vmatpush2.bf16.xpose.msra.mxu0 0
      %307 = vmatprep.subr.bf16.mxu0 0
      %308 = vmatpush2.bf16.xpose.msra.mxu0 0
      %309 = vmatprep.subr.bf16.mxu0 0
      %310 = vmatpush2.bf16.xpose.msra.mxu0 0
      %311 = vmatprep.subr.bf16.mxu0 0
      %312 = vmatpush2.bf16.xpose.msra.mxu0 0
      %313 = vmatprep.subr.bf16.mxu0 0
      %314 = vmatpush2.bf16.xpose.msra.mxu0 0
      %315 = vmatprep.subr.bf16.mxu0 0
      %316 = vmatpush2.bf16.xpose.msra.mxu0 0
      %317 = vmatprep.subr.bf16.mxu0 0
      %318 = vmatpush2.bf16.xpose.msra.mxu0 0
      %319 = vmatprep.subr.bf16.mxu0 0
      %320 = vmatpush2.bf16.xpose.msra.mxu0 0
      %321 = vmatprep.mubr.bf16.mxu0 0
      %322 = vmatmul.mubr.bf16.gmra.mxu0 %v284
      %v323 = vpop.f32.mrf.mxu0
      %v324 = vadd.f32 0.0, %v323
      %v325 = vpop.f32.mrf.mxu0
      %v326 = vpop.f32.mrf.mxu0
      %v327 = vpop.f32.mrf.mxu0
      %328 = vdwg.mxu0
      %v329 = vmul.f32 %v324, 0.35355338
      %v330 = vld [vmem:[#allocation2] sm:$0xff]
      %v331 = vsel %vm282, %v329, -inf
      %332 = vmax.xlane.f32.xlu0 %v331
      %v333 = vpop.xlane.xlu0 %332
      %v334 = vmax.f32 %v330, %v333
      %v335 = vsub.f32 %v330, %v334
      %v336 = vmul.f32 %v335, 1.442695
      %v337 = vpow.pop %v336
      %339 = vset.pattern.permute.xlu0 0
      %340 = vperm.xlu0 %339, %v334
      %v341 = vpop.permute.xlu0 %340
      %v343 = vsub.f32 %v329, %v341
      %v344 = vmul.f32 %v343, 1.442695
      %v345 = vpow.pop %v344
      %v346 = vld [vmem:[#allocation3] sm:$0xff]
      %v347 = vmul.f32 %v337, %v346
      %v348 = vsel %vm282, %v345, 0.0
      %349 = vadd.xlane.f32.xlu0 %v348
      %v350 = vpop.xlane.xlu0 %349
      %v351 = vadd.f32 %v347, %v350
      %vm352 = vcmask 7168
      %353 = vst.msk [vmem:[#allocation3] sm:$0xff] %vm352, %v351
      %v354 = vld [vmem:[#allocation4] sm:$0xff]
      %356 = vset.pattern.permute.xlu0 0
      %357 = vperm.xlu0 %356, %v337
      %v358 = vpop.permute.xlu0 %357
      %v360 = vmul.f32 %v358, %v354
      %v361 = vpack.c.bf16 %v345, %v345
      %v363 = vsel %vm282, %v361, 0
      %vm365 = vcmask 1043456
      %v367 = vsel %vm365, %v281, 0
      %369 = vmatprep.subr.bf16.mxu0 0
      %370 = vmatpush1.bf16.msra.mxu0 0
      %371 = vmatprep.subr.bf16.mxu0 0
      %372 = vmatpush1.bf16.msra.mxu0 0
      %373 = vmatprep.subr.bf16.mxu0 0
      %374 = vmatpush1.bf16.msra.mxu0 0
      %375 = vmatprep.subr.bf16.mxu0 0
      %376 = vmatpush1.bf16.msra.mxu0 0
      %377 = vmatprep.subr.bf16.mxu0 0
      %378 = vmatpush1.bf16.msra.mxu0 0
      %379 = vmatprep.subr.bf16.mxu0 0
      %380 = vmatpush1.bf16.msra.mxu0 0
      %381 = vmatprep.subr.bf16.mxu0 0
      %382 = vmatpush1.bf16.msra.mxu0 0
      %383 = vmatprep.subr.bf16.mxu0 0
      %384 = vmatpush1.bf16.msra.mxu0 %v367
      %385 = vmatprep.subr.bf16.mxu0 0
      %386 = vmatpush2.bf16.msra.mxu0 0
      %387 = vmatprep.subr.bf16.mxu0 0
      %388 = vmatpush2.bf16.msra.mxu0 0
      %389 = vmatprep.subr.bf16.mxu0 0
      %390 = vmatpush2.bf16.msra.mxu0 0
      %391 = vmatprep.subr.bf16.mxu0 0
      %392 = vmatpush2.bf16.msra.mxu0 0
      %393 = vmatprep.subr.bf16.mxu0 0
      %394 = vmatpush2.bf16.msra.mxu0 0
      %395 = vmatprep.subr.bf16.mxu0 0
      %396 = vmatpush2.bf16.msra.mxu0 0
      %397 = vmatprep.subr.bf16.mxu0 0
      %398 = vmatpush2.bf16.msra.mxu0 0
      %399 = vmatprep.subr.bf16.mxu0 0
      %400 = vmatpush2.bf16.msra.mxu0 0
      %401 = vmatprep.mubr.bf16.mxu0 0
      %402 = vmatmul.mubr.bf16.gmra.mxu0 %v363
      %v403 = vpop.f32.mrf.mxu0
      %v404 = vadd.f32 0.0, %v403
      %v405 = vpop.f32.mrf.mxu0
      %v406 = vpop.f32.mrf.mxu0
      %v407 = vpop.f32.mrf.mxu0
      %408 = vdwg.mxu0
      %v409 = vadd.f32 %v360, %v404
      %410 = vst.msk [vmem:[#allocation4] sm:$0xff] %vm282, %v409
      %411 = vst.msk [vmem:[#allocation2] sm:$0xff] %vm352, %v334
      %v412 = vld [vmem:[%s238] sm:$0xf]
      %v413 = vld [vmem:[%s245] sm:$0xf]
      %v414 = vld [vmem:[%s252] sm:$0xf]
      %v416 = vunpack.c.l.b16 %v412
      %v417 = vpack.c.b16 %v416, %v416
      %418 = vrot.lane.b32.xlu0 %v417, 120
      %v419 = vpop.permute.xlu0 %418
      %v421 = vunpack.c.l.b16 %v413
      %v422 = vpack.c.b16 %v421, %v421
      %423 = vrot.lane.b32.xlu0 %v422, 120
      %v424 = vpop.permute.xlu0 %423
      %v426 = vsel %vm282, %v419, 0
      %v429 = vsel %vm282, %v424, 0
      %431 = vmatprep.subr.bf16.mxu0 0
      %432 = vmatpush1.bf16.xpose.msra.mxu0 0
      %433 = vmatprep.subr.bf16.mxu0 0
      %434 = vmatpush1.bf16.xpose.msra.mxu0 0
      %435 = vmatprep.subr.bf16.mxu0 0
      %436 = vmatpush1.bf16.xpose.msra.mxu0 0
      %437 = vmatprep.subr.bf16.mxu0 0
      %438 = vmatpush1.bf16.xpose.msra.mxu0 0
      %439 = vmatprep.subr.bf16.mxu0 0
      %440 = vmatpush1.bf16.xpose.msra.mxu0 0
      %441 = vmatprep.subr.bf16.mxu0 0
      %442 = vmatpush1.bf16.xpose.msra.mxu0 0
      %443 = vmatprep.subr.bf16.mxu0 0
      %444 = vmatpush1.bf16.xpose.msra.mxu0 0
      %445 = vmatprep.subr.bf16.mxu0 0
      %446 = vmatpush1.bf16.xpose.msra.mxu0 %v429
      %447 = vmatprep.subr.bf16.mxu0 0
      %448 = vmatpush2.bf16.xpose.msra.mxu0 0
      %449 = vmatprep.subr.bf16.mxu0 0
      %450 = vmatpush2.bf16.xpose.msra.mxu0 0
      %451 = vmatprep.subr.bf16.mxu0 0
      %452 = vmatpush2.bf16.xpose.msra.mxu0 0
      %453 = vmatprep.subr.bf16.mxu0 0
      %454 = vmatpush2.bf16.xpose.msra.mxu0 0
      %455 = vmatprep.subr.bf16.mxu0 0
      %456 = vmatpush2.bf16.xpose.msra.mxu0 0
      %457 = vmatprep.subr.bf16.mxu0 0
      %458 = vmatpush2.bf16.xpose.msra.mxu0 0
      %459 = vmatprep.subr.bf16.mxu0 0
      %460 = vmatpush2.bf16.xpose.msra.mxu0 0
      %461 = vmatprep.subr.bf16.mxu0 0
      %462 = vmatpush2.bf16.xpose.msra.mxu0 0
      %463 = vmatprep.mubr.bf16.mxu0 0
      %464 = vmatmul.mubr.bf16.gmra.mxu0 %v426
      %v465 = vpop.f32.mrf.mxu0
      %v466 = vadd.f32 0.0, %v465
      %v467 = vpop.f32.mrf.mxu0
      %v468 = vpop.f32.mrf.mxu0
      %v469 = vpop.f32.mrf.mxu0
      %470 = vdwg.mxu0
      %v471 = vmul.f32 %v466, 0.35355338
      %s472 = scalar_lea.vmem [#allocation2], 8
      %v473 = vld [vmem:[%s472] sm:$0xff]
      %v474 = vsel %vm282, %v471, -inf
      %475 = vmax.xlane.f32.xlu0 %v474
      %v476 = vpop.xlane.xlu0 %475
      %v477 = vmax.f32 %v473, %v476
      %v478 = vsub.f32 %v473, %v477
      %v479 = vmul.f32 %v478, 1.442695
      %v480 = vpow.pop %v479
      %482 = vset.pattern.permute.xlu0 0
      %483 = vperm.xlu0 %482, %v477
      %v484 = vpop.permute.xlu0 %483
      %v486 = vsub.f32 %v471, %v484
      %v487 = vmul.f32 %v486, 1.442695
      %v488 = vpow.pop %v487
      %s489 = scalar_lea.vmem [#allocation3], 8
      %v490 = vld [vmem:[%s489] sm:$0xff]
      %v491 = vmul.f32 %v480, %v490
      %v492 = vsel %vm282, %v488, 0.0
      %493 = vadd.xlane.f32.xlu0 %v492
      %v494 = vpop.xlane.xlu0 %493
      %v495 = vadd.f32 %v491, %v494
      %496 = vst.msk [vmem:[%s489] sm:$0xff] %vm352, %v495
      %s497 = scalar_lea.vmem [#allocation4], 8
      %v498 = vld [vmem:[%s497] sm:$0xff]
      %500 = vset.pattern.permute.xlu0 0
      %501 = vperm.xlu0 %500, %v480
      %v502 = vpop.permute.xlu0 %501
      %v504 = vmul.f32 %v502, %v498
      %v505 = vpack.c.bf16 %v488, %v488
      %v507 = vunpack.c.l.b16 %v414
      %v508 = vpack.c.b16 %v507, %v507
      %509 = vrot.lane.b32.xlu0 %v508, 120
      %v510 = vpop.permute.xlu0 %509
      %v512 = vsel %vm282, %v505, 0
      %v515 = vsel %vm365, %v510, 0
      %517 = vmatprep.subr.bf16.mxu0 0
      %518 = vmatpush1.bf16.msra.mxu0 0
      %519 = vmatprep.subr.bf16.mxu0 0
      %520 = vmatpush1.bf16.msra.mxu0 0
      %521 = vmatprep.subr.bf16.mxu0 0
      %522 = vmatpush1.bf16.msra.mxu0 0
      %523 = vmatprep.subr.bf16.mxu0 0
      %524 = vmatpush1.bf16.msra.mxu0 0
      %525 = vmatprep.subr.bf16.mxu0 0
      %526 = vmatpush1.bf16.msra.mxu0 0
      %527 = vmatprep.subr.bf16.mxu0 0
      %528 = vmatpush1.bf16.msra.mxu0 0
      %529 = vmatprep.subr.bf16.mxu0 0
      %530 = vmatpush1.bf16.msra.mxu0 0
      %531 = vmatprep.subr.bf16.mxu0 0
      %532 = vmatpush1.bf16.msra.mxu0 %v515
      %533 = vmatprep.subr.bf16.mxu0 0
      %534 = vmatpush2.bf16.msra.mxu0 0
      %535 = vmatprep.subr.bf16.mxu0 0
      %536 = vmatpush2.bf16.msra.mxu0 0
      %537 = vmatprep.subr.bf16.mxu0 0
      %538 = vmatpush2.bf16.msra.mxu0 0
      %539 = vmatprep.subr.bf16.mxu0 0
      %540 = vmatpush2.bf16.msra.mxu0 0
      %541 = vmatprep.subr.bf16.mxu0 0
      %542 = vmatpush2.bf16.msra.mxu0 0
      %543 = vmatprep.subr.bf16.mxu0 0
      %544 = vmatpush2.bf16.msra.mxu0 0
      %545 = vmatprep.subr.bf16.mxu0 0
      %546 = vmatpush2.bf16.msra.mxu0 0
      %547 = vmatprep.subr.bf16.mxu0 0
      %548 = vmatpush2.bf16.msra.mxu0 0
      %549 = vmatprep.mubr.bf16.mxu0 0
      %550 = vmatmul.mubr.bf16.gmra.mxu0 %v512
      %v551 = vpop.f32.mrf.mxu0
      %v552 = vadd.f32 0.0, %v551
      %v553 = vpop.f32.mrf.mxu0
      %v554 = vpop.f32.mrf.mxu0
      %v555 = vpop.f32.mrf.mxu0
      %556 = vdwg.mxu0
      %v557 = vadd.f32 %v504, %v552
      %558 = vst.msk [vmem:[%s497] sm:$0xff] %vm282, %v557
      %559 = vst.msk [vmem:[%s472] sm:$0xff] %vm352, %v477
      %v560 = vld [vmem:[%s238] sm:$0xf]
      %v561 = vld [vmem:[%s245] sm:$0xf]
      %v562 = vld [vmem:[%s252] sm:$0xf]
      %v564 = vunpack.c.l.b16 %v560
      %v565 = vpack.c.b16 %v564, %v564
      %566 = vrot.lane.b32.xlu0 %v565, 112
      %v567 = vpop.permute.xlu0 %566
      %v569 = vunpack.c.l.b16 %v561
      %v570 = vpack.c.b16 %v569, %v569
      %571 = vrot.lane.b32.xlu0 %v570, 112
      %v572 = vpop.permute.xlu0 %571
      %v574 = vsel %vm282, %v567, 0
      %v577 = vsel %vm282, %v572, 0
      %579 = vmatprep.subr.bf16.mxu0 0
      %580 = vmatpush1.bf16.xpose.msra.mxu0 0
      %581 = vmatprep.subr.bf16.mxu0 0
      %582 = vmatpush1.bf16.xpose.msra.mxu0 0
      %583 = vmatprep.subr.bf16.mxu0 0
      %584 = vmatpush1.bf16.xpose.msra.mxu0 0
      %585 = vmatprep.subr.bf16.mxu0 0
      %586 = vmatpush1.bf16.xpose.msra.mxu0 0
      %587 = vmatprep.subr.bf16.mxu0 0
      %588 = vmatpush1.bf16.xpose.msra.mxu0 0
      %589 = vmatprep.subr.bf16.mxu0 0
      %590 = vmatpush1.bf16.xpose.msra.mxu0 0
      %591 = vmatprep.subr.bf16.mxu0 0
      %592 = vmatpush1.bf16.xpose.msra.mxu0 0
      %593 = vmatprep.subr.bf16.mxu0 0
      %594 = vmatpush1.bf16.xpose.msra.mxu0 %v577
      %595 = vmatprep.subr.bf16.mxu0 0
      %596 = vmatpush2.bf16.xpose.msra.mxu0 0
      %597 = vmatprep.subr.bf16.mxu0 0
      %598 = vmatpush2.bf16.xpose.msra.mxu0 0
      %599 = vmatprep.subr.bf16.mxu0 0
      %600 = vmatpush2.bf16.xpose.msra.mxu0 0
      %601 = vmatprep.subr.bf16.mxu0 0
      %602 = vmatpush2.bf16.xpose.msra.mxu0 0
      %603 = vmatprep.subr.bf16.mxu0 0
      %604 = vmatpush2.bf16.xpose.msra.mxu0 0
      %605 = vmatprep.subr.bf16.mxu0 0
      %606 = vmatpush2.bf16.xpose.msra.mxu0 0
      %607 = vmatprep.subr.bf16.mxu0 0
      %608 = vmatpush2.bf16.xpose.msra.mxu0 0
      %609 = vmatprep.subr.bf16.mxu0 0
      %610 = vmatpush2.bf16.xpose.msra.mxu0 0
      %611 = vmatprep.mubr.bf16.mxu0 0
      %612 = vmatmul.mubr.bf16.gmra.mxu0 %v574
      %v613 = vpop.f32.mrf.mxu0
      %v614 = vadd.f32 0.0, %v613
      %v615 = vpop.f32.mrf.mxu0
      %v616 = vpop.f32.mrf.mxu0
      %v617 = vpop.f32.mrf.mxu0
      %618 = vdwg.mxu0
      %v619 = vmul.f32 %v614, 0.35355338
      %s620 = scalar_lea.vmem [#allocation2], 16
      %v621 = vld [vmem:[%s620] sm:$0xff]
      %v622 = vsel %vm282, %v619, -inf
      %623 = vmax.xlane.f32.xlu0 %v622
      %v624 = vpop.xlane.xlu0 %623
      %v625 = vmax.f32 %v621, %v624
      %v626 = vsub.f32 %v621, %v625
      %v627 = vmul.f32 %v626, 1.442695
      %v628 = vpow.pop %v627
      %630 = vset.pattern.permute.xlu0 0
      %631 = vperm.xlu0 %630, %v625
      %v632 = vpop.permute.xlu0 %631
      %v634 = vsub.f32 %v619, %v632
      %v635 = vmul.f32 %v634, 1.442695
      %v636 = vpow.pop %v635
      %s637 = scalar_lea.vmem [#allocation3], 16
      %v638 = vld [vmem:[%s637] sm:$0xff]
      %v639 = vmul.f32 %v628, %v638
      %v640 = vsel %vm282, %v636, 0.0
      %641 = vadd.xlane.f32.xlu0 %v640
      %v642 = vpop.xlane.xlu0 %641
      %v643 = vadd.f32 %v639, %v642
      %644 = vst.msk [vmem:[%s637] sm:$0xff] %vm352, %v643
      %s645 = scalar_lea.vmem [#allocation4], 16
      %v646 = vld [vmem:[%s645] sm:$0xff]
      %648 = vset.pattern.permute.xlu0 0
      %649 = vperm.xlu0 %648, %v628
      %v650 = vpop.permute.xlu0 %649
      %v652 = vmul.f32 %v650, %v646
      %v653 = vpack.c.bf16 %v636, %v636
      %v655 = vunpack.c.l.b16 %v562
      %v656 = vpack.c.b16 %v655, %v655
      %657 = vrot.lane.b32.xlu0 %v656, 112
      %v658 = vpop.permute.xlu0 %657
      %v660 = vsel %vm282, %v653, 0
      %v663 = vsel %vm365, %v658, 0
      %665 = vmatprep.subr.bf16.mxu0 0
      %666 = vmatpush1.bf16.msra.mxu0 0
      %667 = vmatprep.subr.bf16.mxu0 0
      %668 = vmatpush1.bf16.msra.mxu0 0
      %669 = vmatprep.subr.bf16.mxu0 0
      %670 = vmatpush1.bf16.msra.mxu0 0
      %671 = vmatprep.subr.bf16.mxu0 0
      %672 = vmatpush1.bf16.msra.mxu0 0
      %673 = vmatprep.subr.bf16.mxu0 0
      %674 = vmatpush1.bf16.msra.mxu0 0
      %675 = vmatprep.subr.bf16.mxu0 0
      %676 = vmatpush1.bf16.msra.mxu0 0
      %677 = vmatprep.subr.bf16.mxu0 0
      %678 = vmatpush1.bf16.msra.mxu0 0
      %679 = vmatprep.subr.bf16.mxu0 0
      %680 = vmatpush1.bf16.msra.mxu0 %v663
      %681 = vmatprep.subr.bf16.mxu0 0
      %682 = vmatpush2.bf16.msra.mxu0 0
      %683 = vmatprep.subr.bf16.mxu0 0
      %684 = vmatpush2.bf16.msra.mxu0 0
      %685 = vmatprep.subr.bf16.mxu0 0
      %686 = vmatpush2.bf16.msra.mxu0 0
      %687 = vmatprep.subr.bf16.mxu0 0
      %688 = vmatpush2.bf16.msra.mxu0 0
      %689 = vmatprep.subr.bf16.mxu0 0
      %690 = vmatpush2.bf16.msra.mxu0 0
      %691 = vmatprep.subr.bf16.mxu0 0
      %692 = vmatpush2.bf16.msra.mxu0 0
      %693 = vmatprep.subr.bf16.mxu0 0
      %694 = vmatpush2.bf16.msra.mxu0 0
      %695 = vmatprep.subr.bf16.mxu0 0
      %696 = vmatpush2.bf16.msra.mxu0 0
      %697 = vmatprep.mubr.bf16.mxu0 0
      %698 = vmatmul.mubr.bf16.gmra.mxu0 %v660
      %v699 = vpop.f32.mrf.mxu0
      %v700 = vadd.f32 0.0, %v699
      %v701 = vpop.f32.mrf.mxu0
      %v702 = vpop.f32.mrf.mxu0
      %v703 = vpop.f32.mrf.mxu0
      %704 = vdwg.mxu0
      %v705 = vadd.f32 %v652, %v700
      %706 = vst.msk [vmem:[%s645] sm:$0xff] %vm282, %v705
      %707 = vst.msk [vmem:[%s620] sm:$0xff] %vm352, %v625
      %v708 = vld [vmem:[%s238] sm:$0xf]
      %v709 = vld [vmem:[%s245] sm:$0xf]
      %v710 = vld [vmem:[%s252] sm:$0xf]
      %v712 = vunpack.c.l.b16 %v708
      %v713 = vpack.c.b16 %v712, %v712
      %714 = vrot.lane.b32.xlu0 %v713, 104
      %v715 = vpop.permute.xlu0 %714
      %v717 = vunpack.c.l.b16 %v709
      %v718 = vpack.c.b16 %v717, %v717
      %719 = vrot.lane.b32.xlu0 %v718, 104
      %v720 = vpop.permute.xlu0 %719
      %v722 = vsel %vm282, %v715, 0
      %v725 = vsel %vm282, %v720, 0
      %727 = vmatprep.subr.bf16.mxu0 0
      %728 = vmatpush1.bf16.xpose.msra.mxu0 0
      %729 = vmatprep.subr.bf16.mxu0 0
      %730 = vmatpush1.bf16.xpose.msra.mxu0 0
      %731 = vmatprep.subr.bf16.mxu0 0
      %732 = vmatpush1.bf16.xpose.msra.mxu0 0
      %733 = vmatprep.subr.bf16.mxu0 0
      %734 = vmatpush1.bf16.xpose.msra.mxu0 0
      %735 = vmatprep.subr.bf16.mxu0 0
      %736 = vmatpush1.bf16.xpose.msra.mxu0 0
      %737 = vmatprep.subr.bf16.mxu0 0
      %738 = vmatpush1.bf16.xpose.msra.mxu0 0
      %739 = vmatprep.subr.bf16.mxu0 0
      %740 = vmatpush1.bf16.xpose.msra.mxu0 0
      %741 = vmatprep.subr.bf16.mxu0 0
      %742 = vmatpush1.bf16.xpose.msra.mxu0 %v725
      %743 = vmatprep.subr.bf16.mxu0 0
      %744 = vmatpush2.bf16.xpose.msra.mxu0 0
      %745 = vmatprep.subr.bf16.mxu0 0
      %746 = vmatpush2.bf16.xpose.msra.mxu0 0
      %747 = vmatprep.subr.bf16.mxu0 0
      %748 = vmatpush2.bf16.xpose.msra.mxu0 0
      %749 = vmatprep.subr.bf16.mxu0 0
      %750 = vmatpush2.bf16.xpose.msra.mxu0 0
      %751 = vmatprep.subr.bf16.mxu0 0
      %752 = vmatpush2.bf16.xpose.msra.mxu0 0
      %753 = vmatprep.subr.bf16.mxu0 0
      %754 = vmatpush2.bf16.xpose.msra.mxu0 0
      %755 = vmatprep.subr.bf16.mxu0 0
      %756 = vmatpush2.bf16.xpose.msra.mxu0 0
      %757 = vmatprep.subr.bf16.mxu0 0
      %758 = vmatpush2.bf16.xpose.msra.mxu0 0
      %759 = vmatprep.mubr.bf16.mxu0 0
      %760 = vmatmul.mubr.bf16.gmra.mxu0 %v722
      %v761 = vpop.f32.mrf.mxu0
      %v762 = vadd.f32 0.0, %v761
      %v763 = vpop.f32.mrf.mxu0
      %v764 = vpop.f32.mrf.mxu0
      %v765 = vpop.f32.mrf.mxu0
      %766 = vdwg.mxu0
      %v767 = vmul.f32 %v762, 0.35355338
      %s768 = scalar_lea.vmem [#allocation2], 24
      %v769 = vld [vmem:[%s768] sm:$0xff]
      %v770 = vsel %vm282, %v767, -inf
      %771 = vmax.xlane.f32.xlu0 %v770
      %v772 = vpop.xlane.xlu0 %771
      %v773 = vmax.f32 %v769, %v772
      %v774 = vsub.f32 %v769, %v773
      %v775 = vmul.f32 %v774, 1.442695
      %v776 = vpow.pop %v775
      %778 = vset.pattern.permute.xlu0 0
      %779 = vperm.xlu0 %778, %v773
      %v780 = vpop.permute.xlu0 %779
      %v782 = vsub.f32 %v767, %v780
      %v783 = vmul.f32 %v782, 1.442695
      %v784 = vpow.pop %v783
      %s785 = scalar_lea.vmem [#allocation3], 24
      %v786 = vld [vmem:[%s785] sm:$0xff]
      %v787 = vmul.f32 %v776, %v786
      %v788 = vsel %vm282, %v784, 0.0
      %789 = vadd.xlane.f32.xlu0 %v788
      %v790 = vpop.xlane.xlu0 %789
      %v791 = vadd.f32 %v787, %v790
      %792 = vst.msk [vmem:[%s785] sm:$0xff] %vm352, %v791
      %s793 = scalar_lea.vmem [#allocation4], 24
      %v794 = vld [vmem:[%s793] sm:$0xff]
      %796 = vset.pattern.permute.xlu0 0
      %797 = vperm.xlu0 %796, %v776
      %v798 = vpop.permute.xlu0 %797
      %v800 = vmul.f32 %v798, %v794
      %v801 = vpack.c.bf16 %v784, %v784
      %v803 = vunpack.c.l.b16 %v710
      %v804 = vpack.c.b16 %v803, %v803
      %805 = vrot.lane.b32.xlu0 %v804, 104
      %v806 = vpop.permute.xlu0 %805
      %v808 = vsel %vm282, %v801, 0
      %v811 = vsel %vm365, %v806, 0
      %813 = vmatprep.subr.bf16.mxu0 0
      %814 = vmatpush1.bf16.msra.mxu0 0
      %815 = vmatprep.subr.bf16.mxu0 0
      %816 = vmatpush1.bf16.msra.mxu0 0
      %817 = vmatprep.subr.bf16.mxu0 0
      %818 = vmatpush1.bf16.msra.mxu0 0
      %819 = vmatprep.subr.bf16.mxu0 0
      %820 = vmatpush1.bf16.msra.mxu0 0
      %821 = vmatprep.subr.bf16.mxu0 0
      %822 = vmatpush1.bf16.msra.mxu0 0
      %823 = vmatprep.subr.bf16.mxu0 0
      %824 = vmatpush1.bf16.msra.mxu0 0
      %825 = vmatprep.subr.bf16.mxu0 0
      %826 = vmatpush1.bf16.msra.mxu0 0
      %827 = vmatprep.subr.bf16.mxu0 0
      %828 = vmatpush1.bf16.msra.mxu0 %v811
      %829 = vmatprep.subr.bf16.mxu0 0
      %830 = vmatpush2.bf16.msra.mxu0 0
      %831 = vmatprep.subr.bf16.mxu0 0
      %832 = vmatpush2.bf16.msra.mxu0 0
      %833 = vmatprep.subr.bf16.mxu0 0
      %834 = vmatpush2.bf16.msra.mxu0 0
      %835 = vmatprep.subr.bf16.mxu0 0
      %836 = vmatpush2.bf16.msra.mxu0 0
      %837 = vmatprep.subr.bf16.mxu0 0
      %838 = vmatpush2.bf16.msra.mxu0 0
      %839 = vmatprep.subr.bf16.mxu0 0
      %840 = vmatpush2.bf16.msra.mxu0 0
      %841 = vmatprep.subr.bf16.mxu0 0
      %842 = vmatpush2.bf16.msra.mxu0 0
      %843 = vmatprep.subr.bf16.mxu0 0
      %844 = vmatpush2.bf16.msra.mxu0 0
      %845 = vmatprep.mubr.bf16.mxu0 0
      %846 = vmatmul.mubr.bf16.gmra.mxu0 %v808
      %v847 = vpop.f32.mrf.mxu0
      %v848 = vadd.f32 0.0, %v847
      %v849 = vpop.f32.mrf.mxu0
      %v850 = vpop.f32.mrf.mxu0
      %v851 = vpop.f32.mrf.mxu0
      %852 = vdwg.mxu0
      %v853 = vadd.f32 %v800, %v848
      %854 = vst.msk [vmem:[%s793] sm:$0xff] %vm282, %v853
      %855 = vst.msk [vmem:[%s768] sm:$0xff] %vm352, %v773
      // Predicated region
      $region37: #{wavelet_transformer_forward.13} parent=31 // pred_check
        %p856 = pneg %p261
      $region38: #{wavelet_transformer_forward.13} parent=31 // pred_check_branch
        %858 = sbr.rel (%p856) target = $region40
      $region39: #{wavelet_transformer_forward.13} parent=31 // pred_region
        %v859 = vld [vmem:[#allocation3] sm:$0xff]
        %v860 = vrcp.pop %v859
        %v861 = vld [vmem:[#allocation4] sm:$0xff]
        %863 = vset.pattern.permute.xlu0 0
        %864 = vperm.xlu0 %863, %v860
        %v865 = vpop.permute.xlu0 %864
        %v867 = vmul.f32 %v861, %v865
        %v868 = vpack.c.bf16 %v867, %v867
        %vm869 = vcmask 60416
        %870 = vst.msk [vmem:[%s259] sm:$0xf] %vm869, %v868
        %v871 = vld [vmem:[%s489] sm:$0xff]
        %v872 = vrcp.pop %v871
        %v873 = vld [vmem:[%s497] sm:$0xff]
        %875 = vset.pattern.permute.xlu0 0
        %876 = vperm.xlu0 %875, %v872
        %v877 = vpop.permute.xlu0 %876
        %v879 = vmul.f32 %v873, %v877
        %v880 = vpack.c.bf16 %v879, %v879
        %v882 = vunpack.c.l.b16 %v880
        %v883 = vpack.c.b16 %v882, %v882
        %884 = vrot.lane.b32.xlu0 %v883, 8
        %v885 = vpop.permute.xlu0 %884
        %vm887 = vcmask 126016
        %888 = vst.msk [vmem:[%s259] sm:$0xf] %vm887, %v885
        %v889 = vld [vmem:[%s637] sm:$0xff]
        %v890 = vrcp.pop %v889
        %v891 = vld [vmem:[%s645] sm:$0xff]
        %893 = vset.pattern.permute.xlu0 0
        %894 = vperm.xlu0 %893, %v890
        %v895 = vpop.permute.xlu0 %894
        %v897 = vmul.f32 %v891, %v895
        %v898 = vpack.c.bf16 %v897, %v897
        %v900 = vunpack.c.l.b16 %v898
        %v901 = vpack.c.b16 %v900, %v900
        %902 = vrot.lane.b32.xlu0 %v901, 16
        %v903 = vpop.permute.xlu0 %902
        %vm905 = vcmask 191616
        %906 = vst.msk [vmem:[%s259] sm:$0xf] %vm905, %v903
        %v907 = vld [vmem:[%s785] sm:$0xff]
        %v908 = vrcp.pop %v907
        %v909 = vld [vmem:[%s793] sm:$0xff]
        %911 = vset.pattern.permute.xlu0 0
        %912 = vperm.xlu0 %911, %v908
        %v913 = vpop.permute.xlu0 %912
        %v915 = vmul.f32 %v909, %v913
        %v916 = vpack.c.bf16 %v915, %v915
        %v918 = vunpack.c.l.b16 %v916
        %v919 = vpack.c.b16 %v918, %v918
        %920 = vrot.lane.b32.xlu0 %v919, 24
        %v921 = vpop.permute.xlu0 %920
        %vm923 = vcmask 257216
        %924 = vst.msk [vmem:[%s259] sm:$0xf] %vm923, %v921
      $region40: #{wavelet_transformer_forward.13} parent=31 // pred_fallthru
        _
      %p925 = scmp.lt.s32.totalorder %s19, 1
      %s926 = scalar_select %p925, %s19, 1
      %p927 = scmp.lt.s32.totalorder %s20, 0
      %s928 = scalar_select %p927, %s20, 0
      %s929 = sadd.s32 %s928, %s926
      %s930 = smul.addr %s929, 4
      %s931 = scalar_lea.vmem %s3, %s930
      // Predicated region
      $region41: #{wavelet_transformer_forward.13} parent=31 // pred_check
        %p932 = pneg %p137
      $region42: #{wavelet_transformer_forward.13} parent=31 // pred_check_branch
        %934 = sbr.rel (%p932) target = $region44
      $region43: #{wavelet_transformer_forward.13} parent=31 // pred_region
        _
      $region44: #{wavelet_transformer_forward.13} parent=31 // pred_fallthru
        _
    $region32: #{wavelet_transformer_forward.13} parent=5 // pred_fallthru
      _
    %p935 = scmp.le.s32.totalorder 2, %s9
    // Predicated region
    $region45: #{wavelet_transformer_forward.13} parent=5 // pred_check
      %p936 = pneg %p935
    $region46: #{wavelet_transformer_forward.13} parent=5 // pred_check_branch
      %938 = sbr.rel (%p936) target = $region48
    $region47: #{wavelet_transformer_forward.13} parent=5 // pred_region
      %s939 = ssub.s32 %s9, 2
      // Predicated region
      $region49: #{wavelet_transformer_forward.13} parent=47 // pred_check
        %p940 = pneg %p143
      $region50: #{wavelet_transformer_forward.13} parent=47 // pred_check_branch
        %942 = sbr.rel (%p940) target = $region52
      $region51: #{wavelet_transformer_forward.13} parent=47 // pred_region
        %p943 = scmp.lt.s32.totalorder %s22, 1
        %s944 = scalar_select %p943, %s22, 1
        %p945 = scmp.lt.s32.totalorder %s23, 0
        %s946 = scalar_select %p945, %s23, 0
        %s947 = sadd.s32 %s946, %s944
        %s948 = smul.addr %s947, 4
        %s949 = scalar_lea.vmem %s3, %s948
      $region52: #{wavelet_transformer_forward.13} parent=47 // pred_fallthru
        _
    $region48: #{wavelet_transformer_forward.13} parent=5 // pred_fallthru
      _
  $region6: #{wavelet_transformer_forward.13} parent=0 // loop_footer
    %s13 = sadd.s32 1, %s9
  $region7: #{wavelet_transformer_forward.13} parent=0 // loop_footer_branch
    %8 = sbr.rel target = $region3
  $region8: #{wavelet_transformer_forward.13} parent=0 // loop_exit
    _

// kernel: wavelet_transformer_forward.20
$region0: #{wavelet_transformer_forward.20}
  #allocation0 [shape = 'u32[]', space=smem, size = 0x4, offset = 0x4, fixed_abs, tag = 'smem constant byte address 0x4 - core index']
  #allocation1 [shape = 'u32[144,128]{1,0:T(1,128)}', space=vmem, size = 0x12000, scoped, tag = 'internal scratch']
  %s0 = inlined_call_operand.vmem [shape: f32[2,8,32], index: 0, kind: input, shape index: {}]
  %s1 = inlined_call_operand.vmem [shape: f32[2,1,32], index: 1, kind: output, shape index: {}]
  %s2 = sld [smem:[#allocation0]]
  $region37: #{wavelet_transformer_forward.20} parent=0
    _
  %s4 = ssub.s32 1, %s2
  %s5 = scalar_select 0, %s4, %s2
  loop: start=0, step=1, limit=4
  $region2: #{wavelet_transformer_forward.20} parent=0 // loop_pre_header
    _
  $region3: #{wavelet_transformer_forward.20} parent=0 // loop_header
    %s7 = sphi 0, %s11
    %p8 = scmp.ge.s32.totalorder %s7, 4
    %s17 = sphi 0, %s19
    %s20 = sphi 0, %s17
    %s21 = sphi 0, %s20
    %s37 = sphi 0, %s21
    %s43 = sphi 0, %s45
    %s46 = sphi 0, %s43
    %s47 = sphi 0, %s46
    %s63 = sphi 0, %s47
  $region4: #{wavelet_transformer_forward.20} parent=0 // loop_header_branch
    %10 = sbr.rel (%p8) target = $region8
  $region5: #{wavelet_transformer_forward.20} parent=0 // loop_body
    %s12 = ssub.s32 %s7, 1
    %s13 = ssub.s32 %s7, 2
    %s14 = sadd.s32 %s7, 1
    %s15 = ssub.s32 %s7, %s14
    %p16 = scmp.eq.s32.totalorder %s15, 0
    %s18 = sadd.s32 %s17, 1
    %s19 = scalar_select %p16, %s17, %s18
    %p22 = pneg %p16
    %p23 = scmp.eq.s32.totalorder %s7, 1
    %p24 = por %p22, %p23
    %p25 = scmp.ne.s32.totalorder %s17, %s20
    %p26 = scmp.eq.s32.totalorder %s7, 0
    %p27 = por %p25, %p26
    %p28 = scmp.ne.s32.totalorder %s17, %s20
    %p29 = scmp.eq.s32.totalorder %s12, 1
    %p30 = por %p28, %p29
    %p31 = scmp.ne.s32.totalorder %s20, %s21
    %p32 = scmp.eq.s32.totalorder %s12, 0
    %p33 = por %p31, %p32
    %p34 = scmp.ne.s32.totalorder %s20, %s21
    %p35 = scmp.eq.s32.totalorder %s13, 1
    %p36 = por %p34, %p35
    %p38 = scmp.ne.s32.totalorder %s21, %s37
    %p39 = scmp.eq.s32.totalorder %s13, 0
    %p40 = por %p38, %p39
    %s41 = ssub.s32 %s7, %s14
    %p42 = scmp.eq.s32.totalorder %s41, 0
    %s44 = sadd.s32 %s43, 1
    %s45 = scalar_select %p42, %s43, %s44
    %p48 = pneg %p42
    %p49 = scmp.eq.s32.totalorder %s7, 1
    %p50 = por %p48, %p49
    %p51 = scmp.ne.s32.totalorder %s43, %s46
    %p52 = scmp.eq.s32.totalorder %s7, 0
    %p53 = por %p51, %p52
    %p54 = scmp.ne.s32.totalorder %s43, %s46
    %p55 = scmp.eq.s32.totalorder %s12, 1
    %p56 = por %p54, %p55
    %p57 = scmp.ne.s32.totalorder %s46, %s47
    %p58 = scmp.eq.s32.totalorder %s12, 0
    %p59 = por %p57, %p58
    %p60 = scmp.ne.s32.totalorder %s46, %s47
    %p61 = scmp.eq.s32.totalorder %s13, 1
    %p62 = por %p60, %p61
    %p64 = scmp.ne.s32.totalorder %s47, %s63
    %p65 = scmp.eq.s32.totalorder %s13, 0
    %p66 = por %p64, %p65
    %p67 = scmp.le.s32.totalorder 1, %s7
    %p68 = scmp.lt.s32.totalorder %s7, 3
    %p69 = pnand %p67, %p68
    %p70 = pneg %p69
    // Predicated region
    $region9: #{wavelet_transformer_forward.20} parent=5 // pred_check
      _
    $region10: #{wavelet_transformer_forward.20} parent=5 // pred_check_branch
      %72 = sbr.rel (%p69) target = $region12
    $region11: #{wavelet_transformer_forward.20} parent=5 // pred_region
      %s73 = ssub.s32 %s7, 1
    $region12: #{wavelet_transformer_forward.20} parent=5 // pred_fallthru
      _
    %p74 = scmp.lt.s32.totalorder %s7, 2
    // Predicated region
    $region13: #{wavelet_transformer_forward.20} parent=5 // pred_check
      %p75 = pneg %p74
    $region14: #{wavelet_transformer_forward.20} parent=5 // pred_check_branch
      %77 = sbr.rel (%p75) target = $region16
    $region15: #{wavelet_transformer_forward.20} parent=5 // pred_region
      // Predicated region
      $region17: #{wavelet_transformer_forward.20} parent=15 // pred_check
        %p78 = pneg %p27
      $region18: #{wavelet_transformer_forward.20} parent=15 // pred_check_branch
        %80 = sbr.rel (%p78) target = $region20
      $region19: #{wavelet_transformer_forward.20} parent=15 // pred_region
        %p81 = scmp.lt.s32.totalorder %s7, 1
        %s82 = scalar_select %p81, %s7, 1
        %s83 = smul.addr %s82, 8
        %s84 = scalar_lea.vmem %s0, %s83
      $region20: #{wavelet_transformer_forward.20} parent=15 // pred_fallthru
        _
    $region16: #{wavelet_transformer_forward.20} parent=5 // pred_fallthru
      _
    %p85 = scmp.le.s32.totalorder 1, %s7
    %p86 = scmp.lt.s32.totalorder %s7, 3
    %p87 = pnand %p85, %p86
    %p88 = pneg %p87
    // Predicated region
    $region21: #{wavelet_transformer_forward.20} parent=5 // pred_check
      _
    $region22: #{wavelet_transformer_forward.20} parent=5 // pred_check_branch
      %90 = sbr.rel (%p87) target = $region24
    $region23: #{wavelet_transformer_forward.20} parent=5 // pred_region
      %s91 = ssub.s32 %s7, 1
      %p92 = scmp.lt.s32.totalorder %s12, 1
      %s93 = scalar_select %p92, %s12, 1
      %s94 = smul.addr %s93, 8
      %s95 = scalar_lea.vmem %s0, %s94
      %p96 = pneg %p33
      %p97 = pneg %p30
      %p98 = pneg %p59
      %p99 = pneg %p56
      %p100 = scmp.lt.s32.totalorder %s12, 1
      %s101 = scalar_select %p100, %s12, 1
      %s102 = scalar_lea.vmem %s1, %s101
      %p103 = scmp.lt.s32.totalorder %s12, 1
      %s104 = scalar_select %p103, %s12, 1
      %s105 = smul.addr %s104, 8
      %s106 = scalar_lea.vmem %s0, %s105
      %p107 = scmp.lt.s32.totalorder %s12, 1
      %s108 = scalar_select %p107, %s12, 1
      %s109 = scalar_lea.vmem %s1, %s108
      %v110 = vld [vmem:[%s106] sm:$0xff]
      %vm111 = vcmask 261120
      %v112 = vsel %vm111, %v110, 0.0
      %v113 = vrot.slane %v112, 4
      %v114 = vadd.f32 %v112, %v113
      %v115 = vrot.slane %v114, 2
      %v116 = vadd.f32 %v114, %v115
      %v117 = vrot.slane %v116, 1
      %v118 = vadd.f32 %v116, %v117
      %v119 = vrcp.pop 8.0
      %v120 = vmul.f32 %v118, %v119
      %vm121 = vcmask 253952
      %122 = vst.msk [vmem:[%s109] sm:$0x1] %vm121, %v120
      %p123 = scmp.lt.s32.totalorder %s12, 1
      %s124 = scalar_select %p123, %s12, 1
      %s125 = scalar_lea.vmem %s1, %s124
      // Predicated region
      $region25: #{wavelet_transformer_forward.20} parent=23 // pred_check
        %p126 = pneg %p56
      $region26: #{wavelet_transformer_forward.20} parent=23 // pred_check_branch
        %128 = sbr.rel (%p126) target = $region28
      $region27: #{wavelet_transformer_forward.20} parent=23 // pred_region
        _
      $region28: #{wavelet_transformer_forward.20} parent=23 // pred_fallthru
        _
    $region24: #{wavelet_transformer_forward.20} parent=5 // pred_fallthru
      _
    %p129 = scmp.le.s32.totalorder 2, %s7
    // Predicated region
    $region29: #{wavelet_transformer_forward.20} parent=5 // pred_check
      %p130 = pneg %p129
    $region30: #{wavelet_transformer_forward.20} parent=5 // pred_check_branch
      %132 = sbr.rel (%p130) target = $region32
    $region31: #{wavelet_transformer_forward.20} parent=5 // pred_region
      %s133 = ssub.s32 %s7, 2
      // Predicated region
      $region33: #{wavelet_transformer_forward.20} parent=31 // pred_check
        %p134 = pneg %p62
      $region34: #{wavelet_transformer_forward.20} parent=31 // pred_check_branch
        %136 = sbr.rel (%p134) target = $region36
      $region35: #{wavelet_transformer_forward.20} parent=31 // pred_region
        %p137 = scmp.lt.s32.totalorder %s13, 1
        %s138 = scalar_select %p137, %s13, 1
        %s139 = scalar_lea.vmem %s1, %s138
      $region36: #{wavelet_transformer_forward.20} parent=31 // pred_fallthru
        _
    $region32: #{wavelet_transformer_forward.20} parent=5 // pred_fallthru
      _
  $region6: #{wavelet_transformer_forward.20} parent=0 // loop_footer
    %s11 = sadd.s32 1, %s7
  $region7: #{wavelet_transformer_forward.20} parent=0 // loop_footer_branch
    %6 = sbr.rel target = $region3
  $region8: #{wavelet_transformer_forward.20} parent=0 // loop_exit
    _

// kernel: wavelet_transformer_forward.15
$region0: #{wavelet_transformer_forward.15}
  #allocation0 [shape = 'u32[]', space=smem, size = 0x4, offset = 0x4, fixed_abs, tag = 'smem constant byte address 0x4 - core index']
  #allocation1 [shape = 'u32[144,128]{1,0:T(1,128)}', space=vmem, size = 0x12000, scoped, tag = 'internal scratch']
  %s0 = inlined_call_operand.vmem [shape: f32[16,32], index: 0, kind: input, shape index: {}]
  %s1 = inlined_call_operand.vmem [shape: bf16[32,128], index: 1, kind: input, shape index: {}]
  %s2 = inlined_call_operand.vmem [shape: f32[1,128], index: 2, kind: input, shape index: {}]
  %s3 = inlined_call_operand.vmem [shape: bf16[128,32], index: 3, kind: input, shape index: {}]
  %s4 = inlined_call_operand.vmem [shape: f32[1,32], index: 4, kind: input, shape index: {}]
  %s5 = inlined_call_operand.vmem [shape: f32[1,32], index: 5, kind: input, shape index: {}]
  %s6 = inlined_call_operand.vmem [shape: f32[1,32], index: 6, kind: input, shape index: {}]
  %s7 = inlined_call_operand.vmem [shape: f32[16,32], index: 7, kind: output, shape index: {}]
  %s8 = sld [smem:[#allocation0]]
  $region38: #{wavelet_transformer_forward.15} parent=0
    _
  %s10 = ssub.s32 1, %s8
  %s11 = scalar_select 0, %s10, %s8
  // Predicated region
  $region2: #{wavelet_transformer_forward.15} parent=0 // pred_check
    _
  $region3: #{wavelet_transformer_forward.15} parent=0 // pred_check_branch
    %13 = sbr.rel (0) target = $region5
  $region4: #{wavelet_transformer_forward.15} parent=0 // pred_region
    _
  $region5: #{wavelet_transformer_forward.15} parent=0 // pred_fallthru
    _
  // Predicated region
  $region6: #{wavelet_transformer_forward.15} parent=0 // pred_check
    _
  $region7: #{wavelet_transformer_forward.15} parent=0 // pred_check_branch
    %15 = sbr.rel (0) target = $region9
  $region8: #{wavelet_transformer_forward.15} parent=0 // pred_region
    _
  $region9: #{wavelet_transformer_forward.15} parent=0 // pred_fallthru
    _
  // Predicated region
  $region10: #{wavelet_transformer_forward.15} parent=0 // pred_check
    _
  $region11: #{wavelet_transformer_forward.15} parent=0 // pred_check_branch
    %17 = sbr.rel (0) target = $region13
  $region12: #{wavelet_transformer_forward.15} parent=0 // pred_region
    _
  $region13: #{wavelet_transformer_forward.15} parent=0 // pred_fallthru
    _
  // Predicated region
  $region14: #{wavelet_transformer_forward.15} parent=0 // pred_check
    _
  $region15: #{wavelet_transformer_forward.15} parent=0 // pred_check_branch
    %19 = sbr.rel (0) target = $region17
  $region16: #{wavelet_transformer_forward.15} parent=0 // pred_region
    _
  $region17: #{wavelet_transformer_forward.15} parent=0 // pred_fallthru
    _
  // Predicated region
  $region18: #{wavelet_transformer_forward.15} parent=0 // pred_check
    _
  $region19: #{wavelet_transformer_forward.15} parent=0 // pred_check_branch
    %21 = sbr.rel (0) target = $region21
  $region20: #{wavelet_transformer_forward.15} parent=0 // pred_region
    _
  $region21: #{wavelet_transformer_forward.15} parent=0 // pred_fallthru
    _
  // Predicated region
  $region22: #{wavelet_transformer_forward.15} parent=0 // pred_check
    _
  $region23: #{wavelet_transformer_forward.15} parent=0 // pred_check_branch
    %23 = sbr.rel (0) target = $region25
  $region24: #{wavelet_transformer_forward.15} parent=0 // pred_region
    _
  $region25: #{wavelet_transformer_forward.15} parent=0 // pred_fallthru
    _
  // Predicated region
  $region26: #{wavelet_transformer_forward.15} parent=0 // pred_check
    _
  $region27: #{wavelet_transformer_forward.15} parent=0 // pred_check_branch
    %25 = sbr.rel (0) target = $region29
  $region28: #{wavelet_transformer_forward.15} parent=0 // pred_region
    _
  $region29: #{wavelet_transformer_forward.15} parent=0 // pred_fallthru
    _
  %v27 = vld [vmem:[%s0] sm:$0xff]
  %v28 = vld [vmem:[%s0 + $0x8] sm:$0xff]
  %v29 = vpack.c.bf16 %v28, %v27
  %v30 = vld [vmem:[%s1] sm:$0xf]
  %v31 = vld [vmem:[%s1 + $0x4] sm:$0xf]
  %v32 = vld [vmem:[%s1 + $0x8] sm:$0xf]
  %v33 = vld [vmem:[%s1 + $0xc] sm:$0xf]
  %v34 = vld [vmem:[%s2] sm:$0x1]
  %v36 = vlaneseq
  %v37 = vshrl.u32 %v36, 7
  %v38 = vsub.s32 0, %v37
  %v39 = vrot.slane %v34, %v38
  %v45 = vunpack.c.l.b16 %v30
  %v46 = vunpack.c.l.b16 %v31
  %v47 = vunpack.c.l.b16 %v32
  %v48 = vunpack.c.l.b16 %v33
  %v49 = vpack.c.b16 %v46, %v45
  %v50 = vpack.c.b16 %v48, %v47
  %vm53 = vcmask 261120
  %v55 = vsel %vm53, %v29, 0
  %57 = vmatprep.subr.bf16.mxu0 0
  %58 = vmatpush1.bf16.msra.mxu0 0
  %59 = vmatprep.subr.bf16.mxu0 0
  %60 = vmatpush1.bf16.msra.mxu0 0
  %61 = vmatprep.subr.bf16.mxu0 0
  %62 = vmatpush1.bf16.msra.mxu0 0
  %63 = vmatprep.subr.bf16.mxu0 0
  %64 = vmatpush1.bf16.msra.mxu0 0
  %65 = vmatprep.subr.bf16.mxu0 0
  %66 = vmatpush1.bf16.msra.mxu0 0
  %67 = vmatprep.subr.bf16.mxu0 0
  %68 = vmatpush1.bf16.msra.mxu0 0
  %69 = vmatprep.subr.bf16.mxu0 0
  %70 = vmatpush1.bf16.msra.mxu0 %v50
  %71 = vmatprep.subr.bf16.mxu0 0
  %72 = vmatpush1.bf16.msra.mxu0 %v49
  %73 = vmatprep.subr.bf16.mxu0 0
  %74 = vmatpush2.bf16.msra.mxu0 0
  %75 = vmatprep.subr.bf16.mxu0 0
  %76 = vmatpush2.bf16.msra.mxu0 0
  %77 = vmatprep.subr.bf16.mxu0 0
  %78 = vmatpush2.bf16.msra.mxu0 0
  %79 = vmatprep.subr.bf16.mxu0 0
  %80 = vmatpush2.bf16.msra.mxu0 0
  %81 = vmatprep.subr.bf16.mxu0 0
  %82 = vmatpush2.bf16.msra.mxu0 0
  %83 = vmatprep.subr.bf16.mxu0 0
  %84 = vmatpush2.bf16.msra.mxu0 0
  %85 = vmatprep.subr.bf16.mxu0 0
  %86 = vmatpush2.bf16.msra.mxu0 0
  %87 = vmatprep.subr.bf16.mxu0 0
  %88 = vmatpush2.bf16.msra.mxu0 0
  %89 = vmatprep.mubr.bf16.mxu0 0
  %90 = vmatmul.mubr.bf16.gmra.mxu0 %v55
  %v91 = vpop.f32.mrf.mxu0
  %v92 = vadd.f32 %v39, %v91
  %v93 = vpop.f32.mrf.mxu0
  %v94 = vpop.f32.mrf.mxu0
  %v95 = vadd.f32 %v39, %v94
  %v96 = vpop.f32.mrf.mxu0
  %97 = vdwg.mxu0
  %v98 = vmax.f32 %v92, 0.0
  %v99 = vmax.f32 %v95, 0.0
  %v100 = vpack.c.bf16 %v99, %v98
  %v101 = vld [vmem:[%s3] sm:$0xf]
  %v102 = vld [vmem:[%s3 + $0x4] sm:$0xf]
  %v103 = vld [vmem:[%s3 + $0x8] sm:$0xf]
  %v104 = vld [vmem:[%s3 + $0xc] sm:$0xf]
  %v105 = vld [vmem:[%s3 + $0x10] sm:$0xf]
  %v106 = vld [vmem:[%s3 + $0x14] sm:$0xf]
  %v107 = vld [vmem:[%s3 + $0x18] sm:$0xf]
  %v108 = vld [vmem:[%s3 + $0x1c] sm:$0xf]
  %v109 = vld [vmem:[%s3 + $0x20] sm:$0xf]
  %v110 = vld [vmem:[%s3 + $0x24] sm:$0xf]
  %v111 = vld [vmem:[%s3 + $0x28] sm:$0xf]
  %v112 = vld [vmem:[%s3 + $0x2c] sm:$0xf]
  %v113 = vld [vmem:[%s3 + $0x30] sm:$0xf]
  %v114 = vld [vmem:[%s3 + $0x34] sm:$0xf]
  %v115 = vld [vmem:[%s3 + $0x38] sm:$0xf]
  %v116 = vld [vmem:[%s3 + $0x3c] sm:$0xf]
  %v117 = vld [vmem:[%s4] sm:$0x1]
  %v119 = vlaneseq
  %v120 = vshrl.u32 %v119, 7
  %v121 = vsub.s32 0, %v120
  %v122 = vrot.slane %v117, %v121
  %v140 = vunpack.c.l.b16 %v101
  %v141 = vunpack.c.l.b16 %v102
  %v142 = vunpack.c.l.b16 %v103
  %v143 = vunpack.c.l.b16 %v104
  %v144 = vunpack.c.l.b16 %v105
  %v145 = vunpack.c.l.b16 %v106
  %v146 = vunpack.c.l.b16 %v107
  %v147 = vunpack.c.l.b16 %v108
  %v148 = vunpack.c.l.b16 %v109
  %v149 = vunpack.c.l.b16 %v110
  %v150 = vunpack.c.l.b16 %v111
  %v151 = vunpack.c.l.b16 %v112
  %v152 = vunpack.c.l.b16 %v113
  %v153 = vunpack.c.l.b16 %v114
  %v154 = vunpack.c.l.b16 %v115
  %v155 = vunpack.c.l.b16 %v116
  %v156 = vpack.c.b16 %v141, %v140
  %v157 = vpack.c.b16 %v143, %v142
  %v158 = vpack.c.b16 %v145, %v144
  %v159 = vpack.c.b16 %v147, %v146
  %v160 = vpack.c.b16 %v149, %v148
  %v161 = vpack.c.b16 %v151, %v150
  %v162 = vpack.c.b16 %v153, %v152
  %v163 = vpack.c.b16 %v155, %v154
  %172 = vmatprep.subr.bf16.mxu0 0
  %173 = vmatpush1.bf16.msra.mxu0 %v163
  %174 = vmatprep.subr.bf16.mxu0 0
  %175 = vmatpush1.bf16.msra.mxu0 %v162
  %176 = vmatprep.subr.bf16.mxu0 0
  %177 = vmatpush1.bf16.msra.mxu0 %v161
  %178 = vmatprep.subr.bf16.mxu0 0
  %179 = vmatpush1.bf16.msra.mxu0 %v160
  %180 = vmatprep.subr.bf16.mxu0 0
  %181 = vmatpush1.bf16.msra.mxu0 %v159
  %182 = vmatprep.subr.bf16.mxu0 0
  %183 = vmatpush1.bf16.msra.mxu0 %v158
  %184 = vmatprep.subr.bf16.mxu0 0
  %185 = vmatpush1.bf16.msra.mxu0 %v157
  %186 = vmatprep.subr.bf16.mxu0 0
  %187 = vmatpush1.bf16.msra.mxu0 %v156
  %188 = vmatprep.subr.bf16.mxu0 0
  %189 = vmatpush2.bf16.msra.mxu0 0
  %190 = vmatprep.subr.bf16.mxu0 0
  %191 = vmatpush2.bf16.msra.mxu0 0
  %192 = vmatprep.subr.bf16.mxu0 0
  %193 = vmatpush2.bf16.msra.mxu0 0
  %194 = vmatprep.subr.bf16.mxu0 0
  %195 = vmatpush2.bf16.msra.mxu0 0
  %196 = vmatprep.subr.bf16.mxu0 0
  %197 = vmatpush2.bf16.msra.mxu0 0
  %198 = vmatprep.subr.bf16.mxu0 0
  %199 = vmatpush2.bf16.msra.mxu0 0
  %200 = vmatprep.subr.bf16.mxu0 0
  %201 = vmatpush2.bf16.msra.mxu0 0
  %202 = vmatprep.subr.bf16.mxu0 0
  %203 = vmatpush2.bf16.msra.mxu0 0
  %204 = vmatprep.mubr.bf16.mxu0 0
  %205 = vmatmul.mubr.bf16.gmra.mxu0 %v100
  %v206 = vpop.f32.mrf.mxu0
  %v207 = vadd.f32 %v122, %v206
  %v208 = vpop.f32.mrf.mxu0
  %v209 = vpop.f32.mrf.mxu0
  %v210 = vadd.f32 %v122, %v209
  %v211 = vpop.f32.mrf.mxu0
  %212 = vdwg.mxu0
  %v213 = vadd.f32 %v207, %v27
  %v214 = vadd.f32 %v210, %v28
  %v215 = vsel %vm53, %v213, 0.0
  %216 = vadd.xlane.f32.xlu0 %v215
  %v217 = vpop.xlane.xlu0 %216
  %v218 = vsel %vm53, %v214, 0.0
  %219 = vadd.xlane.f32.xlu0 %v218
  %v220 = vpop.xlane.xlu0 %219
  %v221 = vrcp.pop 32.0
  %v222 = vmul.f32 %v217, %v221
  %v223 = vmul.f32 %v220, %v221
  %v224 = vsub.f32 %v213, %v222
  %v225 = vsub.f32 %v214, %v223
  %v226 = vmul.f32 %v224, %v224
  %v227 = vmul.f32 %v225, %v225
  %v228 = vsel %vm53, %v226, 0.0
  %229 = vadd.xlane.f32.xlu0 %v228
  %v230 = vpop.xlane.xlu0 %229
  %v231 = vsel %vm53, %v227, 0.0
  %232 = vadd.xlane.f32.xlu0 %v231
  %v233 = vpop.xlane.xlu0 %232
  %v234 = vmul.f32 %v230, %v221
  %v235 = vmul.f32 %v233, %v221
  %v236 = vadd.f32 %v234, 1e-05
  %v237 = vadd.f32 %v235, 1e-05
  %v238 = vrsqrt.pop %v236
  %v239 = vrsqrt.pop %v237
  %v240 = vmul.f32 %v224, %v238
  %v241 = vmul.f32 %v225, %v239
  %v242 = vld [vmem:[%s5] sm:$0x1]
  %v244 = vlaneseq
  %v245 = vshrl.u32 %v244, 7
  %v246 = vsub.s32 0, %v245
  %v247 = vrot.slane %v242, %v246
  %v249 = vmul.f32 %v240, %v247
  %v250 = vmul.f32 %v241, %v247
  %v251 = vld [vmem:[%s6] sm:$0x1]
  %v253 = vlaneseq
  %v254 = vshrl.u32 %v253, 7
  %v255 = vsub.s32 0, %v254
  %v256 = vrot.slane %v251, %v255
  %v258 = vadd.f32 %v249, %v256
  %v259 = vadd.f32 %v250, %v256
  %260 = vst.msk [vmem:[%s7] sm:$0xff] %vm53, %v258
  %261 = vst.msk [vmem:[%s7 + $0x8] sm:$0xff] %vm53, %v259
  // Predicated region
  $region30: #{wavelet_transformer_forward.15} parent=0 // pred_check
    _
  $region31: #{wavelet_transformer_forward.15} parent=0 // pred_check_branch
    %263 = sbr.rel (0) target = $region33
  $region32: #{wavelet_transformer_forward.15} parent=0 // pred_region
    _
  $region33: #{wavelet_transformer_forward.15} parent=0 // pred_fallthru
    _
  // Predicated region
  $region34: #{wavelet_transformer_forward.15} parent=0 // pred_check
    _
  $region35: #{wavelet_transformer_forward.15} parent=0 // pred_check_branch
    %265 = sbr.rel (0) target = $region37
  $region36: #{wavelet_transformer_forward.15} parent=0 // pred_region
    _
  $region37: #{wavelet_transformer_forward.15} parent=0 // pred_fallthru
    _

// kernel: wavelet_transformer_forward.21
$region0: #{wavelet_transformer_forward.21}
  #allocation0 [shape = 'u32[]', space=smem, size = 0x4, offset = 0x4, fixed_abs, tag = 'smem constant byte address 0x4 - core index']
  #allocation1 [shape = 'u32[144,128]{1,0:T(1,128)}', space=vmem, size = 0x12000, scoped, tag = 'internal scratch']
  %s0 = inlined_call_operand.vmem [shape: f32[2,32], index: 0, kind: input, shape index: {}]
  %s1 = inlined_call_operand.vmem [shape: bf16[32,16], index: 1, kind: input, shape index: {}]
  %s2 = inlined_call_operand.vmem [shape: f32[1,16], index: 2, kind: input, shape index: {}]
  %s3 = inlined_call_operand.vmem [shape: bf16[16,8], index: 3, kind: input, shape index: {}]
  %s4 = inlined_call_operand.vmem [shape: f32[1,8], index: 4, kind: input, shape index: {}]
  %s5 = inlined_call_operand.hbm [shape: f32[2,8], index: 5, kind: output, shape index: {}]
  %s6 = sld [smem:[#allocation0]]
  $region30: #{wavelet_transformer_forward.21} parent=0
    _
  %s8 = ssub.s32 1, %s6
  %s9 = scalar_select 0, %s8, %s6
  $region1: #{wavelet_transformer_forward.21} parent=0
    #allocation2 [shape = 'u8[1024]{0}', space=vmem, size = 0x400, scoped, tag = 'output window, operand 0, single buffered']
    #allocation3 [shape = 's32[1]{0}', space=sflag, size = 0x4, scoped, tag = 'scoped memory for wavelet_transformer_forward.21']
    %10 = vsyncpa [#allocation3], 0
    // Predicated region
    $region2: #{wavelet_transformer_forward.21} parent=1 // pred_check
      _
    $region3: #{wavelet_transformer_forward.21} parent=1 // pred_check_branch
      %12 = sbr.rel (0) target = $region5
    $region4: #{wavelet_transformer_forward.21} parent=1 // pred_region
      _
    $region5: #{wavelet_transformer_forward.21} parent=1 // pred_fallthru
      _
    // Predicated region
    $region6: #{wavelet_transformer_forward.21} parent=1 // pred_check
      _
    $region7: #{wavelet_transformer_forward.21} parent=1 // pred_check_branch
      %14 = sbr.rel (0) target = $region9
    $region8: #{wavelet_transformer_forward.21} parent=1 // pred_region
      _
    $region9: #{wavelet_transformer_forward.21} parent=1 // pred_fallthru
      _
    // Predicated region
    $region10: #{wavelet_transformer_forward.21} parent=1 // pred_check
      _
    $region11: #{wavelet_transformer_forward.21} parent=1 // pred_check_branch
      %16 = sbr.rel (0) target = $region13
    $region12: #{wavelet_transformer_forward.21} parent=1 // pred_region
      _
    $region13: #{wavelet_transformer_forward.21} parent=1 // pred_fallthru
      _
    // Predicated region
    $region14: #{wavelet_transformer_forward.21} parent=1 // pred_check
      _
    $region15: #{wavelet_transformer_forward.21} parent=1 // pred_check_branch
      %18 = sbr.rel (0) target = $region17
    $region16: #{wavelet_transformer_forward.21} parent=1 // pred_region
      _
    $region17: #{wavelet_transformer_forward.21} parent=1 // pred_fallthru
      _
    // Predicated region
    $region18: #{wavelet_transformer_forward.21} parent=1 // pred_check
      _
    $region19: #{wavelet_transformer_forward.21} parent=1 // pred_check_branch
      %20 = sbr.rel (0) target = $region21
    $region20: #{wavelet_transformer_forward.21} parent=1 // pred_region
      _
    $region21: #{wavelet_transformer_forward.21} parent=1 // pred_fallthru
      _
    %v22 = vld [vmem:[%s0] sm:$0x3]
    %v23 = vpack.c.bf16 %v22, %v22
    %v24 = vld [vmem:[%s1] sm:$0xf]
    %v25 = vld [vmem:[%s1 + $0x4] sm:$0xf]
    %v26 = vld [vmem:[%s1 + $0x8] sm:$0xf]
    %v27 = vld [vmem:[%s1 + $0xc] sm:$0xf]
    %v28 = vld [vmem:[%s2] sm:$0x1]
    %v30 = vlaneseq
    %v31 = vshrl.u32 %v30, 7
    %v32 = vsub.s32 0, %v31
    %v33 = vrot.slane %v28, %v32
    %v39 = vunpack.c.l.b16 %v24
    %v40 = vunpack.c.l.b16 %v25
    %v41 = vunpack.c.l.b16 %v26
    %v42 = vunpack.c.l.b16 %v27
    %v43 = vpack.c.b16 %v40, %v39
    %v44 = vpack.c.b16 %v42, %v41
    %vm47 = vcmask 261120
    %v49 = vsel %vm47, %v23, 0
    %51 = vmatprep.subr.bf16.mxu0 0
    %52 = vmatpush1.bf16.msra.mxu0 0
    %53 = vmatprep.subr.bf16.mxu0 0
    %54 = vmatpush1.bf16.msra.mxu0 0
    %55 = vmatprep.subr.bf16.mxu0 0
    %56 = vmatpush1.bf16.msra.mxu0 0
    %57 = vmatprep.subr.bf16.mxu0 0
    %58 = vmatpush1.bf16.msra.mxu0 0
    %59 = vmatprep.subr.bf16.mxu0 0
    %60 = vmatpush1.bf16.msra.mxu0 0
    %61 = vmatprep.subr.bf16.mxu0 0
    %62 = vmatpush1.bf16.msra.mxu0 0
    %63 = vmatprep.subr.bf16.mxu0 0
    %64 = vmatpush1.bf16.msra.mxu0 %v44
    %65 = vmatprep.subr.bf16.mxu0 0
    %66 = vmatpush1.bf16.msra.mxu0 %v43
    %67 = vmatprep.subr.bf16.mxu0 0
    %68 = vmatpush2.bf16.msra.mxu0 0
    %69 = vmatprep.subr.bf16.mxu0 0
    %70 = vmatpush2.bf16.msra.mxu0 0
    %71 = vmatprep.subr.bf16.mxu0 0
    %72 = vmatpush2.bf16.msra.mxu0 0
    %73 = vmatprep.subr.bf16.mxu0 0
    %74 = vmatpush2.bf16.msra.mxu0 0
    %75 = vmatprep.subr.bf16.mxu0 0
    %76 = vmatpush2.bf16.msra.mxu0 0
    %77 = vmatprep.subr.bf16.mxu0 0
    %78 = vmatpush2.bf16.msra.mxu0 0
    %79 = vmatprep.subr.bf16.mxu0 0
    %80 = vmatpush2.bf16.msra.mxu0 0
    %81 = vmatprep.subr.bf16.mxu0 0
    %82 = vmatpush2.bf16.msra.mxu0 0
    %83 = vmatprep.mubr.bf16.mxu0 0
    %84 = vmatmul.mubr.bf16.gmra.mxu0 %v49
    %v85 = vpop.f32.mrf.mxu0
    %v86 = vadd.f32 %v33, %v85
    %v87 = vpop.f32.mrf.mxu0
    %v88 = vpop.f32.mrf.mxu0
    %v89 = vpop.f32.mrf.mxu0
    %90 = vdwg.mxu0
    %v91 = vmax.f32 %v86, 0.0
    %v92 = vpack.c.bf16 %v91, %v91
    %v93 = vld [vmem:[%s3] sm:$0xf]
    %v94 = vld [vmem:[%s3 + $0x4] sm:$0xf]
    %v95 = vld [vmem:[%s4] sm:$0x1]
    %v97 = vlaneseq
    %v98 = vshrl.u32 %v97, 7
    %v99 = vsub.s32 0, %v98
    %v100 = vrot.slane %v95, %v99
    %v104 = vunpack.c.l.b16 %v93
    %v105 = vunpack.c.l.b16 %v94
    %v106 = vpack.c.b16 %v105, %v104
    %vm108 = vcmask 130048
    %v110 = vsel %vm108, %v92, 0
    %112 = vmatprep.subr.bf16.mxu0 0
    %113 = vmatpush1.bf16.msra.mxu0 0
    %114 = vmatprep.subr.bf16.mxu0 0
    %115 = vmatpush1.bf16.msra.mxu0 0
    %116 = vmatprep.subr.bf16.mxu0 0
    %117 = vmatpush1.bf16.msra.mxu0 0
    %118 = vmatprep.subr.bf16.mxu0 0
    %119 = vmatpush1.bf16.msra.mxu0 0
    %120 = vmatprep.subr.bf16.mxu0 0
    %121 = vmatpush1.bf16.msra.mxu0 0
    %122 = vmatprep.subr.bf16.mxu0 0
    %123 = vmatpush1.bf16.msra.mxu0 0
    %124 = vmatprep.subr.bf16.mxu0 0
    %125 = vmatpush1.bf16.msra.mxu0 0
    %126 = vmatprep.subr.bf16.mxu0 0
    %127 = vmatpush1.bf16.msra.mxu0 %v106
    %128 = vmatprep.subr.bf16.mxu0 0
    %129 = vmatpush2.bf16.msra.mxu0 0
    %130 = vmatprep.subr.bf16.mxu0 0
    %131 = vmatpush2.bf16.msra.mxu0 0
    %132 = vmatprep.subr.bf16.mxu0 0
    %133 = vmatpush2.bf16.msra.mxu0 0
    %134 = vmatprep.subr.bf16.mxu0 0
    %135 = vmatpush2.bf16.msra.mxu0 0
    %136 = vmatprep.subr.bf16.mxu0 0
    %137 = vmatpush2.bf16.msra.mxu0 0
    %138 = vmatprep.subr.bf16.mxu0 0
    %139 = vmatpush2.bf16.msra.mxu0 0
    %140 = vmatprep.subr.bf16.mxu0 0
    %141 = vmatpush2.bf16.msra.mxu0 0
    %142 = vmatprep.subr.bf16.mxu0 0
    %143 = vmatpush2.bf16.msra.mxu0 0
    %144 = vmatprep.mubr.bf16.mxu0 0
    %145 = vmatmul.mubr.bf16.gmra.mxu0 %v110
    %v146 = vpop.f32.mrf.mxu0
    %v147 = vadd.f32 %v100, %v146
    %v148 = vpop.f32.mrf.mxu0
    %v149 = vpop.f32.mrf.mxu0
    %v150 = vpop.f32.mrf.mxu0
    %151 = vdwg.mxu0
    %vm152 = vcmask 58368
    %153 = vst.msk [vmem:[#allocation2] sm:$0x3] %vm152, %v147
    // Predicated region
    $region22: #{wavelet_transformer_forward.21} parent=1 // pred_check
      _
    $region23: #{wavelet_transformer_forward.21} parent=1 // pred_check_branch
      %155 = sbr.rel (0) target = $region25
    $region24: #{wavelet_transformer_forward.21} parent=1 // pred_region
      %s157 = ssub.s32 32, 32
      %158 = vsyncadd [#allocation3], %s157
      %s160 = sshll.u32 [#allocation2], 4
      %s161 = int_to_ptr.vmem [resolvable:$true] %s160
      %163 = dma.vmem_to_hbm [thread:$0]  %s161, 32, %s5, [#allocation3]
    $region25: #{wavelet_transformer_forward.21} parent=1 // pred_fallthru
      _
    // Predicated region
    $region26: #{wavelet_transformer_forward.21} parent=1 // pred_check
      _
    $region27: #{wavelet_transformer_forward.21} parent=1 // pred_check_branch
      %165 = sbr.rel (0) target = $region29
    $region28: #{wavelet_transformer_forward.21} parent=1 // pred_region
      %166 = dma.done [#allocation3], 32
    $region29: #{wavelet_transformer_forward.21} parent=1 // pred_fallthru
      _
    %167 = vsyncpa [#allocation3], 1

</llo_original>
